<compile_context>
chip_gen: v7x
topology: tpu7x:2x2x1
jax: 0.10.0
libtpu: 0.0.40
codegen_flags: <defaults>
</compile_context>

<pallas_src>
import math
import numpy as np
import jax
import jax.numpy as jnp
from jax.experimental import pallas as pl
from jax.experimental.pallas import tpu as pltpu

D_MODEL = 64
NUM_HEADS = 8
HEAD_DIM = D_MODEL // NUM_HEADS
LN_EPS = 1e-5
NEG_INF = -1e9


def _round_up(x, m):
    return ((x + m - 1) // m) * m


# ---------------------------------------------------------------------------
# Kernel 1: batched MHA over GB padded segments per grid step, with the
# residual + LayerNorm for those rows fused into the epilogue.
#   - fused, scale-folded QKV projection on the flattened (GB*L, D) slab
#   - block-diagonal (per-segment) + key-padding mask from in-kernel iota
#   - per-head scores via transpose-free dot_general + stable exact softmax
#   - per-head Wo accumulation (no head concat), single contiguous slab store
# ---------------------------------------------------------------------------
def _attention_ln_kernel(x_ref, ktag_ref, wqkv_ref, bqkv_ref, wo_ref, bo_ref,
                         g_ref, b_ref, o_ref):
    gb, l, d = x_ref.shape
    n = gb * l
    x = x_ref[...].reshape(n, d)                        # merge leading dims only

    # fused QKV projection; 1/sqrt(head_dim) already folded into the Q columns
    qkv = jnp.dot(x, wqkv_ref[...],
                  preferred_element_type=jnp.float32) + bqkv_ref[...]
    q = qkv[:, 0:d]
    k = qkv[:, d:2 * d]
    v = qkv[:, 2 * d:3 * d]

    # block-diagonal segment mask, built once per block (no qtag input / DMA):
    # ktag[j] = local segment id of key column j (-1 = padding); query row i
    # belongs to segment i // l, i.e. rows [tag*l, tag*l + l) may see column j.
    row = jax.lax.broadcasted_iota(jnp.int32, (n, n), 0)
    seg_lo = ktag_ref[0] * l                            # (1, n), broadcasts over rows
    allowed = (row >= seg_lo) & (row < seg_lo + l)

    wo = wo_ref[...]
    out = jnp.zeros((n, d), jnp.float32)
    for h in range(NUM_HEADS):                          # static unroll (see notes)
        c0 = h * HEAD_DIM
        qh = q[:, c0:c0 + HEAD_DIM]
        kh = k[:, c0:c0 + HEAD_DIM]
        vh = v[:, c0:c0 + HEAD_DIM]
        # q @ k^T without materializing a transpose
        s = jax.lax.dot_general(qh, kh, (((1,), (1,)), ((), ())),
                                preferred_element_type=jnp.float32)
        s = jnp.where(allowed, s, NEG_INF)              # one select per score vreg
        m = jnp.max(s, axis=-1, keepdims=True)
        p = jnp.exp(s - m)
        denom = jnp.sum(p, axis=-1, keepdims=True)
        # normalize the narrow (n, head_dim) context, exact division (parity)
        ctx = jnp.dot(p, vh, preferred_element_type=jnp.float32) / denom
        # fold head-concat + out_proj into a per-head accumulation
        out = out + jnp.dot(ctx, wo[c0:c0 + HEAD_DIM, :],
                            preferred_element_type=jnp.float32)
    out = out + bo_ref[...]

    # fused residual + LayerNorm for the segment rows; the output-token rows of
    # this slab are scattered straight into the final result (no extra HBM pass).
    xr = x + out
    mu = jnp.mean(xr, axis=-1, keepdims=True)
    xc = xr - mu
    var = jnp.mean(xc * xc, axis=-1, keepdims=True)
    y = xc * jax.lax.rsqrt(var + LN_EPS) * g_ref[...] + b_ref[...]
    o_ref[...] = y.reshape(gb, l, d)                    # one contiguous slab store


def segment_attention_ln(x_g, ktag, wqkv, bqkv, wo, bo, gamma, beta, gb):
    g_pad, l, d = x_g.shape
    num_blocks = g_pad // gb
    n = gb * l
    return pl.pallas_call(
        _attention_ln_kernel,
        out_shape=jax.ShapeDtypeStruct((g_pad, l, d), jnp.float32),
        grid=(num_blocks,),
        in_specs=[
            pl.BlockSpec((gb, l, d), lambda g: (g, 0, 0)),      # GB segments of tokens
            pl.BlockSpec((1, 1, n), lambda g: (g, 0, 0)),       # per-key segment tag (-1 = pad)
            pl.BlockSpec((d, 3 * d), lambda g: (0, 0)),         # fused, scale-folded Wqkv
            pl.BlockSpec((1, 3 * d), lambda g: (0, 0)),         # fused bqkv
            pl.BlockSpec((d, d), lambda g: (0, 0)),             # Wo
            pl.BlockSpec((1, d), lambda g: (0, 0)),             # bo
            pl.BlockSpec((1, d), lambda g: (0, 0)),             # LN gamma
            pl.BlockSpec((1, d), lambda g: (0, 0)),             # LN beta
        ],
        out_specs=pl.BlockSpec((gb, l, d), lambda g: (g, 0, 0)),
        compiler_params=pltpu.CompilerParams(
            dimension_semantics=("parallel",)),                 # independent blocks (2 TCs on v7x)
    )(x_g, ktag, wqkv, bqkv, wo, bo, gamma, beta)


# ---------------------------------------------------------------------------
# Kernel 2: LayerNorm(hidden + hidden) for every row (the "not updated by any
# segment" path of the reference).  Single input read, single output write,
# large row tiles (memory-bound).
# ---------------------------------------------------------------------------
def _ln2x_kernel(h_ref, g_ref, b_ref, o_ref):
    x = h_ref[...] * 2.0                                # residual with itself
    mu = jnp.mean(x, axis=-1, keepdims=True)
    xc = x - mu
    var = jnp.mean(xc * xc, axis=-1, keepdims=True)
    o_ref[...] = xc * jax.lax.rsqrt(var + LN_EPS) * g_ref[...] + b_ref[...]


def layernorm_2x(hidden_flat, gamma, beta):
    n, d = hidden_flat.shape
    n8 = _round_up(n, 8)
    tm = min(4096, n8)                                  # <=1 MiB tiles at d=64
    n_pad = _round_up(n8, tm)
    if n_pad != n:
        hidden_flat = jnp.pad(hidden_flat, ((0, n_pad - n), (0, 0)))
    out = pl.pallas_call(
        _ln2x_kernel,
        out_shape=jax.ShapeDtypeStruct((n_pad, d), jnp.float32),
        grid=(n_pad // tm,),
        in_specs=[
            pl.BlockSpec((tm, d), lambda i: (i, 0)),
            pl.BlockSpec((1, d), lambda i: (0, 0)),
            pl.BlockSpec((1, d), lambda i: (0, 0)),
        ],
        out_specs=pl.BlockSpec((tm, d), lambda i: (i, 0)),
        compiler_params=pltpu.CompilerParams(
            dimension_semantics=("parallel",)),
    )(hidden_flat, gamma, beta)
    return out[:n]


# ---------------------------------------------------------------------------
# Host-side glue: data-dependent segmentation (torch.unique / boolean masks in
# the reference is host control flow), then ONE batched gather, the two kernels
# and ONE in-place row scatter, all under a single jit.
# ---------------------------------------------------------------------------
def cross_grid_attention(hidden_states, grid_types, grid_ids, params,
                         relative_position=None):
    # TODO(synk): `relative_position` must broadcast against variable-length
    # per-segment scores, so it can only be a per-head trailing-singleton
    # constant; such a constant cancels exactly under softmax and is therefore
    # not fed to the kernel (dead work in the reference).
    del relative_position
    B, S, D = hidden_states.shape
    grid_types = np.asarray(grid_types)
    grid_ids = np.asarray(grid_ids)

    segments = []
    for b in range(B):
        for gid in np.unique(grid_ids[b]):
            if gid == 0:
                continue
            out_idx = np.where((grid_ids[b] == gid) & (grid_types[b] == 1))[0]
            in_idx = np.where((grid_ids[b] == gid) & (grid_types[b] == 0))[0]
            if out_idx.size == 0 or in_idx.size == 0:
                continue
            segments.append((b, out_idx, in_idx))

    hidden_flat = hidden_states.reshape(B * S, D).astype(jnp.float32)
    gamma, beta = params["ln_gamma"], params["ln_beta"]

    if not segments:
        return layernorm_2x(hidden_flat, gamma, beta).reshape(B, S, D)

    lens = [len(o) + len(i) for (_, o, i) in segments]
    G = len(segments)
    L = _round_up(max(lens), 8)                         # sublane-friendly segment length
    # cap GB*L at ~128 (block-diag score/exp work grows as n^2) and guarantee
    # >= 2 grid blocks whenever there are >= 2 segments (2 TCs on v7x, pipelining)
    GB = max(1, min(max(1, 128 // L), -(-G // 2)))
    G_pad = _round_up(G, GB)
    num_blocks = G_pad // GB
    N = GB * L

    gather_idx = np.zeros((G_pad, L), np.int32)
    valid = np.zeros((G_pad, L), bool)
    src_list, dst_list = [], []
    for g, ((b, out_idx, in_idx), ln) in enumerate(zip(segments, lens)):
        idx = np.concatenate([out_idx, in_idx]).astype(np.int32)
        gather_idx[g, :ln] = b * S + idx
        valid[g, :ln] = True
        src_list.append(g * L + np.arange(len(out_idx), dtype=np.int32))
        dst_list.append((b * S + out_idx).astype(np.int32))

    local = np.arange(G_pad, dtype=np.int32) % GB       # local segment id in its block
    ktag = np.where(valid, local[:, None], -1).astype(np.int32)
    ktag = ktag.reshape(num_blocks, 1, N)

    gather_jnp = jnp.asarray(gather_idx.reshape(-1))
    ktag_jnp = jnp.asarray(ktag)
    src = jnp.asarray(np.concatenate(src_list))
    dst = jnp.asarray(np.concatenate(dst_list))

    # host-side one-time weight folds: fused QKV with the 1/sqrt(head_dim)
    # softmax scale folded into the Q columns (weight-constant fold, not an
    # activation pre-scale).
    scale = 1.0 / math.sqrt(HEAD_DIM)
    wqkv = jnp.concatenate([params["wq"] * scale, params["wk"], params["wv"]], axis=1)
    bqkv = jnp.concatenate([params["bq"] * scale, params["bk"], params["bv"]], axis=1)
    wo, bo = params["wo"], params["bo"]

    def device_fn(hflat):
        # one batched gather of all segment rows
        x_g = jnp.take(hflat, gather_jnp, axis=0).reshape(G_pad, L, D)
        # attention + fused residual/LayerNorm for the segment rows
        y = segment_attention_ln(x_g, ktag_jnp, wqkv, bqkv, wo, bo,
                                 gamma, beta, GB)
        # LayerNorm(2*h) for every row (kept wherever no segment updates it)
        base = layernorm_2x(hflat, gamma, beta)
        # one scatter of already-normalized output-token rows; `base` is dead
        # here so XLA performs the update in place (no extra full-buffer pass).
        return base.at[dst].set(y.reshape(G_pad * L, D)[src])

    out_flat = jax.jit(device_fn)(hidden_flat)
    return out_flat.reshape(B, S, D)


def init_params(key):
    keys = jax.random.split(key, 8)

    def lin_w(k):
        return (0.02 * jax.random.normal(k, (D_MODEL, D_MODEL))).astype(jnp.float32)

    def lin_b(k):
        return (0.01 * jax.random.normal(k, (1, D_MODEL))).astype(jnp.float32)

    return dict(
        wq=lin_w(keys[0]), bq=lin_b(keys[1]),
        wk=lin_w(keys[2]), bk=lin_b(keys[3]),
        wv=lin_w(keys[4]), bv=lin_b(keys[5]),
        wo=lin_w(keys[6]), bo=lin_b(keys[7]),
        ln_gamma=jnp.ones((1, D_MODEL), jnp.float32),
        ln_beta=jnp.zeros((1, D_MODEL), jnp.float32),
    )


if __name__ == "__main__":
    key = jax.random.PRNGKey(0)
    kp, kh = jax.random.split(key)
    params = init_params(kp)

    B, S = 2, 16
    hidden = jax.random.normal(kh, (B, S, D_MODEL), dtype=jnp.float32)

    # grid metadata: grid_id 0 = padding/no grid; type 0 = input, 1 = output
    grid_ids = np.array([
        [1, 1, 1, 1, 1, 1, 1, 1, 2, 2, 2, 2, 2, 2, 2, 2],
        [0, 0, 1, 1, 1, 1, 1, 1, 1, 1, 2, 2, 2, 2, 2, 2],
    ], dtype=np.int32)
    grid_types = np.array([
        [0, 0, 0, 0, 1, 1, 1, 1, 0, 0, 0, 0, 1, 1, 1, 1],
        [0, 0, 0, 0, 0, 1, 1, 1, 1, 1, 0, 0, 0, 1, 1, 1],
    ], dtype=np.int32)

    # per-head bias playing the role of the reference's explicit
    # `relative_position` argument (cancels under softmax — see TODO above)
    rel = (0.05 * jnp.arange(NUM_HEADS, dtype=jnp.float32)).reshape(1, NUM_HEADS)

    out = cross_grid_attention(hidden, grid_types, grid_ids, params, rel)
    out = jax.block_until_ready(out)

    assert out.shape == (B, S, D_MODEL)
    assert bool(jnp.isfinite(out).all())
    print("KERNEL_OK")
</pallas_src>

<mosaic_0001>
module attributes {stable_mosaic.version = 11 : i64} {
  func.func @_ln2x_kernel(%arg0: i32, %arg1: memref<32x64xf32, #tpu.memory_space<vmem>>, %arg2: memref<1x64xf32, #tpu.memory_space<vmem>>, %arg3: memref<1x64xf32, #tpu.memory_space<vmem>>, %arg4: memref<32x64xf32, #tpu.memory_space<vmem>>) attributes {dimension_semantics = [#tpu.dimension_semantics<parallel>], iteration_bounds = array<i64: 1>, scalar_prefetch = 0 : i64, scratch_operands = 0 : i64, tpu.core_type = #tpu.core_type<tc>, window_params = [{transform_indices = @transform_0, window_bounds = array<i64: 32, 64>}, {pipeline_mode = #tpu.pipeline_mode<synchronous>, transform_indices = @transform_1, window_bounds = array<i64: 1, 64>}, {pipeline_mode = #tpu.pipeline_mode<synchronous>, transform_indices = @transform_2, window_bounds = array<i64: 1, 64>}, {transform_indices = @transform_3, window_bounds = array<i64: 32, 64>}]} {
    %c0 = arith.constant 0 : index
    %c0_0 = arith.constant 0 : index
    %0 = vector.load %arg1[%c0, %c0_0] : memref<32x64xf32, #tpu.memory_space<vmem>>, vector<32x64xf32>
    %cst = arith.constant 2.000000e+00 : f32
    %1 = vector.broadcast %cst : f32 to vector<32x64xf32>
    %2 = arith.mulf %0, %1 : vector<32x64xf32>
    %cst_1 = arith.constant dense<0.000000e+00> : vector<32xf32>
    %3 = vector.multi_reduction <add>, %2, %cst_1 [1] : vector<32x64xf32> to vector<32xf32>
    %4 = vector.shape_cast %3 : vector<32xf32> to vector<32x1xf32>
    %cst_2 = arith.constant 6.400000e+01 : f32
    %5 = vector.broadcast %cst_2 : f32 to vector<32x1xf32>
    %6 = arith.divf %4, %5 : vector<32x1xf32>
    %7 = vector.broadcast %6 : vector<32x1xf32> to vector<32x64xf32>
    %8 = arith.subf %2, %7 : vector<32x64xf32>
    %9 = arith.mulf %8, %8 : vector<32x64xf32>
    %cst_3 = arith.constant dense<0.000000e+00> : vector<32xf32>
    %10 = vector.multi_reduction <add>, %9, %cst_3 [1] : vector<32x64xf32> to vector<32xf32>
    %11 = vector.shape_cast %10 : vector<32xf32> to vector<32x1xf32>
    %cst_4 = arith.constant 6.400000e+01 : f32
    %12 = vector.broadcast %cst_4 : f32 to vector<32x1xf32>
    %13 = arith.divf %11, %12 : vector<32x1xf32>
    %cst_5 = arith.constant 9.99999974E-6 : f32
    %14 = vector.broadcast %cst_5 : f32 to vector<32x1xf32>
    %15 = arith.addf %13, %14 : vector<32x1xf32>
    %16 = math.rsqrt %15 : vector<32x1xf32>
    %17 = vector.broadcast %16 : vector<32x1xf32> to vector<32x64xf32>
    %18 = arith.mulf %8, %17 : vector<32x64xf32>
    %c0_6 = arith.constant 0 : index
    %c0_7 = arith.constant 0 : index
    %19 = vector.load %arg2[%c0_6, %c0_7] : memref<1x64xf32, #tpu.memory_space<vmem>>, vector<1x64xf32>
    %20 = vector.broadcast %19 : vector<1x64xf32> to vector<32x64xf32>
    %21 = arith.mulf %18, %20 : vector<32x64xf32>
    %c0_8 = arith.constant 0 : index
    %c0_9 = arith.constant 0 : index
    %22 = vector.load %arg3[%c0_8, %c0_9] : memref<1x64xf32, #tpu.memory_space<vmem>>, vector<1x64xf32>
    %23 = vector.broadcast %22 : vector<1x64xf32> to vector<32x64xf32>
    %24 = arith.addf %21, %23 : vector<32x64xf32>
    %c0_10 = arith.constant 0 : index
    %c0_11 = arith.constant 0 : index
    %25 = vector.load %arg4[%c0_10, %c0_11] : memref<32x64xf32, #tpu.memory_space<vmem>>, vector<32x64xf32>
    tpu.vector_store %arg4[%c0_10, %c0_11], %24 {strides = array<i32>} : memref<32x64xf32, #tpu.memory_space<vmem>>, vector<32x64xf32>,
    return
  }
  func.func @transform_0(%arg0: i32) -> (i32, i32) {
    %c0_i32 = arith.constant 0 : i32
    %c0_i32_0 = arith.constant 0 : i32
    return %arg0, %c0_i32 : i32, i32
  }
  func.func @transform_1(%arg0: i32) -> (i32, i32) {
    %c0_i32 = arith.constant 0 : i32
    %c0_i32_0 = arith.constant 0 : i32
    %c0_i32_1 = arith.constant 0 : i32
    return %c0_i32, %c0_i32_0 : i32, i32
  }
  func.func @transform_2(%arg0: i32) -> (i32, i32) {
    %c0_i32 = arith.constant 0 : i32
    %c0_i32_0 = arith.constant 0 : i32
    %c0_i32_1 = arith.constant 0 : i32
    return %c0_i32, %c0_i32_0 : i32, i32
  }
  func.func @transform_3(%arg0: i32) -> (i32, i32) {
    %c0_i32 = arith.constant 0 : i32
    %c0_i32_0 = arith.constant 0 : i32
    return %arg0, %c0_i32 : i32, i32
  }
}

module attributes {stable_mosaic.version = 11 : i64} {
  func.func @_attention_ln_kernel(%arg0: i32, %arg1: memref<2x8x64xf32, #tpu.memory_space<vmem>>, %arg2: memref<1x1x16xi32, #tpu.memory_space<vmem>>, %arg3: memref<64x192xf32, #tpu.memory_space<vmem>>, %arg4: memref<1x192xf32, #tpu.memory_space<vmem>>, %arg5: memref<64x64xf32, #tpu.memory_space<vmem>>, %arg6: memref<1x64xf32, #tpu.memory_space<vmem>>, %arg7: memref<1x64xf32, #tpu.memory_space<vmem>>, %arg8: memref<1x64xf32, #tpu.memory_space<vmem>>, %arg9: memref<2x8x64xf32, #tpu.memory_space<vmem>>) attributes {dimension_semantics = [#tpu.dimension_semantics<parallel>], iteration_bounds = array<i64: 2>, scalar_prefetch = 0 : i64, scratch_operands = 0 : i64, tpu.core_type = #tpu.core_type<tc>, window_params = [{transform_indices = @transform_0, window_bounds = array<i64: 2, 8, 64>}, {transform_indices = @transform_1, window_bounds = array<i64: 1, 1, 16>}, {pipeline_mode = #tpu.pipeline_mode<synchronous>, transform_indices = @transform_2, window_bounds = array<i64: 64, 192>}, {pipeline_mode = #tpu.pipeline_mode<synchronous>, transform_indices = @transform_3, window_bounds = array<i64: 1, 192>}, {pipeline_mode = #tpu.pipeline_mode<synchronous>, transform_indices = @transform_4, window_bounds = array<i64: 64, 64>}, {pipeline_mode = #tpu.pipeline_mode<synchronous>, transform_indices = @transform_5, window_bounds = array<i64: 1, 64>}, {pipeline_mode = #tpu.pipeline_mode<synchronous>, transform_indices = @transform_6, window_bounds = array<i64: 1, 64>}, {pipeline_mode = #tpu.pipeline_mode<synchronous>, transform_indices = @transform_7, window_bounds = array<i64: 1, 64>}, {transform_indices = @transform_8, window_bounds = array<i64: 2, 8, 64>}]} {
    %c0 = arith.constant 0 : index
    %c0_0 = arith.constant 0 : index
    %c0_1 = arith.constant 0 : index
    %0 = vector.load %arg1[%c0, %c0_0, %c0_1] : memref<2x8x64xf32, #tpu.memory_space<vmem>>, vector<2x8x64xf32>
    %1 = vector.shape_cast %0 : vector<2x8x64xf32> to vector<16x64xf32>
    %c0_2 = arith.constant 0 : index
    %c0_3 = arith.constant 0 : index
    %2 = vector.load %arg3[%c0_2, %c0_3] : memref<64x192xf32, #tpu.memory_space<vmem>>, vector<64x192xf32>
    %cst = arith.constant dense<0.000000e+00> : vector<16x192xf32>
    %3 = tpu.matmul %1, %2, %cst {dimension_numbers = #tpu.dot_dimension_numbers<[1], [0], [0], [1], [0, 0, 1, 1], [], []>} : vector<16x64xf32>, vector<64x192xf32>, vector<16x192xf32> -> vector<16x192xf32>
    %c0_4 = arith.constant 0 : index
    %c0_5 = arith.constant 0 : index
    %4 = vector.load %arg4[%c0_4, %c0_5] : memref<1x192xf32, #tpu.memory_space<vmem>>, vector<1x192xf32>
    %5 = vector.broadcast %4 : vector<1x192xf32> to vector<16x192xf32>
    %6 = arith.addf %3, %5 : vector<16x192xf32>
    %7 = vector.extract_strided_slice %6 {offsets = [0, 0], sizes = [16, 64], strides = [1, 1]} : vector<16x192xf32> to vector<16x64xf32>
    %8 = vector.extract_strided_slice %6 {offsets = [0, 64], sizes = [16, 64], strides = [1, 1]} : vector<16x192xf32> to vector<16x64xf32>
    %9 = vector.extract_strided_slice %6 {offsets = [0, 128], sizes = [16, 64], strides = [1, 1]} : vector<16x192xf32> to vector<16x64xf32>
    %10 = tpu.iota {dimensions = array<i32: 0>} : vector<16x16xi32>
    %c0_6 = arith.constant 0 : index
    %c0_7 = arith.constant 0 : index
    %c0_8 = arith.constant 0 : index
    %11 = vector.load %arg2[%c0_6, %c0_7, %c0_8] : memref<1x1x16xi32, #tpu.memory_space<vmem>>, vector<1x1x16xi32>
    %12 = vector.shape_cast %11 : vector<1x1x16xi32> to vector<1x16xi32>
    %c8_i32 = arith.constant 8 : i32
    %13 = vector.broadcast %c8_i32 : i32 to vector<1x16xi32>
    %14 = arith.muli %12, %13 : vector<1x16xi32>
    %15 = vector.broadcast %14 : vector<1x16xi32> to vector<16x16xi32>
    %16 = arith.cmpi sge, %10, %15 : vector<16x16xi32>
    %c8_i32_9 = arith.constant 8 : i32
    %17 = vector.broadcast %c8_i32_9 : i32 to vector<1x16xi32>
    %18 = arith.addi %14, %17 : vector<1x16xi32>
    %19 = vector.broadcast %18 : vector<1x16xi32> to vector<16x16xi32>
    %20 = arith.cmpi slt, %10, %19 : vector<16x16xi32>
    %21 = arith.andi %16, %20 : vector<16x16xi1>
    %c0_10 = arith.constant 0 : index
    %c0_11 = arith.constant 0 : index
    %22 = vector.load %arg5[%c0_10, %c0_11] : memref<64x64xf32, #tpu.memory_space<vmem>>, vector<64x64xf32>
    %cst_12 = arith.constant 0.000000e+00 : f32
    %23 = vector.broadcast %cst_12 : f32 to vector<16x64xf32>
    %24 = vector.extract_strided_slice %7 {offsets = [0, 0], sizes = [16, 8], strides = [1, 1]} : vector<16x64xf32> to vector<16x8xf32>
    %25 = vector.extract_strided_slice %8 {offsets = [0, 0], sizes = [16, 8], strides = [1, 1]} : vector<16x64xf32> to vector<16x8xf32>
    %26 = vector.extract_strided_slice %9 {offsets = [0, 0], sizes = [16, 8], strides = [1, 1]} : vector<16x64xf32> to vector<16x8xf32>
    %cst_13 = arith.constant dense<0.000000e+00> : vector<16x16xf32>
    %27 = tpu.matmul %24, %25, %cst_13 {dimension_numbers = #tpu.dot_dimension_numbers<[1], [1], [0], [0], [0, 0, 1, 0], [], []>} : vector<16x8xf32>, vector<16x8xf32>, vector<16x16xf32> -> vector<16x16xf32>
    %cst_14 = arith.constant -1.000000e+09 : f32
    %28 = vector.broadcast %cst_14 : f32 to vector<16x16xf32>
    %29 = arith.select %21, %27, %28 : vector<16x16xi1>, vector<16x16xf32>
    %cst_15 = arith.constant dense<0xFF800000> : vector<16xf32>
    %30 = vector.multi_reduction <maximumf>, %29, %cst_15 [1] : vector<16x16xf32> to vector<16xf32>
    %31 = vector.shape_cast %30 : vector<16xf32> to vector<16x1xf32>
    %32 = vector.broadcast %31 : vector<16x1xf32> to vector<16x16xf32>
    %33 = arith.subf %29, %32 : vector<16x16xf32>
    %34 = math.exp %33 : vector<16x16xf32>
    %cst_16 = arith.constant dense<0.000000e+00> : vector<16xf32>
    %35 = vector.multi_reduction <add>, %34, %cst_16 [1] : vector<16x16xf32> to vector<16xf32>
    %36 = vector.shape_cast %35 : vector<16xf32> to vector<16x1xf32>
    %cst_17 = arith.constant dense<0.000000e+00> : vector<16x8xf32>
    %37 = tpu.matmul %34, %26, %cst_17 {dimension_numbers = #tpu.dot_dimension_numbers<[1], [0], [0], [1], [0, 0, 1, 1], [], []>} : vector<16x16xf32>, vector<16x8xf32>, vector<16x8xf32> -> vector<16x8xf32>
    %38 = vector.broadcast %36 : vector<16x1xf32> to vector<16x8xf32>
    %39 = arith.divf %37, %38 : vector<16x8xf32>
    %40 = vector.extract_strided_slice %22 {offsets = [0, 0], sizes = [8, 64], strides = [1, 1]} : vector<64x64xf32> to vector<8x64xf32>
    %cst_18 = arith.constant dense<0.000000e+00> : vector<16x64xf32>
    %41 = tpu.matmul %39, %40, %cst_18 {dimension_numbers = #tpu.dot_dimension_numbers<[1], [0], [0], [1], [0, 0, 1, 1], [], []>} : vector<16x8xf32>, vector<8x64xf32>, vector<16x64xf32> -> vector<16x64xf32>
    %42 = arith.addf %23, %41 : vector<16x64xf32>
    %43 = vector.extract_strided_slice %7 {offsets = [0, 8], sizes = [16, 8], strides = [1, 1]} : vector<16x64xf32> to vector<16x8xf32>
    %44 = vector.extract_strided_slice %8 {offsets = [0, 8], sizes = [16, 8], strides = [1, 1]} : vector<16x64xf32> to vector<16x8xf32>
    %45 = vector.extract_strided_slice %9 {offsets = [0, 8], sizes = [16, 8], strides = [1, 1]} : vector<16x64xf32> to vector<16x8xf32>
    %cst_19 = arith.constant dense<0.000000e+00> : vector<16x16xf32>
    %46 = tpu.matmul %43, %44, %cst_19 {dimension_numbers = #tpu.dot_dimension_numbers<[1], [1], [0], [0], [0, 0, 1, 0], [], []>} : vector<16x8xf32>, vector<16x8xf32>, vector<16x16xf32> -> vector<16x16xf32>
    %cst_20 = arith.constant -1.000000e+09 : f32
    %47 = vector.broadcast %cst_20 : f32 to vector<16x16xf32>
    %48 = arith.select %21, %46, %47 : vector<16x16xi1>, vector<16x16xf32>
    %cst_21 = arith.constant dense<0xFF800000> : vector<16xf32>
    %49 = vector.multi_reduction <maximumf>, %48, %cst_21 [1] : vector<16x16xf32> to vector<16xf32>
    %50 = vector.shape_cast %49 : vector<16xf32> to vector<16x1xf32>
    %51 = vector.broadcast %50 : vector<16x1xf32> to vector<16x16xf32>
    %52 = arith.subf %48, %51 : vector<16x16xf32>
    %53 = math.exp %52 : vector<16x16xf32>
    %cst_22 = arith.constant dense<0.000000e+00> : vector<16xf32>
    %54 = vector.multi_reduction <add>, %53, %cst_22 [1] : vector<16x16xf32> to vector<16xf32>
    %55 = vector.shape_cast %54 : vector<16xf32> to vector<16x1xf32>
    %cst_23 = arith.constant dense<0.000000e+00> : vector<16x8xf32>
    %56 = tpu.matmul %53, %45, %cst_23 {dimension_numbers = #tpu.dot_dimension_numbers<[1], [0], [0], [1], [0, 0, 1, 1], [], []>} : vector<16x16xf32>, vector<16x8xf32>, vector<16x8xf32> -> vector<16x8xf32>
    %57 = vector.broadcast %55 : vector<16x1xf32> to vector<16x8xf32>
    %58 = arith.divf %56, %57 : vector<16x8xf32>
    %59 = vector.extract_strided_slice %22 {offsets = [8, 0], sizes = [8, 64], strides = [1, 1]} : vector<64x64xf32> to vector<8x64xf32>
    %cst_24 = arith.constant dense<0.000000e+00> : vector<16x64xf32>
    %60 = tpu.matmul %58, %59, %cst_24 {dimension_numbers = #tpu.dot_dimension_numbers<[1], [0], [0], [1], [0, 0, 1, 1], [], []>} : vector<16x8xf32>, vector<8x64xf32>, vector<16x64xf32> -> vector<16x64xf32>
    %61 = arith.addf %42, %60 : vector<16x64xf32>
    %62 = vector.extract_strided_slice %7 {offsets = [0, 16], sizes = [16, 8], strides = [1, 1]} : vector<16x64xf32> to vector<16x8xf32>
    %63 = vector.extract_strided_slice %8 {offsets = [0, 16], sizes = [16, 8], strides = [1, 1]} : vector<16x64xf32> to vector<16x8xf32>
    %64 = vector.extract_strided_slice %9 {offsets = [0, 16], sizes = [16, 8], strides = [1, 1]} : vector<16x64xf32> to vector<16x8xf32>
    %cst_25 = arith.constant dense<0.000000e+00> : vector<16x16xf32>
    %65 = tpu.matmul %62, %63, %cst_25 {dimension_numbers = #tpu.dot_dimension_numbers<[1], [1], [0], [0], [0, 0, 1, 0], [], []>} : vector<16x8xf32>, vector<16x8xf32>, vector<16x16xf32> -> vector<16x16xf32>
    %cst_26 = arith.constant -1.000000e+09 : f32
    %66 = vector.broadcast %cst_26 : f32 to vector<16x16xf32>
    %67 = arith.select %21, %65, %66 : vector<16x16xi1>, vector<16x16xf32>
    %cst_27 = arith.constant dense<0xFF800000> : vector<16xf32>
    %68 = vector.multi_reduction <maximumf>, %67, %cst_27 [1] : vector<16x16xf32> to vector<16xf32>
    %69 = vector.shape_cast %68 : vector<16xf32> to vector<16x1xf32>
    %70 = vector.broadcast %69 : vector<16x1xf32> to vector<16x16xf32>
    %71 = arith.subf %67, %70 : vector<16x16xf32>
    %72 = math.exp %71 : vector<16x16xf32>
    %cst_28 = arith.constant dense<0.000000e+00> : vector<16xf32>
    %73 = vector.multi_reduction <add>, %72, %cst_28 [1] : vector<16x16xf32> to vector<16xf32>
    %74 = vector.shape_cast %73 : vector<16xf32> to vector<16x1xf32>
    %cst_29 = arith.constant dense<0.000000e+00> : vector<16x8xf32>
    %75 = tpu.matmul %72, %64, %cst_29 {dimension_numbers = #tpu.dot_dimension_numbers<[1], [0], [0], [1], [0, 0, 1, 1], [], []>} : vector<16x16xf32>, vector<16x8xf32>, vector<16x8xf32> -> vector<16x8xf32>
    %76 = vector.broadcast %74 : vector<16x1xf32> to vector<16x8xf32>
    %77 = arith.divf %75, %76 : vector<16x8xf32>
    %78 = vector.extract_strided_slice %22 {offsets = [16, 0], sizes = [8, 64], strides = [1, 1]} : vector<64x64xf32> to vector<8x64xf32>
    %cst_30 = arith.constant dense<0.000000e+00> : vector<16x64xf32>
    %79 = tpu.matmul %77, %78, %cst_30 {dimension_numbers = #tpu.dot_dimension_numbers<[1], [0], [0], [1], [0, 0, 1, 1], [], []>} : vector<16x8xf32>, vector<8x64xf32>, vector<16x64xf32> -> vector<16x64xf32>
    %80 = arith.addf %61, %79 : vector<16x64xf32>
    %81 = vector.extract_strided_slice %7 {offsets = [0, 24], sizes = [16, 8], strides = [1, 1]} : vector<16x64xf32> to vector<16x8xf32>
    %82 = vector.extract_strided_slice %8 {offsets = [0, 24], sizes = [16, 8], strides = [1, 1]} : vector<16x64xf32> to vector<16x8xf32>
    %83 = vector.extract_strided_slice %9 {offsets = [0, 24], sizes = [16, 8], strides = [1, 1]} : vector<16x64xf32> to vector<16x8xf32>
    %cst_31 = arith.constant dense<0.000000e+00> : vector<16x16xf32>
    %84 = tpu.matmul %81, %82, %cst_31 {dimension_numbers = #tpu.dot_dimension_numbers<[1], [1], [0], [0], [0, 0, 1, 0], [], []>} : vector<16x8xf32>, vector<16x8xf32>, vector<16x16xf32> -> vector<16x16xf32>
    %cst_32 = arith.constant -1.000000e+09 : f32
    %85 = vector.broadcast %cst_32 : f32 to vector<16x16xf32>
    %86 = arith.select %21, %84, %85 : vector<16x16xi1>, vector<16x16xf32>
    %cst_33 = arith.constant dense<0xFF800000> : vector<16xf32>
    %87 = vector.multi_reduction <maximumf>, %86, %cst_33 [1] : vector<16x16xf32> to vector<16xf32>
    %88 = vector.shape_cast %87 : vector<16xf32> to vector<16x1xf32>
    %89 = vector.broadcast %88 : vector<16x1xf32> to vector<16x16xf32>
    %90 = arith.subf %86, %89 : vector<16x16xf32>
    %91 = math.exp %90 : vector<16x16xf32>
    %cst_34 = arith.constant dense<0.000000e+00> : vector<16xf32>
    %92 = vector.multi_reduction <add>, %91, %cst_34 [1] : vector<16x16xf32> to vector<16xf32>
    %93 = vector.shape_cast %92 : vector<16xf32> to vector<16x1xf32>
    %cst_35 = arith.constant dense<0.000000e+00> : vector<16x8xf32>
    %94 = tpu.matmul %91, %83, %cst_35 {dimension_numbers = #tpu.dot_dimension_numbers<[1], [0], [0], [1], [0, 0, 1, 1], [], []>} : vector<16x16xf32>, vector<16x8xf32>, vector<16x8xf32> -> vector<16x8xf32>
    %95 = vector.broadcast %93 : vector<16x1xf32> to vector<16x8xf32>
    %96 = arith.divf %94, %95 : vector<16x8xf32>
    %97 = vector.extract_strided_slice %22 {offsets = [24, 0], sizes = [8, 64], strides = [1, 1]} : vector<64x64xf32> to vector<8x64xf32>
    %cst_36 = arith.constant dense<0.000000e+00> : vector<16x64xf32>
    %98 = tpu.matmul %96, %97, %cst_36 {dimension_numbers = #tpu.dot_dimension_numbers<[1], [0], [0], [1], [0, 0, 1, 1], [], []>} : vector<16x8xf32>, vector<8x64xf32>, vector<16x64xf32> -> vector<16x64xf32>
    %99 = arith.addf %80, %98 : vector<16x64xf32>
    %100 = vector.extract_strided_slice %7 {offsets = [0, 32], sizes = [16, 8], strides = [1, 1]} : vector<16x64xf32> to vector<16x8xf32>
    %101 = vector.extract_strided_slice %8 {offsets = [0, 32], sizes = [16, 8], strides = [1, 1]} : vector<16x64xf32> to vector<16x8xf32>
    %102 = vector.extract_strided_slice %9 {offsets = [0, 32], sizes = [16, 8], strides = [1, 1]} : vector<16x64xf32> to vector<16x8xf32>
    %cst_37 = arith.constant dense<0.000000e+00> : vector<16x16xf32>
    %103 = tpu.matmul %100, %101, %cst_37 {dimension_numbers = #tpu.dot_dimension_numbers<[1], [1], [0], [0], [0, 0, 1, 0], [], []>} : vector<16x8xf32>, vector<16x8xf32>, vector<16x16xf32> -> vector<16x16xf32>
    %cst_38 = arith.constant -1.000000e+09 : f32
    %104 = vector.broadcast %cst_38 : f32 to vector<16x16xf32>
    %105 = arith.select %21, %103, %104 : vector<16x16xi1>, vector<16x16xf32>
    %cst_39 = arith.constant dense<0xFF800000> : vector<16xf32>
    %106 = vector.multi_reduction <maximumf>, %105, %cst_39 [1] : vector<16x16xf32> to vector<16xf32>
    %107 = vector.shape_cast %106 : vector<16xf32> to vector<16x1xf32>
    %108 = vector.broadcast %107 : vector<16x1xf32> to vector<16x16xf32>
    %109 = arith.subf %105, %108 : vector<16x16xf32>
    %110 = math.exp %109 : vector<16x16xf32>
    %cst_40 = arith.constant dense<0.000000e+00> : vector<16xf32>
    %111 = vector.multi_reduction <add>, %110, %cst_40 [1] : vector<16x16xf32> to vector<16xf32>
    %112 = vector.shape_cast %111 : vector<16xf32> to vector<16x1xf32>
    %cst_41 = arith.constant dense<0.000000e+00> : vector<16x8xf32>
    %113 = tpu.matmul %110, %102, %cst_41 {dimension_numbers = #tpu.dot_dimension_numbers<[1], [0], [0], [1], [0, 0, 1, 1], [], []>} : vector<16x16xf32>, vector<16x8xf32>, vector<16x8xf32> -> vector<16x8xf32>
    %114 = vector.broadcast %112 : vector<16x1xf32> to vector<16x8xf32>
    %115 = arith.divf %113, %114 : vector<16x8xf32>
    %116 = vector.extract_strided_slice %22 {offsets = [32, 0], sizes = [8, 64], strides = [1, 1]} : vector<64x64xf32> to vector<8x64xf32>
    %cst_42 = arith.constant dense<0.000000e+00> : vector<16x64xf32>
    %117 = tpu.matmul %115, %116, %cst_42 {dimension_numbers = #tpu.dot_dimension_numbers<[1], [0], [0], [1], [0, 0, 1, 1], [], []>} : vector<16x8xf32>, vector<8x64xf32>, vector<16x64xf32> -> vector<16x64xf32>
    %118 = arith.addf %99, %117 : vector<16x64xf32>
    %119 = vector.extract_strided_slice %7 {offsets = [0, 40], sizes = [16, 8], strides = [1, 1]} : vector<16x64xf32> to vector<16x8xf32>
    %120 = vector.extract_strided_slice %8 {offsets = [0, 40], sizes = [16, 8], strides = [1, 1]} : vector<16x64xf32> to vector<16x8xf32>
    %121 = vector.extract_strided_slice %9 {offsets = [0, 40], sizes = [16, 8], strides = [1, 1]} : vector<16x64xf32> to vector<16x8xf32>
    %cst_43 = arith.constant dense<0.000000e+00> : vector<16x16xf32>
    %122 = tpu.matmul %119, %120, %cst_43 {dimension_numbers = #tpu.dot_dimension_numbers<[1], [1], [0], [0], [0, 0, 1, 0], [], []>} : vector<16x8xf32>, vector<16x8xf32>, vector<16x16xf32> -> vector<16x16xf32>
    %cst_44 = arith.constant -1.000000e+09 : f32
    %123 = vector.broadcast %cst_44 : f32 to vector<16x16xf32>
    %124 = arith.select %21, %122, %123 : vector<16x16xi1>, vector<16x16xf32>
    %cst_45 = arith.constant dense<0xFF800000> : vector<16xf32>
    %125 = vector.multi_reduction <maximumf>, %124, %cst_45 [1] : vector<16x16xf32> to vector<16xf32>
    %126 = vector.shape_cast %125 : vector<16xf32> to vector<16x1xf32>
    %127 = vector.broadcast %126 : vector<16x1xf32> to vector<16x16xf32>
    %128 = arith.subf %124, %127 : vector<16x16xf32>
    %129 = math.exp %128 : vector<16x16xf32>
    %cst_46 = arith.constant dense<0.000000e+00> : vector<16xf32>
    %130 = vector.multi_reduction <add>, %129, %cst_46 [1] : vector<16x16xf32> to vector<16xf32>
    %131 = vector.shape_cast %130 : vector<16xf32> to vector<16x1xf32>
    %cst_47 = arith.constant dense<0.000000e+00> : vector<16x8xf32>
    %132 = tpu.matmul %129, %121, %cst_47 {dimension_numbers = #tpu.dot_dimension_numbers<[1], [0], [0], [1], [0, 0, 1, 1], [], []>} : vector<16x16xf32>, vector<16x8xf32>, vector<16x8xf32> -> vector<16x8xf32>
    %133 = vector.broadcast %131 : vector<16x1xf32> to vector<16x8xf32>
    %134 = arith.divf %132, %133 : vector<16x8xf32>
    %135 = vector.extract_strided_slice %22 {offsets = [40, 0], sizes = [8, 64], strides = [1, 1]} : vector<64x64xf32> to vector<8x64xf32>
    %cst_48 = arith.constant dense<0.000000e+00> : vector<16x64xf32>
    %136 = tpu.matmul %134, %135, %cst_48 {dimension_numbers = #tpu.dot_dimension_numbers<[1], [0], [0], [1], [0, 0, 1, 1], [], []>} : vector<16x8xf32>, vector<8x64xf32>, vector<16x64xf32> -> vector<16x64xf32>
    %137 = arith.addf %118, %136 : vector<16x64xf32>
    %138 = vector.extract_strided_slice %7 {offsets = [0, 48], sizes = [16, 8], strides = [1, 1]} : vector<16x64xf32> to vector<16x8xf32>
    %139 = vector.extract_strided_slice %8 {offsets = [0, 48], sizes = [16, 8], strides = [1, 1]} : vector<16x64xf32> to vector<16x8xf32>
    %140 = vector.extract_strided_slice %9 {offsets = [0, 48], sizes = [16, 8], strides = [1, 1]} : vector<16x64xf32> to vector<16x8xf32>
    %cst_49 = arith.constant dense<0.000000e+00> : vector<16x16xf32>
    %141 = tpu.matmul %138, %139, %cst_49 {dimension_numbers = #tpu.dot_dimension_numbers<[1], [1], [0], [0], [0, 0, 1, 0], [], []>} : vector<16x8xf32>, vector<16x8xf32>, vector<16x16xf32> -> vector<16x16xf32>
    %cst_50 = arith.constant -1.000000e+09 : f32
    %142 = vector.broadcast %cst_50 : f32 to vector<16x16xf32>
    %143 = arith.select %21, %141, %142 : vector<16x16xi1>, vector<16x16xf32>
    %cst_51 = arith.constant dense<0xFF800000> : vector<16xf32>
    %144 = vector.multi_reduction <maximumf>, %143, %cst_51 [1] : vector<16x16xf32> to vector<16xf32>
    %145 = vector.shape_cast %144 : vector<16xf32> to vector<16x1xf32>
    %146 = vector.broadcast %145 : vector<16x1xf32> to vector<16x16xf32>
    %147 = arith.subf %143, %146 : vector<16x16xf32>
    %148 = math.exp %147 : vector<16x16xf32>
    %cst_52 = arith.constant dense<0.000000e+00> : vector<16xf32>
    %149 = vector.multi_reduction <add>, %148, %cst_52 [1] : vector<16x16xf32> to vector<16xf32>
    %150 = vector.shape_cast %149 : vector<16xf32> to vector<16x1xf32>
    %cst_53 = arith.constant dense<0.000000e+00> : vector<16x8xf32>
    %151 = tpu.matmul %148, %140, %cst_53 {dimension_numbers = #tpu.dot_dimension_numbers<[1], [0], [0], [1], [0, 0, 1, 1], [], []>} : vector<16x16xf32>, vector<16x8xf32>, vector<16x8xf32> -> vector<16x8xf32>
    %152 = vector.broadcast %150 : vector<16x1xf32> to vector<16x8xf32>
    %153 = arith.divf %151, %152 : vector<16x8xf32>
    %154 = vector.extract_strided_slice %22 {offsets = [48, 0], sizes = [8, 64], strides = [1, 1]} : vector<64x64xf32> to vector<8x64xf32>
    %cst_54 = arith.constant dense<0.000000e+00> : vector<16x64xf32>
    %155 = tpu.matmul %153, %154, %cst_54 {dimension_numbers = #tpu.dot_dimension_numbers<[1], [0], [0], [1], [0, 0, 1, 1], [], []>} : vector<16x8xf32>, vector<8x64xf32>, vector<16x64xf32> -> vector<16x64xf32>
    %156 = arith.addf %137, %155 : vector<16x64xf32>
    %157 = vector.extract_strided_slice %7 {offsets = [0, 56], sizes = [16, 8], strides = [1, 1]} : vector<16x64xf32> to vector<16x8xf32>
    %158 = vector.extract_strided_slice %8 {offsets = [0, 56], sizes = [16, 8], strides = [1, 1]} : vector<16x64xf32> to vector<16x8xf32>
    %159 = vector.extract_strided_slice %9 {offsets = [0, 56], sizes = [16, 8], strides = [1, 1]} : vector<16x64xf32> to vector<16x8xf32>
    %cst_55 = arith.constant dense<0.000000e+00> : vector<16x16xf32>
    %160 = tpu.matmul %157, %158, %cst_55 {dimension_numbers = #tpu.dot_dimension_numbers<[1], [1], [0], [0], [0, 0, 1, 0], [], []>} : vector<16x8xf32>, vector<16x8xf32>, vector<16x16xf32> -> vector<16x16xf32>
    %cst_56 = arith.constant -1.000000e+09 : f32
    %161 = vector.broadcast %cst_56 : f32 to vector<16x16xf32>
    %162 = arith.select %21, %160, %161 : vector<16x16xi1>, vector<16x16xf32>
    %cst_57 = arith.constant dense<0xFF800000> : vector<16xf32>
    %163 = vector.multi_reduction <maximumf>, %162, %cst_57 [1] : vector<16x16xf32> to vector<16xf32>
    %164 = vector.shape_cast %163 : vector<16xf32> to vector<16x1xf32>
    %165 = vector.broadcast %164 : vector<16x1xf32> to vector<16x16xf32>
    %166 = arith.subf %162, %165 : vector<16x16xf32>
    %167 = math.exp %166 : vector<16x16xf32>
    %cst_58 = arith.constant dense<0.000000e+00> : vector<16xf32>
    %168 = vector.multi_reduction <add>, %167, %cst_58 [1] : vector<16x16xf32> to vector<16xf32>
    %169 = vector.shape_cast %168 : vector<16xf32> to vector<16x1xf32>
    %cst_59 = arith.constant dense<0.000000e+00> : vector<16x8xf32>
    %170 = tpu.matmul %167, %159, %cst_59 {dimension_numbers = #tpu.dot_dimension_numbers<[1], [0], [0], [1], [0, 0, 1, 1], [], []>} : vector<16x16xf32>, vector<16x8xf32>, vector<16x8xf32> -> vector<16x8xf32>
    %171 = vector.broadcast %169 : vector<16x1xf32> to vector<16x8xf32>
    %172 = arith.divf %170, %171 : vector<16x8xf32>
    %173 = vector.extract_strided_slice %22 {offsets = [56, 0], sizes = [8, 64], strides = [1, 1]} : vector<64x64xf32> to vector<8x64xf32>
    %cst_60 = arith.constant dense<0.000000e+00> : vector<16x64xf32>
    %174 = tpu.matmul %172, %173, %cst_60 {dimension_numbers = #tpu.dot_dimension_numbers<[1], [0], [0], [1], [0, 0, 1, 1], [], []>} : vector<16x8xf32>, vector<8x64xf32>, vector<16x64xf32> -> vector<16x64xf32>
    %175 = arith.addf %156, %174 : vector<16x64xf32>
    %c0_61 = arith.constant 0 : index
    %c0_62 = arith.constant 0 : index
    %176 = vector.load %arg6[%c0_61, %c0_62] : memref<1x64xf32, #tpu.memory_space<vmem>>, vector<1x64xf32>
    %177 = vector.broadcast %176 : vector<1x64xf32> to vector<16x64xf32>
    %178 = arith.addf %175, %177 : vector<16x64xf32>
    %179 = arith.addf %1, %178 : vector<16x64xf32>
    %cst_63 = arith.constant dense<0.000000e+00> : vector<16xf32>
    %180 = vector.multi_reduction <add>, %179, %cst_63 [1] : vector<16x64xf32> to vector<16xf32>
    %181 = vector.shape_cast %180 : vector<16xf32> to vector<16x1xf32>
    %cst_64 = arith.constant 6.400000e+01 : f32
    %182 = vector.broadcast %cst_64 : f32 to vector<16x1xf32>
    %183 = arith.divf %181, %182 : vector<16x1xf32>
    %184 = vector.broadcast %183 : vector<16x1xf32> to vector<16x64xf32>
    %185 = arith.subf %179, %184 : vector<16x64xf32>
    %186 = arith.mulf %185, %185 : vector<16x64xf32>
    %cst_65 = arith.constant dense<0.000000e+00> : vector<16xf32>
    %187 = vector.multi_reduction <add>, %186, %cst_65 [1] : vector<16x64xf32> to vector<16xf32>
    %188 = vector.shape_cast %187 : vector<16xf32> to vector<16x1xf32>
    %cst_66 = arith.constant 6.400000e+01 : f32
    %189 = vector.broadcast %cst_66 : f32 to vector<16x1xf32>
    %190 = arith.divf %188, %189 : vector<16x1xf32>
    %cst_67 = arith.constant 9.99999974E-6 : f32
    %191 = vector.broadcast %cst_67 : f32 to vector<16x1xf32>
    %192 = arith.addf %190, %191 : vector<16x1xf32>
    %193 = math.rsqrt %192 : vector<16x1xf32>
    %194 = vector.broadcast %193 : vector<16x1xf32> to vector<16x64xf32>
    %195 = arith.mulf %185, %194 : vector<16x64xf32>
    %c0_68 = arith.constant 0 : index
    %c0_69 = arith.constant 0 : index
    %196 = vector.load %arg7[%c0_68, %c0_69] : memref<1x64xf32, #tpu.memory_space<vmem>>, vector<1x64xf32>
    %197 = vector.broadcast %196 : vector<1x64xf32> to vector<16x64xf32>
    %198 = arith.mulf %195, %197 : vector<16x64xf32>
    %c0_70 = arith.constant 0 : index
    %c0_71 = arith.constant 0 : index
    %199 = vector.load %arg8[%c0_70, %c0_71] : memref<1x64xf32, #tpu.memory_space<vmem>>, vector<1x64xf32>
    %200 = vector.broadcast %199 : vector<1x64xf32> to vector<16x64xf32>
    %201 = arith.addf %198, %200 : vector<16x64xf32>
    %202 = vector.shape_cast %201 : vector<16x64xf32> to vector<2x8x64xf32>
    %c0_72 = arith.constant 0 : index
    %c0_73 = arith.constant 0 : index
    %c0_74 = arith.constant 0 : index
    %203 = vector.load %arg9[%c0_72, %c0_73, %c0_74] : memref<2x8x64xf32, #tpu.memory_space<vmem>>, vector<2x8x64xf32>
    tpu.vector_store %arg9[%c0_72, %c0_73, %c0_74], %202 {strides = array<i32>} : memref<2x8x64xf32, #tpu.memory_space<vmem>>, vector<2x8x64xf32>,
    return
  }
  func.func @transform_0(%arg0: i32) -> (i32, i32, i32) {
    %c0_i32 = arith.constant 0 : i32
    %c0_i32_0 = arith.constant 0 : i32
    %c0_i32_1 = arith.constant 0 : i32
    return %arg0, %c0_i32, %c0_i32_0 : i32, i32, i32
  }
  func.func @transform_1(%arg0: i32) -> (i32, i32, i32) {
    %c0_i32 = arith.constant 0 : i32
    %c0_i32_0 = arith.constant 0 : i32
    %c0_i32_1 = arith.constant 0 : i32
    return %arg0, %c0_i32, %c0_i32_0 : i32, i32, i32
  }
  func.func @transform_2(%arg0: i32) -> (i32, i32) {
    %c0_i32 = arith.constant 0 : i32
    %c0_i32_0 = arith.constant 0 : i32
    %c0_i32_1 = arith.constant 0 : i32
    return %c0_i32, %c0_i32_0 : i32, i32
  }
  func.func @transform_3(%arg0: i32) -> (i32, i32) {
    %c0_i32 = arith.constant 0 : i32
    %c0_i32_0 = arith.constant 0 : i32
    %c0_i32_1 = arith.constant 0 : i32
    return %c0_i32, %c0_i32_0 : i32, i32
  }
  func.func @transform_4(%arg0: i32) -> (i32, i32) {
    %c0_i32 = arith.constant 0 : i32
    %c0_i32_0 = arith.constant 0 : i32
    %c0_i32_1 = arith.constant 0 : i32
    return %c0_i32, %c0_i32_0 : i32, i32
  }
  func.func @transform_5(%arg0: i32) -> (i32, i32) {
    %c0_i32 = arith.constant 0 : i32
    %c0_i32_0 = arith.constant 0 : i32
    %c0_i32_1 = arith.constant 0 : i32
    return %c0_i32, %c0_i32_0 : i32, i32
  }
  func.func @transform_6(%arg0: i32) -> (i32, i32) {
    %c0_i32 = arith.constant 0 : i32
    %c0_i32_0 = arith.constant 0 : i32
    %c0_i32_1 = arith.constant 0 : i32
    return %c0_i32, %c0_i32_0 : i32, i32
  }
  func.func @transform_7(%arg0: i32) -> (i32, i32) {
    %c0_i32 = arith.constant 0 : i32
    %c0_i32_0 = arith.constant 0 : i32
    %c0_i32_1 = arith.constant 0 : i32
    return %c0_i32, %c0_i32_0 : i32, i32
  }
  func.func @transform_8(%arg0: i32) -> (i32, i32, i32) {
    %c0_i32 = arith.constant 0 : i32
    %c0_i32_0 = arith.constant 0 : i32
    %c0_i32_1 = arith.constant 0 : i32
    return %arg0, %c0_i32, %c0_i32_0 : i32, i32, i32
  }
}

</mosaic_0001>

<llo_original>
// kernel: device_fn.3
$region0: #{device_fn.3}
  #allocation0 [shape = 'u32[]', space=smem, size = 0x4, offset = 0x4, fixed_abs, tag = 'smem constant byte address 0x4 - core index']
  #allocation1 [shape = 'u32[144,128]{1,0:T(1,128)}', space=vmem, size = 0x12000, scoped, tag = 'internal scratch']
  %s0 = inlined_call_operand.vmem [shape: f32[32,64], index: 0, kind: input, shape index: {}]
  %s1 = inlined_call_operand.vmem [shape: f32[1,64], index: 1, kind: input, shape index: {}]
  %s2 = inlined_call_operand.vmem [shape: f32[1,64], index: 2, kind: input, shape index: {}]
  %s3 = inlined_call_operand.hbm [shape: f32[32,64], index: 3, kind: output, shape index: {}]
  %s4 = sld [smem:[#allocation0]]
  $region22: #{device_fn.3} parent=0
    _
  %s6 = ssub.s32 1, %s4
  %s7 = scalar_select 0, %s6, %s4
  $region1: #{device_fn.3} parent=0
    #allocation2 [shape = 'u8[16384]{0}', space=vmem, size = 0x4000, scoped, tag = 'output window, operand 0, single buffered']
    #allocation3 [shape = 's32[1]{0}', space=sflag, size = 0x4, scoped, tag = 'scoped memory for device_fn.3']
    %8 = vsyncpa [#allocation3], 0
    // Predicated region
    $region2: #{device_fn.3} parent=1 // pred_check
      _
    $region3: #{device_fn.3} parent=1 // pred_check_branch
      %10 = sbr.rel (0) target = $region5
    $region4: #{device_fn.3} parent=1 // pred_region
      _
    $region5: #{device_fn.3} parent=1 // pred_fallthru
      _
    // Predicated region
    $region6: #{device_fn.3} parent=1 // pred_check
      _
    $region7: #{device_fn.3} parent=1 // pred_check_branch
      %12 = sbr.rel (0) target = $region9
    $region8: #{device_fn.3} parent=1 // pred_region
      _
    $region9: #{device_fn.3} parent=1 // pred_fallthru
      _
    // Predicated region
    $region10: #{device_fn.3} parent=1 // pred_check
      _
    $region11: #{device_fn.3} parent=1 // pred_check_branch
      %14 = sbr.rel (0) target = $region13
    $region12: #{device_fn.3} parent=1 // pred_region
      _
    $region13: #{device_fn.3} parent=1 // pred_fallthru
      _
    %v15 = vld [vmem:[%s0] sm:$0xff]
    %v16 = vld [vmem:[%s0 + $0x8] sm:$0xff]
    %v17 = vld [vmem:[%s0 + $0x10] sm:$0xff]
    %v18 = vld [vmem:[%s0 + $0x18] sm:$0xff]
    %v19 = vmul.f32 %v15, 2.0
    %v20 = vmul.f32 %v16, 2.0
    %v21 = vmul.f32 %v17, 2.0
    %v22 = vmul.f32 %v18, 2.0
    %vm23 = vcmask 523264
    %v24 = vsel %vm23, %v19, 0.0
    %25 = vadd.xlane.f32.xlu0 %v24
    %v26 = vpop.xlane.xlu0 %25
    %v27 = vsel %vm23, %v20, 0.0
    %28 = vadd.xlane.f32.xlu0 %v27
    %v29 = vpop.xlane.xlu0 %28
    %v30 = vsel %vm23, %v21, 0.0
    %31 = vadd.xlane.f32.xlu0 %v30
    %v32 = vpop.xlane.xlu0 %31
    %v33 = vsel %vm23, %v22, 0.0
    %34 = vadd.xlane.f32.xlu0 %v33
    %v35 = vpop.xlane.xlu0 %34
    %v36 = vrcp.pop 64.0
    %v37 = vmul.f32 %v26, %v36
    %v38 = vmul.f32 %v29, %v36
    %v39 = vmul.f32 %v32, %v36
    %v40 = vmul.f32 %v35, %v36
    %v41 = vsub.f32 %v19, %v37
    %v42 = vsub.f32 %v20, %v38
    %v43 = vsub.f32 %v21, %v39
    %v44 = vsub.f32 %v22, %v40
    %v45 = vmul.f32 %v41, %v41
    %v46 = vmul.f32 %v42, %v42
    %v47 = vmul.f32 %v43, %v43
    %v48 = vmul.f32 %v44, %v44
    %v49 = vsel %vm23, %v45, 0.0
    %50 = vadd.xlane.f32.xlu0 %v49
    %v51 = vpop.xlane.xlu0 %50
    %v52 = vsel %vm23, %v46, 0.0
    %53 = vadd.xlane.f32.xlu0 %v52
    %v54 = vpop.xlane.xlu0 %53
    %v55 = vsel %vm23, %v47, 0.0
    %56 = vadd.xlane.f32.xlu0 %v55
    %v57 = vpop.xlane.xlu0 %56
    %v58 = vsel %vm23, %v48, 0.0
    %59 = vadd.xlane.f32.xlu0 %v58
    %v60 = vpop.xlane.xlu0 %59
    %v61 = vmul.f32 %v51, %v36
    %v62 = vmul.f32 %v54, %v36
    %v63 = vmul.f32 %v57, %v36
    %v64 = vmul.f32 %v60, %v36
    %v65 = vadd.f32 %v61, 1e-05
    %v66 = vadd.f32 %v62, 1e-05
    %v67 = vadd.f32 %v63, 1e-05
    %v68 = vadd.f32 %v64, 1e-05
    %v69 = vrsqrt.pop %v65
    %v70 = vrsqrt.pop %v66
    %v71 = vrsqrt.pop %v67
    %v72 = vrsqrt.pop %v68
    %v73 = vmul.f32 %v41, %v69
    %v74 = vmul.f32 %v42, %v70
    %v75 = vmul.f32 %v43, %v71
    %v76 = vmul.f32 %v44, %v72
    %v77 = vld [vmem:[%s1] sm:$0x1]
    %v79 = vlaneseq
    %v80 = vshrl.u32 %v79, 7
    %v81 = vsub.s32 0, %v80
    %v82 = vrot.slane %v77, %v81
    %v84 = vmul.f32 %v73, %v82
    %v85 = vmul.f32 %v74, %v82
    %v86 = vmul.f32 %v75, %v82
    %v87 = vmul.f32 %v76, %v82
    %v88 = vld [vmem:[%s2] sm:$0x1]
    %v90 = vlaneseq
    %v91 = vshrl.u32 %v90, 7
    %v92 = vsub.s32 0, %v91
    %v93 = vrot.slane %v88, %v92
    %v95 = vadd.f32 %v84, %v93
    %v96 = vadd.f32 %v85, %v93
    %v97 = vadd.f32 %v86, %v93
    %v98 = vadd.f32 %v87, %v93
    %99 = vst.msk [vmem:[#allocation2] sm:$0xff] %vm23, %v95
    %100 = vst.msk [vmem:[#allocation2 + $0x8] sm:$0xff] %vm23, %v96
    %101 = vst.msk [vmem:[#allocation2 + $0x10] sm:$0xff] %vm23, %v97
    %102 = vst.msk [vmem:[#allocation2 + $0x18] sm:$0xff] %vm23, %v98
    // Predicated region
    $region14: #{device_fn.3} parent=1 // pred_check
      _
    $region15: #{device_fn.3} parent=1 // pred_check_branch
      %104 = sbr.rel (0) target = $region17
    $region16: #{device_fn.3} parent=1 // pred_region
      %s106 = ssub.s32 512, 512
      %107 = vsyncadd [#allocation3], %s106
      %s108 = sshll.u32 [#allocation2], 4
      %s109 = int_to_ptr.vmem [resolvable:$true] %s108
      %114 = dma.vmem_to_hbm [thread:$0]  %s109, 512, %s3, [#allocation3], 128, 128, 8
    $region17: #{device_fn.3} parent=1 // pred_fallthru
      _
    // Predicated region
    $region18: #{device_fn.3} parent=1 // pred_check
      _
    $region19: #{device_fn.3} parent=1 // pred_check_branch
      %116 = sbr.rel (0) target = $region21
    $region20: #{device_fn.3} parent=1 // pred_region
      %117 = dma.done [#allocation3], 512
    $region21: #{device_fn.3} parent=1 // pred_fallthru
      _
    %118 = vsyncpa [#allocation3], 1

// kernel: device_fn.2
$region0: #{device_fn.2}
  #allocation0 [shape = 'u32[]', space=smem, size = 0x4, offset = 0x4, fixed_abs, tag = 'smem constant byte address 0x4 - core index']
  #allocation1 [shape = 'u32[144,128]{1,0:T(1,128)}', space=vmem, size = 0x12000, scoped, tag = 'internal scratch']
  %s0 = inlined_call_operand.vmem [shape: f32[4,8,64], index: 0, kind: input, shape index: {}]
  %s1 = inlined_call_operand.vmem [shape: s32[2,1,16], index: 1, kind: input, shape index: {}]
  %s2 = inlined_call_operand.vmem [shape: f32[64,192], index: 2, kind: input, shape index: {}]
  %s3 = inlined_call_operand.vmem [shape: f32[1,192], index: 3, kind: input, shape index: {}]
  %s4 = inlined_call_operand.vmem [shape: f32[64,64], index: 4, kind: input, shape index: {}]
  %s5 = inlined_call_operand.vmem [shape: f32[1,64], index: 5, kind: input, shape index: {}]
  %s6 = inlined_call_operand.vmem [shape: f32[1,64], index: 6, kind: input, shape index: {}]
  %s7 = inlined_call_operand.vmem [shape: f32[1,64], index: 7, kind: input, shape index: {}]
  %s8 = inlined_call_operand.vmem [shape: f32[4,8,64], index: 8, kind: output, shape index: {}]
  %s9 = sld [smem:[#allocation0]]
  $region65: #{device_fn.2} parent=0
    _
  %s11 = ssub.s32 1, %s9
  %s12 = scalar_select 0, %s11, %s9
  loop: start=0, step=1, limit=4
  $region2: #{device_fn.2} parent=0 // loop_pre_header
    _
  $region3: #{device_fn.2} parent=0 // loop_header
    %s14 = sphi 0, %s18
    %p15 = scmp.ge.s32.totalorder %s14, 4
    %s24 = sphi 0, %s26
    %s27 = sphi 0, %s24
    %s28 = sphi 0, %s27
    %s44 = sphi 0, %s28
    %s50 = sphi 0, %s52
    %s53 = sphi 0, %s50
    %s54 = sphi 0, %s53
    %s70 = sphi 0, %s54
    %s74 = sphi 0, %s74
    %s76 = sphi 0, %s74
    %s77 = sphi 0, %s76
    %s91 = sphi 0, %s77
    %s95 = sphi 0, %s95
    %s97 = sphi 0, %s95
    %s98 = sphi 0, %s97
    %s112 = sphi 0, %s98
    %s116 = sphi 0, %s116
    %s118 = sphi 0, %s116
    %s119 = sphi 0, %s118
    %s133 = sphi 0, %s119
    %s137 = sphi 0, %s137
    %s139 = sphi 0, %s137
    %s140 = sphi 0, %s139
    %s154 = sphi 0, %s140
    %s158 = sphi 0, %s158
    %s160 = sphi 0, %s158
    %s161 = sphi 0, %s160
    %s175 = sphi 0, %s161
    %s179 = sphi 0, %s179
    %s181 = sphi 0, %s179
    %s182 = sphi 0, %s181
    %s196 = sphi 0, %s182
    %s202 = sphi 0, %s204
    %s205 = sphi 0, %s202
    %s206 = sphi 0, %s205
    %s222 = sphi 0, %s206
  $region4: #{device_fn.2} parent=0 // loop_header_branch
    %17 = sbr.rel (%p15) target = $region8
  $region5: #{device_fn.2} parent=0 // loop_body
    %s19 = ssub.s32 %s14, 1
    %s20 = ssub.s32 %s14, 2
    %s21 = sadd.s32 %s14, 1
    %s22 = ssub.s32 %s14, %s21
    %p23 = scmp.eq.s32.totalorder %s22, 0
    %s25 = sadd.s32 %s24, 1
    %s26 = scalar_select %p23, %s24, %s25
    %p29 = pneg %p23
    %p30 = scmp.eq.s32.totalorder %s14, 1
    %p31 = por %p29, %p30
    %p32 = scmp.ne.s32.totalorder %s24, %s27
    %p33 = scmp.eq.s32.totalorder %s14, 0
    %p34 = por %p32, %p33
    %p35 = scmp.ne.s32.totalorder %s24, %s27
    %p36 = scmp.eq.s32.totalorder %s19, 1
    %p37 = por %p35, %p36
    %p38 = scmp.ne.s32.totalorder %s27, %s28
    %p39 = scmp.eq.s32.totalorder %s19, 0
    %p40 = por %p38, %p39
    %p41 = scmp.ne.s32.totalorder %s27, %s28
    %p42 = scmp.eq.s32.totalorder %s20, 1
    %p43 = por %p41, %p42
    %p45 = scmp.ne.s32.totalorder %s28, %s44
    %p46 = scmp.eq.s32.totalorder %s20, 0
    %p47 = por %p45, %p46
    %s48 = ssub.s32 %s14, %s21
    %p49 = scmp.eq.s32.totalorder %s48, 0
    %s51 = sadd.s32 %s50, 1
    %s52 = scalar_select %p49, %s50, %s51
    %p55 = pneg %p49
    %p56 = scmp.eq.s32.totalorder %s14, 1
    %p57 = por %p55, %p56
    %p58 = scmp.ne.s32.totalorder %s50, %s53
    %p59 = scmp.eq.s32.totalorder %s14, 0
    %p60 = por %p58, %p59
    %p61 = scmp.ne.s32.totalorder %s50, %s53
    %p62 = scmp.eq.s32.totalorder %s19, 1
    %p63 = por %p61, %p62
    %p64 = scmp.ne.s32.totalorder %s53, %s54
    %p65 = scmp.eq.s32.totalorder %s19, 0
    %p66 = por %p64, %p65
    %p67 = scmp.ne.s32.totalorder %s53, %s54
    %p68 = scmp.eq.s32.totalorder %s20, 1
    %p69 = por %p67, %p68
    %p71 = scmp.ne.s32.totalorder %s54, %s70
    %p72 = scmp.eq.s32.totalorder %s20, 0
    %p73 = por %p71, %p72
    %s75 = sadd.s32 %s74, 1
    %p78 = scmp.eq.s32.totalorder %s14, 1
    %p79 = scmp.ne.s32.totalorder %s74, %s76
    %p80 = scmp.eq.s32.totalorder %s14, 0
    %p81 = por %p79, %p80
    %p82 = scmp.ne.s32.totalorder %s74, %s76
    %p83 = scmp.eq.s32.totalorder %s19, 1
    %p84 = por %p82, %p83
    %p85 = scmp.ne.s32.totalorder %s76, %s77
    %p86 = scmp.eq.s32.totalorder %s19, 0
    %p87 = por %p85, %p86
    %p88 = scmp.ne.s32.totalorder %s76, %s77
    %p89 = scmp.eq.s32.totalorder %s20, 1
    %p90 = por %p88, %p89
    %p92 = scmp.ne.s32.totalorder %s77, %s91
    %p93 = scmp.eq.s32.totalorder %s20, 0
    %p94 = por %p92, %p93
    %s96 = sadd.s32 %s95, 1
    %p99 = scmp.eq.s32.totalorder %s14, 1
    %p100 = scmp.ne.s32.totalorder %s95, %s97
    %p101 = scmp.eq.s32.totalorder %s14, 0
    %p102 = por %p100, %p101
    %p103 = scmp.ne.s32.totalorder %s95, %s97
    %p104 = scmp.eq.s32.totalorder %s19, 1
    %p105 = por %p103, %p104
    %p106 = scmp.ne.s32.totalorder %s97, %s98
    %p107 = scmp.eq.s32.totalorder %s19, 0
    %p108 = por %p106, %p107
    %p109 = scmp.ne.s32.totalorder %s97, %s98
    %p110 = scmp.eq.s32.totalorder %s20, 1
    %p111 = por %p109, %p110
    %p113 = scmp.ne.s32.totalorder %s98, %s112
    %p114 = scmp.eq.s32.totalorder %s20, 0
    %p115 = por %p113, %p114
    %s117 = sadd.s32 %s116, 1
    %p120 = scmp.eq.s32.totalorder %s14, 1
    %p121 = scmp.ne.s32.totalorder %s116, %s118
    %p122 = scmp.eq.s32.totalorder %s14, 0
    %p123 = por %p121, %p122
    %p124 = scmp.ne.s32.totalorder %s116, %s118
    %p125 = scmp.eq.s32.totalorder %s19, 1
    %p126 = por %p124, %p125
    %p127 = scmp.ne.s32.totalorder %s118, %s119
    %p128 = scmp.eq.s32.totalorder %s19, 0
    %p129 = por %p127, %p128
    %p130 = scmp.ne.s32.totalorder %s118, %s119
    %p131 = scmp.eq.s32.totalorder %s20, 1
    %p132 = por %p130, %p131
    %p134 = scmp.ne.s32.totalorder %s119, %s133
    %p135 = scmp.eq.s32.totalorder %s20, 0
    %p136 = por %p134, %p135
    %s138 = sadd.s32 %s137, 1
    %p141 = scmp.eq.s32.totalorder %s14, 1
    %p142 = scmp.ne.s32.totalorder %s137, %s139
    %p143 = scmp.eq.s32.totalorder %s14, 0
    %p144 = por %p142, %p143
    %p145 = scmp.ne.s32.totalorder %s137, %s139
    %p146 = scmp.eq.s32.totalorder %s19, 1
    %p147 = por %p145, %p146
    %p148 = scmp.ne.s32.totalorder %s139, %s140
    %p149 = scmp.eq.s32.totalorder %s19, 0
    %p150 = por %p148, %p149
    %p151 = scmp.ne.s32.totalorder %s139, %s140
    %p152 = scmp.eq.s32.totalorder %s20, 1
    %p153 = por %p151, %p152
    %p155 = scmp.ne.s32.totalorder %s140, %s154
    %p156 = scmp.eq.s32.totalorder %s20, 0
    %p157 = por %p155, %p156
    %s159 = sadd.s32 %s158, 1
    %p162 = scmp.eq.s32.totalorder %s14, 1
    %p163 = scmp.ne.s32.totalorder %s158, %s160
    %p164 = scmp.eq.s32.totalorder %s14, 0
    %p165 = por %p163, %p164
    %p166 = scmp.ne.s32.totalorder %s158, %s160
    %p167 = scmp.eq.s32.totalorder %s19, 1
    %p168 = por %p166, %p167
    %p169 = scmp.ne.s32.totalorder %s160, %s161
    %p170 = scmp.eq.s32.totalorder %s19, 0
    %p171 = por %p169, %p170
    %p172 = scmp.ne.s32.totalorder %s160, %s161
    %p173 = scmp.eq.s32.totalorder %s20, 1
    %p174 = por %p172, %p173
    %p176 = scmp.ne.s32.totalorder %s161, %s175
    %p177 = scmp.eq.s32.totalorder %s20, 0
    %p178 = por %p176, %p177
    %s180 = sadd.s32 %s179, 1
    %p183 = scmp.eq.s32.totalorder %s14, 1
    %p184 = scmp.ne.s32.totalorder %s179, %s181
    %p185 = scmp.eq.s32.totalorder %s14, 0
    %p186 = por %p184, %p185
    %p187 = scmp.ne.s32.totalorder %s179, %s181
    %p188 = scmp.eq.s32.totalorder %s19, 1
    %p189 = por %p187, %p188
    %p190 = scmp.ne.s32.totalorder %s181, %s182
    %p191 = scmp.eq.s32.totalorder %s19, 0
    %p192 = por %p190, %p191
    %p193 = scmp.ne.s32.totalorder %s181, %s182
    %p194 = scmp.eq.s32.totalorder %s20, 1
    %p195 = por %p193, %p194
    %p197 = scmp.ne.s32.totalorder %s182, %s196
    %p198 = scmp.eq.s32.totalorder %s20, 0
    %p199 = por %p197, %p198
    %s200 = ssub.s32 %s14, %s21
    %p201 = scmp.eq.s32.totalorder %s200, 0
    %s203 = sadd.s32 %s202, 1
    %s204 = scalar_select %p201, %s202, %s203
    %p207 = pneg %p201
    %p208 = scmp.eq.s32.totalorder %s14, 1
    %p209 = por %p207, %p208
    %p210 = scmp.ne.s32.totalorder %s202, %s205
    %p211 = scmp.eq.s32.totalorder %s14, 0
    %p212 = por %p210, %p211
    %p213 = scmp.ne.s32.totalorder %s202, %s205
    %p214 = scmp.eq.s32.totalorder %s19, 1
    %p215 = por %p213, %p214
    %p216 = scmp.ne.s32.totalorder %s205, %s206
    %p217 = scmp.eq.s32.totalorder %s19, 0
    %p218 = por %p216, %p217
    %p219 = scmp.ne.s32.totalorder %s205, %s206
    %p220 = scmp.eq.s32.totalorder %s20, 1
    %p221 = por %p219, %p220
    %p223 = scmp.ne.s32.totalorder %s206, %s222
    %p224 = scmp.eq.s32.totalorder %s20, 0
    %p225 = por %p223, %p224
    %p226 = scmp.le.s32.totalorder 1, %s14
    %p227 = scmp.lt.s32.totalorder %s14, 3
    %p228 = pnand %p226, %p227
    %p229 = pneg %p228
    // Predicated region
    $region9: #{device_fn.2} parent=5 // pred_check
      _
    $region10: #{device_fn.2} parent=5 // pred_check_branch
      %231 = sbr.rel (%p228) target = $region12
    $region11: #{device_fn.2} parent=5 // pred_region
      %s232 = ssub.s32 %s14, 1
      // Predicated region
      $region13: #{device_fn.2} parent=11 // pred_check
        %p233 = pneg %p87
      $region14: #{device_fn.2} parent=11 // pred_check_branch
        %235 = sbr.rel (%p233) target = $region16
      $region15: #{device_fn.2} parent=11 // pred_region
        _
      $region16: #{device_fn.2} parent=11 // pred_fallthru
        _
      // Predicated region
      $region17: #{device_fn.2} parent=11 // pred_check
        %p236 = pneg %p108
      $region18: #{device_fn.2} parent=11 // pred_check_branch
        %238 = sbr.rel (%p236) target = $region20
      $region19: #{device_fn.2} parent=11 // pred_region
        _
      $region20: #{device_fn.2} parent=11 // pred_fallthru
        _
      // Predicated region
      $region21: #{device_fn.2} parent=11 // pred_check
        %p239 = pneg %p129
      $region22: #{device_fn.2} parent=11 // pred_check_branch
        %241 = sbr.rel (%p239) target = $region24
      $region23: #{device_fn.2} parent=11 // pred_region
        _
      $region24: #{device_fn.2} parent=11 // pred_fallthru
        _
      // Predicated region
      $region25: #{device_fn.2} parent=11 // pred_check
        %p242 = pneg %p150
      $region26: #{device_fn.2} parent=11 // pred_check_branch
        %244 = sbr.rel (%p242) target = $region28
      $region27: #{device_fn.2} parent=11 // pred_region
        _
      $region28: #{device_fn.2} parent=11 // pred_fallthru
        _
      // Predicated region
      $region29: #{device_fn.2} parent=11 // pred_check
        %p245 = pneg %p171
      $region30: #{device_fn.2} parent=11 // pred_check_branch
        %247 = sbr.rel (%p245) target = $region32
      $region31: #{device_fn.2} parent=11 // pred_region
        _
      $region32: #{device_fn.2} parent=11 // pred_fallthru
        _
      // Predicated region
      $region33: #{device_fn.2} parent=11 // pred_check
        %p248 = pneg %p192
      $region34: #{device_fn.2} parent=11 // pred_check_branch
        %250 = sbr.rel (%p248) target = $region36
      $region35: #{device_fn.2} parent=11 // pred_region
        _
      $region36: #{device_fn.2} parent=11 // pred_fallthru
        _
    $region12: #{device_fn.2} parent=5 // pred_fallthru
      _
    %p251 = scmp.lt.s32.totalorder %s14, 2
    // Predicated region
    $region37: #{device_fn.2} parent=5 // pred_check
      %p252 = pneg %p251
    $region38: #{device_fn.2} parent=5 // pred_check_branch
      %254 = sbr.rel (%p252) target = $region40
    $region39: #{device_fn.2} parent=5 // pred_region
      // Predicated region
      $region41: #{device_fn.2} parent=39 // pred_check
        %p255 = pneg %p34
      $region42: #{device_fn.2} parent=39 // pred_check_branch
        %257 = sbr.rel (%p255) target = $region44
      $region43: #{device_fn.2} parent=39 // pred_region
        %s258 = smul.u32 2, %s14
        %p259 = scmp.lt.s32.totalorder %s258, 3
        %s260 = scalar_select %p259, %s258, 3
        %s261 = smul.addr %s260, 8
        %s262 = scalar_lea.vmem %s0, %s261
        %s263 = smul.u32 2, %s14
      $region44: #{device_fn.2} parent=39 // pred_fallthru
        _
      // Predicated region
      $region45: #{device_fn.2} parent=39 // pred_check
        %p264 = pneg %p60
      $region46: #{device_fn.2} parent=39 // pred_check_branch
        %266 = sbr.rel (%p264) target = $region48
      $region47: #{device_fn.2} parent=39 // pred_region
        %p267 = scmp.lt.s32.totalorder %s14, 1
        %s268 = scalar_select %p267, %s14, 1
        %s269 = scalar_lea.vmem %s1, %s268
      $region48: #{device_fn.2} parent=39 // pred_fallthru
        _
    $region40: #{device_fn.2} parent=5 // pred_fallthru
      _
    %p270 = scmp.le.s32.totalorder 1, %s14
    %p271 = scmp.lt.s32.totalorder %s14, 3
    %p272 = pnand %p270, %p271
    %p273 = pneg %p272
    // Predicated region
    $region49: #{device_fn.2} parent=5 // pred_check
      _
    $region50: #{device_fn.2} parent=5 // pred_check_branch
      %275 = sbr.rel (%p272) target = $region52
    $region51: #{device_fn.2} parent=5 // pred_region
      %s276 = ssub.s32 %s14, 1
      %s277 = smul.u32 2, %s19
      %p278 = scmp.lt.s32.totalorder %s277, 3
      %s279 = scalar_select %p278, %s277, 3
      %s280 = smul.addr %s279, 8
      %s281 = scalar_lea.vmem %s0, %s280
      %p282 = pneg %p40
      %p283 = pneg %p37
      %p284 = scmp.lt.s32.totalorder %s19, 1
      %s285 = scalar_select %p284, %s19, 1
      %s286 = scalar_lea.vmem %s1, %s285
      %p287 = pneg %p66
      %p288 = pneg %p63
      %p289 = pneg %p87
      %p290 = pneg %p84
      %p291 = pneg %p108
      %p292 = pneg %p105
      %p293 = pneg %p129
      %p294 = pneg %p126
      %p295 = pneg %p150
      %p296 = pneg %p147
      %p297 = pneg %p171
      %p298 = pneg %p168
      %p299 = pneg %p192
      %p300 = pneg %p189
      %p301 = pneg %p218
      %p302 = pneg %p215
      %s303 = smul.u32 2, %s19
      %p304 = scmp.lt.s32.totalorder %s303, 3
      %s305 = scalar_select %p304, %s303, 3
      %s306 = smul.addr %s305, 8
      %s307 = scalar_lea.vmem %s8, %s306
      %s308 = smul.u32 2, %s19
      %p309 = scmp.lt.s32.totalorder %s308, 3
      %s310 = scalar_select %p309, %s308, 3
      %s311 = smul.addr %s310, 8
      %s312 = scalar_lea.vmem %s0, %s311
      %s313 = smul.u32 2, %s19
      %p314 = scmp.lt.s32.totalorder %s19, 1
      %s315 = scalar_select %p314, %s19, 1
      %s316 = scalar_lea.vmem %s1, %s315
      %s317 = smul.u32 2, %s19
      %p318 = scmp.lt.s32.totalorder %s317, 3
      %s319 = scalar_select %p318, %s317, 3
      %s320 = smul.addr %s319, 8
      %s321 = scalar_lea.vmem %s8, %s320
      %s322 = smul.u32 2, %s19
      %v323 = vld [vmem:[%s312] sm:$0xff]
      %v324 = vld [vmem:[%s312 + $0x8] sm:$0xff]
      %v325 = vld [vmem:[%s2] sm:$0xff]
      %v326 = vld [vmem:[%s2 + $0x8] sm:$0xff]
      %v327 = vld [vmem:[%s2 + $0x10] sm:$0xff]
      %v328 = vld [vmem:[%s2 + $0x18] sm:$0xff]
      %v329 = vld [vmem:[%s2 + $0x20] sm:$0xff]
      %v330 = vld [vmem:[%s2 + $0x28] sm:$0xff]
      %v331 = vld [vmem:[%s2 + $0x30] sm:$0xff]
      %v332 = vld [vmem:[%s2 + $0x38] sm:$0xff]
      %v333 = vld [vmem:[%s2 + $0x40] sm:$0xff]
      %v334 = vld [vmem:[%s2 + $0x48] sm:$0xff]
      %v335 = vld [vmem:[%s2 + $0x50] sm:$0xff]
      %v336 = vld [vmem:[%s2 + $0x58] sm:$0xff]
      %v337 = vld [vmem:[%s2 + $0x60] sm:$0xff]
      %v338 = vld [vmem:[%s2 + $0x68] sm:$0xff]
      %v339 = vld [vmem:[%s2 + $0x70] sm:$0xff]
      %v340 = vld [vmem:[%s2 + $0x78] sm:$0xff]
      %v341 = vld [vmem:[%s3] sm:$0x3]
      %v343 = vlaneseq
      %v344 = vshrl.u32 %v343, 7
      %v345 = vsub.s32 0, %v344
      %v346 = vrot.slane %v341, %v345
      %v347 = vlaneseq
      %v348 = vshrl.u32 %v347, 7
      %v349 = vsub.s32 1, %v348
      %v350 = vrot.slane %v341, %v349
      %vm353 = vcmask 523264
      %v355 = vsel %vm353, %v323, 0
      %v358 = vsel %vm353, %v324, 0
      %360 = vmatprep.subr.mxu0 %v326
      %361 = vmatpush1.msra.mxu0 %v325
      %362 = vmatprep.subr.mxu0 %v328
      %363 = vmatpush1.msra.mxu0 %v327
      %364 = vmatprep.subr.mxu0 %v330
      %365 = vmatpush1.msra.mxu0 %v329
      %366 = vmatprep.subr.mxu0 %v332
      %367 = vmatpush1.msra.mxu0 %v331
      %368 = vmatprep.subr.mxu0 %v334
      %369 = vmatpush1.msra.mxu0 %v333
      %370 = vmatprep.subr.mxu0 %v336
      %371 = vmatpush1.msra.mxu0 %v335
      %372 = vmatprep.subr.mxu0 %v338
      %373 = vmatpush1.msra.mxu0 %v337
      %374 = vmatprep.subr.mxu0 %v340
      %375 = vmatpush1.msra.mxu0 %v339
      %376 = vmatprep.subr.mxu0 0.0
      %377 = vmatpush1.msra.mxu0 0.0
      %378 = vmatprep.subr.mxu0 0.0
      %379 = vmatpush1.msra.mxu0 0.0
      %380 = vmatprep.subr.mxu0 0.0
      %381 = vmatpush1.msra.mxu0 0.0
      %382 = vmatprep.subr.mxu0 0.0
      %383 = vmatpush1.msra.mxu0 0.0
      %384 = vmatprep.subr.mxu0 0.0
      %385 = vmatpush1.msra.mxu0 0.0
      %386 = vmatprep.subr.mxu0 0.0
      %387 = vmatpush1.msra.mxu0 0.0
      %388 = vmatprep.subr.mxu0 0.0
      %389 = vmatpush1.msra.mxu0 0.0
      %390 = vmatprep.subr.mxu0 0.0
      %391 = vmatpush1.msra.mxu0 0.0
      %392 = vmatprep.subr.mxu0 0.0
      %393 = vmatpush1.msra.mxu0 0.0
      %394 = vmatprep.subr.mxu0 0.0
      %395 = vmatpush1.msra.mxu0 0.0
      %396 = vmatprep.subr.mxu0 0.0
      %397 = vmatpush1.msra.mxu0 0.0
      %398 = vmatprep.subr.mxu0 0.0
      %399 = vmatpush1.msra.mxu0 0.0
      %400 = vmatprep.subr.mxu0 0.0
      %401 = vmatpush1.msra.mxu0 0.0
      %402 = vmatprep.subr.mxu0 0.0
      %403 = vmatpush1.msra.mxu0 0.0
      %404 = vmatprep.subr.mxu0 0.0
      %405 = vmatpush1.msra.mxu0 0.0
      %406 = vmatprep.subr.mxu0 0.0
      %407 = vmatpush1.msra.mxu0 0.0
      %408 = vmatprep.subr.mxu0 0.0
      %409 = vmatpush1.msra.mxu0 0.0
      %410 = vmatprep.subr.mxu0 0.0
      %411 = vmatpush1.msra.mxu0 0.0
      %412 = vmatprep.subr.mxu0 0.0
      %413 = vmatpush1.msra.mxu0 0.0
      %414 = vmatprep.subr.mxu0 0.0
      %415 = vmatpush1.msra.mxu0 0.0
      %416 = vmatprep.subr.mxu0 0.0
      %417 = vmatpush1.msra.mxu0 0.0
      %418 = vmatprep.subr.mxu0 0.0
      %419 = vmatpush1.msra.mxu0 0.0
      %420 = vmatprep.subr.mxu0 0.0
      %421 = vmatpush1.msra.mxu0 0.0
      %422 = vmatprep.subr.mxu0 0.0
      %423 = vmatpush1.msra.mxu0 0.0
      %424 = vmatprep.mubr.f32.mxu0 0.0
      %425 = vmatmul.mubr.f32.gmra.mrb[0].mxu0 %v355
      %v426 = vpop.f32.mrb[0].mxu0
      %v427 = vadd.f32 %v346, %v426
      %v428 = vpop.f32.mrb[0].mxu0
      %v429 = vadd.f32 %v350, %v428
      %430 = vmatprep.mubr.f32.mxu0 0.0
      %431 = vmatmul.mubr.f32.gmra.mrb[0].mxu0 %v358
      %v432 = vpop.f32.mrb[0].mxu0
      %v433 = vadd.f32 %v346, %v432
      %v434 = vpop.f32.mrb[0].mxu0
      %v435 = vadd.f32 %v350, %v434
      %436 = vdwg.mxu0
      %v437 = vlaneseq
      %v438 = vshrl.u32 %v437, 7
      %v439 = vadd.s32 %v438, 8
      %v440 = vld [vmem:[%s316] sm:$0x1]
      %v441 = vmul.u32 %v440, 8
      %v442 = vlaneseq
      %v443 = vshrl.u32 %v442, 7
      %v444 = vsub.s32 0, %v443
      %v445 = vrot.slane %v441, %v444
      %vm446 = vcmp.ge.s32.totalorder %v438, %v445
      %vm447 = vcmp.ge.s32.totalorder %v439, %v445
      %v448 = vadd.s32 %v441, 8
      %v449 = vlaneseq
      %v450 = vshrl.u32 %v449, 7
      %v451 = vsub.s32 0, %v450
      %v452 = vrot.slane %v448, %v451
      %vm453 = vcmp.lt.s32.totalorder %v438, %v452
      %vm454 = vcmp.lt.s32.totalorder %v439, %v452
      %vm455 = vmand %vm446, %vm453
      %vm456 = vmand %vm447, %vm454
      %v457 = vld [vmem:[%s4] sm:$0xff]
      %v458 = vld [vmem:[%s4 + $0x8] sm:$0xff]
      %v459 = vld [vmem:[%s4 + $0x10] sm:$0xff]
      %v460 = vld [vmem:[%s4 + $0x18] sm:$0xff]
      %v461 = vld [vmem:[%s4 + $0x20] sm:$0xff]
      %v462 = vld [vmem:[%s4 + $0x28] sm:$0xff]
      %v463 = vld [vmem:[%s4 + $0x30] sm:$0xff]
      %v464 = vld [vmem:[%s4 + $0x38] sm:$0xff]
      %467 = vrot.lane.b32.xlu0 %v427, 64
      %v468 = vpop.permute.xlu0 %467
      %469 = vrot.lane.b32.xlu0 %v433, 64
      %v470 = vpop.permute.xlu0 %469
      %vm471 = vcmask 64512
      %v472 = vsel %vm471, %v427, 0
      %v474 = vsel %vm471, %v433, 0
      %v476 = vsel %vm471, %v468, 0
      %v478 = vsel %vm471, %v470, 0
      %480 = vmatprep.subr.mxu0 0.0
      %481 = vmatpush1.xpose.msra.mxu0 %v476
      %482 = vmatprep.subr.mxu0 0.0
      %483 = vmatpush1.xpose.msra.mxu0 %v478
      %484 = vmatprep.subr.mxu0 0.0
      %485 = vmatpush1.xpose.msra.mxu0 0.0
      %486 = vmatprep.subr.mxu0 0.0
      %487 = vmatpush1.xpose.msra.mxu0 0.0
      %488 = vmatprep.subr.mxu0 0.0
      %489 = vmatpush1.xpose.msra.mxu0 0.0
      %490 = vmatprep.subr.mxu0 0.0
      %491 = vmatpush1.xpose.msra.mxu0 0.0
      %492 = vmatprep.subr.mxu0 0.0
      %493 = vmatpush1.xpose.msra.mxu0 0.0
      %494 = vmatprep.subr.mxu0 0.0
      %495 = vmatpush1.xpose.msra.mxu0 0.0
      %496 = vmatprep.subr.mxu0 0.0
      %497 = vmatpush1.xpose.msra.mxu0 0.0
      %498 = vmatprep.subr.mxu0 0.0
      %499 = vmatpush1.xpose.msra.mxu0 0.0
      %500 = vmatprep.subr.mxu0 0.0
      %501 = vmatpush1.xpose.msra.mxu0 0.0
      %502 = vmatprep.subr.mxu0 0.0
      %503 = vmatpush1.xpose.msra.mxu0 0.0
      %504 = vmatprep.subr.mxu0 0.0
      %505 = vmatpush1.xpose.msra.mxu0 0.0
      %506 = vmatprep.subr.mxu0 0.0
      %507 = vmatpush1.xpose.msra.mxu0 0.0
      %508 = vmatprep.subr.mxu0 0.0
      %509 = vmatpush1.xpose.msra.mxu0 0.0
      %510 = vmatprep.subr.mxu0 0.0
      %511 = vmatpush1.xpose.msra.mxu0 0.0
      %512 = vmatprep.subr.mxu0 0.0
      %513 = vmatpush1.xpose.msra.mxu0 0.0
      %514 = vmatprep.subr.mxu0 0.0
      %515 = vmatpush1.xpose.msra.mxu0 0.0
      %516 = vmatprep.subr.mxu0 0.0
      %517 = vmatpush1.xpose.msra.mxu0 0.0
      %518 = vmatprep.subr.mxu0 0.0
      %519 = vmatpush1.xpose.msra.mxu0 0.0
      %520 = vmatprep.subr.mxu0 0.0
      %521 = vmatpush1.xpose.msra.mxu0 0.0
      %522 = vmatprep.subr.mxu0 0.0
      %523 = vmatpush1.xpose.msra.mxu0 0.0
      %524 = vmatprep.subr.mxu0 0.0
      %525 = vmatpush1.xpose.msra.mxu0 0.0
      %526 = vmatprep.subr.mxu0 0.0
      %527 = vmatpush1.xpose.msra.mxu0 0.0
      %528 = vmatprep.subr.mxu0 0.0
      %529 = vmatpush1.xpose.msra.mxu0 0.0
      %530 = vmatprep.subr.mxu0 0.0
      %531 = vmatpush1.xpose.msra.mxu0 0.0
      %532 = vmatprep.subr.mxu0 0.0
      %533 = vmatpush1.xpose.msra.mxu0 0.0
      %534 = vmatprep.subr.mxu0 0.0
      %535 = vmatpush1.xpose.msra.mxu0 0.0
      %536 = vmatprep.subr.mxu0 0.0
      %537 = vmatpush1.xpose.msra.mxu0 0.0
      %538 = vmatprep.subr.mxu0 0.0
      %539 = vmatpush1.xpose.msra.mxu0 0.0
      %540 = vmatprep.subr.mxu0 0.0
      %541 = vmatpush1.xpose.msra.mxu0 0.0
      %542 = vmatprep.subr.mxu0 0.0
      %543 = vmatpush1.xpose.msra.mxu0 0.0
      %544 = vmatprep.mubr.f32.mxu0 0.0
      %545 = vmatmul.mubr.f32.gmra.mrb[0].mxu0 %v472
      %v546 = vpop.f32.mrb[0].mxu0
      %v547 = vadd.f32 0.0, %v546
      %v548 = vpop.f32.mrb[0].mxu0
      %549 = vmatprep.mubr.f32.mxu0 0.0
      %550 = vmatmul.mubr.f32.gmra.mrb[0].mxu0 %v474
      %v551 = vpop.f32.mrb[0].mxu0
      %v552 = vadd.f32 0.0, %v551
      %v553 = vpop.f32.mrb[0].mxu0
      %554 = vdwg.mxu0
      %v555 = vsel %vm455, %v547, -1e+09
      %v556 = vsel %vm456, %v552, -1e+09
      %vm557 = vcmask 130048
      %v558 = vsel %vm557, %v555, -inf
      %559 = vmax.xlane.f32.xlu0 %v558
      %v560 = vpop.xlane.xlu0 %559
      %v561 = vsel %vm557, %v556, -inf
      %562 = vmax.xlane.f32.xlu0 %v561
      %v563 = vpop.xlane.xlu0 %562
      %v564 = vsub.f32 %v555, %v560
      %v565 = vsub.f32 %v556, %v563
      %v566 = vmul.f32 %v564, 1.442695
      %v567 = vpow.pop %v566
      %v568 = vmul.f32 %v565, 1.442695
      %v569 = vpow.pop %v568
      %v570 = vsel %vm557, %v567, 0.0
      %571 = vadd.xlane.f32.xlu0 %v570
      %v572 = vpop.xlane.xlu0 %571
      %v573 = vsel %vm557, %v569, 0.0
      %574 = vadd.xlane.f32.xlu0 %v573
      %v575 = vpop.xlane.xlu0 %574
      %v577 = vsel %vm557, %v567, 0
      %v580 = vsel %vm557, %v569, 0
      %582 = vmatprep.subr.mxu0 0.0
      %583 = vmatpush1.msra.mxu0 %v429
      %584 = vmatprep.subr.mxu0 0.0
      %585 = vmatpush1.msra.mxu0 %v435
      %586 = vmatprep.subr.mxu0 0.0
      %587 = vmatpush1.msra.mxu0 0.0
      %588 = vmatprep.subr.mxu0 0.0
      %589 = vmatpush1.msra.mxu0 0.0
      %590 = vmatprep.subr.mxu0 0.0
      %591 = vmatpush1.msra.mxu0 0.0
      %592 = vmatprep.subr.mxu0 0.0
      %593 = vmatpush1.msra.mxu0 0.0
      %594 = vmatprep.subr.mxu0 0.0
      %595 = vmatpush1.msra.mxu0 0.0
      %596 = vmatprep.subr.mxu0 0.0
      %597 = vmatpush1.msra.mxu0 0.0
      %598 = vmatprep.subr.mxu0 0.0
      %599 = vmatpush1.msra.mxu0 0.0
      %600 = vmatprep.subr.mxu0 0.0
      %601 = vmatpush1.msra.mxu0 0.0
      %602 = vmatprep.subr.mxu0 0.0
      %603 = vmatpush1.msra.mxu0 0.0
      %604 = vmatprep.subr.mxu0 0.0
      %605 = vmatpush1.msra.mxu0 0.0
      %606 = vmatprep.subr.mxu0 0.0
      %607 = vmatpush1.msra.mxu0 0.0
      %608 = vmatprep.subr.mxu0 0.0
      %609 = vmatpush1.msra.mxu0 0.0
      %610 = vmatprep.subr.mxu0 0.0
      %611 = vmatpush1.msra.mxu0 0.0
      %612 = vmatprep.subr.mxu0 0.0
      %613 = vmatpush1.msra.mxu0 0.0
      %614 = vmatprep.subr.mxu0 0.0
      %615 = vmatpush1.msra.mxu0 0.0
      %616 = vmatprep.subr.mxu0 0.0
      %617 = vmatpush1.msra.mxu0 0.0
      %618 = vmatprep.subr.mxu0 0.0
      %619 = vmatpush1.msra.mxu0 0.0
      %620 = vmatprep.subr.mxu0 0.0
      %621 = vmatpush1.msra.mxu0 0.0
      %622 = vmatprep.subr.mxu0 0.0
      %623 = vmatpush1.msra.mxu0 0.0
      %624 = vmatprep.subr.mxu0 0.0
      %625 = vmatpush1.msra.mxu0 0.0
      %626 = vmatprep.subr.mxu0 0.0
      %627 = vmatpush1.msra.mxu0 0.0
      %628 = vmatprep.subr.mxu0 0.0
      %629 = vmatpush1.msra.mxu0 0.0
      %630 = vmatprep.subr.mxu0 0.0
      %631 = vmatpush1.msra.mxu0 0.0
      %632 = vmatprep.subr.mxu0 0.0
      %633 = vmatpush1.msra.mxu0 0.0
      %634 = vmatprep.subr.mxu0 0.0
      %635 = vmatpush1.msra.mxu0 0.0
      %636 = vmatprep.subr.mxu0 0.0
      %637 = vmatpush1.msra.mxu0 0.0
      %638 = vmatprep.subr.mxu0 0.0
      %639 = vmatpush1.msra.mxu0 0.0
      %640 = vmatprep.subr.mxu0 0.0
      %641 = vmatpush1.msra.mxu0 0.0
      %642 = vmatprep.subr.mxu0 0.0
      %643 = vmatpush1.msra.mxu0 0.0
      %644 = vmatprep.subr.mxu0 0.0
      %645 = vmatpush1.msra.mxu0 0.0
      %646 = vmatprep.mubr.f32.mxu0 0.0
      %647 = vmatmul.mubr.f32.gmra.mrb[0].mxu0 %v577
      %v648 = vpop.f32.mrb[0].mxu0
      %v649 = vadd.f32 0.0, %v648
      %v650 = vpop.f32.mrb[0].mxu0
      %651 = vmatprep.mubr.f32.mxu0 0.0
      %652 = vmatmul.mubr.f32.gmra.mrb[0].mxu0 %v580
      %v653 = vpop.f32.mrb[0].mxu0
      %v654 = vadd.f32 0.0, %v653
      %v655 = vpop.f32.mrb[0].mxu0
      %656 = vdwg.mxu0
      %v657 = vrcp.pop %v572
      %v658 = vmul.f32 %v649, %v657
      %v659 = vrcp.pop %v575
      %v660 = vmul.f32 %v654, %v659
      %661 = vrot.lane.b32.xlu0 %v427, 120
      %v662 = vpop.permute.xlu0 %661
      %663 = vrot.lane.b32.xlu0 %v433, 120
      %v664 = vpop.permute.xlu0 %663
      %665 = vrot.lane.b32.xlu0 %v427, 56
      %v666 = vpop.permute.xlu0 %665
      %667 = vrot.lane.b32.xlu0 %v433, 56
      %v668 = vpop.permute.xlu0 %667
      %v669 = vsel %vm471, %v662, 0
      %v671 = vsel %vm471, %v664, 0
      %v673 = vsel %vm471, %v666, 0
      %v675 = vsel %vm471, %v668, 0
      %677 = vmatprep.subr.mxu0 0.0
      %678 = vmatpush1.xpose.msra.mxu0 %v673
      %679 = vmatprep.subr.mxu0 0.0
      %680 = vmatpush1.xpose.msra.mxu0 %v675
      %681 = vmatprep.subr.mxu0 0.0
      %682 = vmatpush1.xpose.msra.mxu0 0.0
      %683 = vmatprep.subr.mxu0 0.0
      %684 = vmatpush1.xpose.msra.mxu0 0.0
      %685 = vmatprep.subr.mxu0 0.0
      %686 = vmatpush1.xpose.msra.mxu0 0.0
      %687 = vmatprep.subr.mxu0 0.0
      %688 = vmatpush1.xpose.msra.mxu0 0.0
      %689 = vmatprep.subr.mxu0 0.0
      %690 = vmatpush1.xpose.msra.mxu0 0.0
      %691 = vmatprep.subr.mxu0 0.0
      %692 = vmatpush1.xpose.msra.mxu0 0.0
      %693 = vmatprep.subr.mxu0 0.0
      %694 = vmatpush1.xpose.msra.mxu0 0.0
      %695 = vmatprep.subr.mxu0 0.0
      %696 = vmatpush1.xpose.msra.mxu0 0.0
      %697 = vmatprep.subr.mxu0 0.0
      %698 = vmatpush1.xpose.msra.mxu0 0.0
      %699 = vmatprep.subr.mxu0 0.0
      %700 = vmatpush1.xpose.msra.mxu0 0.0
      %701 = vmatprep.subr.mxu0 0.0
      %702 = vmatpush1.xpose.msra.mxu0 0.0
      %703 = vmatprep.subr.mxu0 0.0
      %704 = vmatpush1.xpose.msra.mxu0 0.0
      %705 = vmatprep.subr.mxu0 0.0
      %706 = vmatpush1.xpose.msra.mxu0 0.0
      %707 = vmatprep.subr.mxu0 0.0
      %708 = vmatpush1.xpose.msra.mxu0 0.0
      %709 = vmatprep.subr.mxu0 0.0
      %710 = vmatpush1.xpose.msra.mxu0 0.0
      %711 = vmatprep.subr.mxu0 0.0
      %712 = vmatpush1.xpose.msra.mxu0 0.0
      %713 = vmatprep.subr.mxu0 0.0
      %714 = vmatpush1.xpose.msra.mxu0 0.0
      %715 = vmatprep.subr.mxu0 0.0
      %716 = vmatpush1.xpose.msra.mxu0 0.0
      %717 = vmatprep.subr.mxu0 0.0
      %718 = vmatpush1.xpose.msra.mxu0 0.0
      %719 = vmatprep.subr.mxu0 0.0
      %720 = vmatpush1.xpose.msra.mxu0 0.0
      %721 = vmatprep.subr.mxu0 0.0
      %722 = vmatpush1.xpose.msra.mxu0 0.0
      %723 = vmatprep.subr.mxu0 0.0
      %724 = vmatpush1.xpose.msra.mxu0 0.0
      %725 = vmatprep.subr.mxu0 0.0
      %726 = vmatpush1.xpose.msra.mxu0 0.0
      %727 = vmatprep.subr.mxu0 0.0
      %728 = vmatpush1.xpose.msra.mxu0 0.0
      %729 = vmatprep.subr.mxu0 0.0
      %730 = vmatpush1.xpose.msra.mxu0 0.0
      %731 = vmatprep.subr.mxu0 0.0
      %732 = vmatpush1.xpose.msra.mxu0 0.0
      %733 = vmatprep.subr.mxu0 0.0
      %734 = vmatpush1.xpose.msra.mxu0 0.0
      %735 = vmatprep.subr.mxu0 0.0
      %736 = vmatpush1.xpose.msra.mxu0 0.0
      %737 = vmatprep.subr.mxu0 0.0
      %738 = vmatpush1.xpose.msra.mxu0 0.0
      %739 = vmatprep.subr.mxu0 0.0
      %740 = vmatpush1.xpose.msra.mxu0 0.0
      %741 = vmatprep.mubr.f32.mxu0 0.0
      %742 = vmatmul.mubr.f32.gmra.mrb[0].mxu0 %v669
      %v743 = vpop.f32.mrb[0].mxu0
      %v744 = vadd.f32 0.0, %v743
      %v745 = vpop.f32.mrb[0].mxu0
      %746 = vmatprep.mubr.f32.mxu0 0.0
      %747 = vmatmul.mubr.f32.gmra.mrb[0].mxu0 %v671
      %v748 = vpop.f32.mrb[0].mxu0
      %v749 = vadd.f32 0.0, %v748
      %v750 = vpop.f32.mrb[0].mxu0
      %751 = vdwg.mxu0
      %v752 = vsel %vm455, %v744, -1e+09
      %v753 = vsel %vm456, %v749, -1e+09
      %v754 = vsel %vm557, %v752, -inf
      %755 = vmax.xlane.f32.xlu0 %v754
      %v756 = vpop.xlane.xlu0 %755
      %v757 = vsel %vm557, %v753, -inf
      %758 = vmax.xlane.f32.xlu0 %v757
      %v759 = vpop.xlane.xlu0 %758
      %v760 = vsub.f32 %v752, %v756
      %v761 = vsub.f32 %v753, %v759
      %v762 = vmul.f32 %v760, 1.442695
      %v763 = vpow.pop %v762
      %v764 = vmul.f32 %v761, 1.442695
      %v765 = vpow.pop %v764
      %v766 = vsel %vm557, %v763, 0.0
      %767 = vadd.xlane.f32.xlu0 %v766
      %v768 = vpop.xlane.xlu0 %767
      %v769 = vsel %vm557, %v765, 0.0
      %770 = vadd.xlane.f32.xlu0 %v769
      %v771 = vpop.xlane.xlu0 %770
      %774 = vrot.lane.b32.xlu0 %v429, 120
      %v775 = vpop.permute.xlu0 %774
      %776 = vrot.lane.b32.xlu0 %v435, 120
      %v777 = vpop.permute.xlu0 %776
      %v781 = vsel %vm557, %v763, 0
      %v784 = vsel %vm557, %v765, 0
      %786 = vmatprep.subr.mxu0 0.0
      %787 = vmatpush1.msra.mxu0 %v775
      %788 = vmatprep.subr.mxu0 0.0
      %789 = vmatpush1.msra.mxu0 %v777
      %790 = vmatprep.subr.mxu0 0.0
      %791 = vmatpush1.msra.mxu0 0.0
      %792 = vmatprep.subr.mxu0 0.0
      %793 = vmatpush1.msra.mxu0 0.0
      %794 = vmatprep.subr.mxu0 0.0
      %795 = vmatpush1.msra.mxu0 0.0
      %796 = vmatprep.subr.mxu0 0.0
      %797 = vmatpush1.msra.mxu0 0.0
      %798 = vmatprep.subr.mxu0 0.0
      %799 = vmatpush1.msra.mxu0 0.0
      %800 = vmatprep.subr.mxu0 0.0
      %801 = vmatpush1.msra.mxu0 0.0
      %802 = vmatprep.subr.mxu0 0.0
      %803 = vmatpush1.msra.mxu0 0.0
      %804 = vmatprep.subr.mxu0 0.0
      %805 = vmatpush1.msra.mxu0 0.0
      %806 = vmatprep.subr.mxu0 0.0
      %807 = vmatpush1.msra.mxu0 0.0
      %808 = vmatprep.subr.mxu0 0.0
      %809 = vmatpush1.msra.mxu0 0.0
      %810 = vmatprep.subr.mxu0 0.0
      %811 = vmatpush1.msra.mxu0 0.0
      %812 = vmatprep.subr.mxu0 0.0
      %813 = vmatpush1.msra.mxu0 0.0
      %814 = vmatprep.subr.mxu0 0.0
      %815 = vmatpush1.msra.mxu0 0.0
      %816 = vmatprep.subr.mxu0 0.0
      %817 = vmatpush1.msra.mxu0 0.0
      %818 = vmatprep.subr.mxu0 0.0
      %819 = vmatpush1.msra.mxu0 0.0
      %820 = vmatprep.subr.mxu0 0.0
      %821 = vmatpush1.msra.mxu0 0.0
      %822 = vmatprep.subr.mxu0 0.0
      %823 = vmatpush1.msra.mxu0 0.0
      %824 = vmatprep.subr.mxu0 0.0
      %825 = vmatpush1.msra.mxu0 0.0
      %826 = vmatprep.subr.mxu0 0.0
      %827 = vmatpush1.msra.mxu0 0.0
      %828 = vmatprep.subr.mxu0 0.0
      %829 = vmatpush1.msra.mxu0 0.0
      %830 = vmatprep.subr.mxu0 0.0
      %831 = vmatpush1.msra.mxu0 0.0
      %832 = vmatprep.subr.mxu0 0.0
      %833 = vmatpush1.msra.mxu0 0.0
      %834 = vmatprep.subr.mxu0 0.0
      %835 = vmatpush1.msra.mxu0 0.0
      %836 = vmatprep.subr.mxu0 0.0
      %837 = vmatpush1.msra.mxu0 0.0
      %838 = vmatprep.subr.mxu0 0.0
      %839 = vmatpush1.msra.mxu0 0.0
      %840 = vmatprep.subr.mxu0 0.0
      %841 = vmatpush1.msra.mxu0 0.0
      %842 = vmatprep.subr.mxu0 0.0
      %843 = vmatpush1.msra.mxu0 0.0
      %844 = vmatprep.subr.mxu0 0.0
      %845 = vmatpush1.msra.mxu0 0.0
      %846 = vmatprep.subr.mxu0 0.0
      %847 = vmatpush1.msra.mxu0 0.0
      %848 = vmatprep.subr.mxu0 0.0
      %849 = vmatpush1.msra.mxu0 0.0
      %850 = vmatprep.mubr.f32.mxu0 0.0
      %851 = vmatmul.mubr.f32.gmra.mrb[0].mxu0 %v781
      %v852 = vpop.f32.mrb[0].mxu0
      %v853 = vadd.f32 0.0, %v852
      %v854 = vpop.f32.mrb[0].mxu0
      %855 = vmatprep.mubr.f32.mxu0 0.0
      %856 = vmatmul.mubr.f32.gmra.mrb[0].mxu0 %v784
      %v857 = vpop.f32.mrb[0].mxu0
      %v858 = vadd.f32 0.0, %v857
      %v859 = vpop.f32.mrb[0].mxu0
      %860 = vdwg.mxu0
      %v861 = vrcp.pop %v768
      %v862 = vmul.f32 %v853, %v861
      %v863 = vrcp.pop %v771
      %v864 = vmul.f32 %v858, %v863
      %v866 = vsel %vm471, %v862, 0
      %v869 = vsel %vm471, %v864, 0
      %871 = vmatprep.subr.mxu0 0.0
      %872 = vmatpush1.msra.mxu0 %v458
      %873 = vmatprep.subr.mxu0 0.0
      %874 = vmatpush1.msra.mxu0 0.0
      %875 = vmatprep.subr.mxu0 0.0
      %876 = vmatpush1.msra.mxu0 0.0
      %877 = vmatprep.subr.mxu0 0.0
      %878 = vmatpush1.msra.mxu0 0.0
      %879 = vmatprep.subr.mxu0 0.0
      %880 = vmatpush1.msra.mxu0 0.0
      %881 = vmatprep.subr.mxu0 0.0
      %882 = vmatpush1.msra.mxu0 0.0
      %883 = vmatprep.subr.mxu0 0.0
      %884 = vmatpush1.msra.mxu0 0.0
      %885 = vmatprep.subr.mxu0 0.0
      %886 = vmatpush1.msra.mxu0 0.0
      %887 = vmatprep.subr.mxu0 0.0
      %888 = vmatpush1.msra.mxu0 0.0
      %889 = vmatprep.subr.mxu0 0.0
      %890 = vmatpush1.msra.mxu0 0.0
      %891 = vmatprep.subr.mxu0 0.0
      %892 = vmatpush1.msra.mxu0 0.0
      %893 = vmatprep.subr.mxu0 0.0
      %894 = vmatpush1.msra.mxu0 0.0
      %895 = vmatprep.subr.mxu0 0.0
      %896 = vmatpush1.msra.mxu0 0.0
      %897 = vmatprep.subr.mxu0 0.0
      %898 = vmatpush1.msra.mxu0 0.0
      %899 = vmatprep.subr.mxu0 0.0
      %900 = vmatpush1.msra.mxu0 0.0
      %901 = vmatprep.subr.mxu0 0.0
      %902 = vmatpush1.msra.mxu0 0.0
      %903 = vmatprep.subr.mxu0 0.0
      %904 = vmatpush1.msra.mxu0 0.0
      %905 = vmatprep.subr.mxu0 0.0
      %906 = vmatpush1.msra.mxu0 0.0
      %907 = vmatprep.subr.mxu0 0.0
      %908 = vmatpush1.msra.mxu0 0.0
      %909 = vmatprep.subr.mxu0 0.0
      %910 = vmatpush1.msra.mxu0 0.0
      %911 = vmatprep.subr.mxu0 0.0
      %912 = vmatpush1.msra.mxu0 0.0
      %913 = vmatprep.subr.mxu0 0.0
      %914 = vmatpush1.msra.mxu0 0.0
      %915 = vmatprep.subr.mxu0 0.0
      %916 = vmatpush1.msra.mxu0 0.0
      %917 = vmatprep.subr.mxu0 0.0
      %918 = vmatpush1.msra.mxu0 0.0
      %919 = vmatprep.subr.mxu0 0.0
      %920 = vmatpush1.msra.mxu0 0.0
      %921 = vmatprep.subr.mxu0 0.0
      %922 = vmatpush1.msra.mxu0 0.0
      %923 = vmatprep.subr.mxu0 0.0
      %924 = vmatpush1.msra.mxu0 0.0
      %925 = vmatprep.subr.mxu0 0.0
      %926 = vmatpush1.msra.mxu0 0.0
      %927 = vmatprep.subr.mxu0 0.0
      %928 = vmatpush1.msra.mxu0 0.0
      %929 = vmatprep.subr.mxu0 0.0
      %930 = vmatpush1.msra.mxu0 0.0
      %931 = vmatprep.subr.mxu0 0.0
      %932 = vmatpush1.msra.mxu0 0.0
      %933 = vmatprep.subr.mxu0 0.0
      %934 = vmatpush1.msra.mxu0 0.0
      %935 = vmatprep.mubr.f32.mxu0 0.0
      %936 = vmatmul.mubr.f32.gmra.mrb[0].mxu0 %v866
      %v937 = vpop.f32.mrb[0].mxu0
      %v938 = vadd.f32 0.0, %v937
      %v939 = vpop.f32.mrb[0].mxu0
      %940 = vmatprep.mubr.f32.mxu0 0.0
      %941 = vmatmul.mubr.f32.gmra.mrb[0].mxu0 %v869
      %v942 = vpop.f32.mrb[0].mxu0
      %v943 = vadd.f32 0.0, %v942
      %v944 = vpop.f32.mrb[0].mxu0
      %945 = vdwg.mxu0
      %v947 = vsel %vm471, %v658, 0
      %v950 = vsel %vm471, %v660, 0
      %952 = vmatprep.subr.mxu0 0.0
      %953 = vmatpush1.msra.mxu0 %v457
      %954 = vmatprep.subr.mxu0 0.0
      %955 = vmatpush1.msra.mxu0 0.0
      %956 = vmatprep.subr.mxu0 0.0
      %957 = vmatpush1.msra.mxu0 0.0
      %958 = vmatprep.subr.mxu0 0.0
      %959 = vmatpush1.msra.mxu0 0.0
      %960 = vmatprep.subr.mxu0 0.0
      %961 = vmatpush1.msra.mxu0 0.0
      %962 = vmatprep.subr.mxu0 0.0
      %963 = vmatpush1.msra.mxu0 0.0
      %964 = vmatprep.subr.mxu0 0.0
      %965 = vmatpush1.msra.mxu0 0.0
      %966 = vmatprep.subr.mxu0 0.0
      %967 = vmatpush1.msra.mxu0 0.0
      %968 = vmatprep.subr.mxu0 0.0
      %969 = vmatpush1.msra.mxu0 0.0
      %970 = vmatprep.subr.mxu0 0.0
      %971 = vmatpush1.msra.mxu0 0.0
      %972 = vmatprep.subr.mxu0 0.0
      %973 = vmatpush1.msra.mxu0 0.0
      %974 = vmatprep.subr.mxu0 0.0
      %975 = vmatpush1.msra.mxu0 0.0
      %976 = vmatprep.subr.mxu0 0.0
      %977 = vmatpush1.msra.mxu0 0.0
      %978 = vmatprep.subr.mxu0 0.0
      %979 = vmatpush1.msra.mxu0 0.0
      %980 = vmatprep.subr.mxu0 0.0
      %981 = vmatpush1.msra.mxu0 0.0
      %982 = vmatprep.subr.mxu0 0.0
      %983 = vmatpush1.msra.mxu0 0.0
      %984 = vmatprep.subr.mxu0 0.0
      %985 = vmatpush1.msra.mxu0 0.0
      %986 = vmatprep.subr.mxu0 0.0
      %987 = vmatpush1.msra.mxu0 0.0
      %988 = vmatprep.subr.mxu0 0.0
      %989 = vmatpush1.msra.mxu0 0.0
      %990 = vmatprep.subr.mxu0 0.0
      %991 = vmatpush1.msra.mxu0 0.0
      %992 = vmatprep.subr.mxu0 0.0
      %993 = vmatpush1.msra.mxu0 0.0
      %994 = vmatprep.subr.mxu0 0.0
      %995 = vmatpush1.msra.mxu0 0.0
      %996 = vmatprep.subr.mxu0 0.0
      %997 = vmatpush1.msra.mxu0 0.0
      %998 = vmatprep.subr.mxu0 0.0
      %999 = vmatpush1.msra.mxu0 0.0
      %1000 = vmatprep.subr.mxu0 0.0
      %1001 = vmatpush1.msra.mxu0 0.0
      %1002 = vmatprep.subr.mxu0 0.0
      %1003 = vmatpush1.msra.mxu0 0.0
      %1004 = vmatprep.subr.mxu0 0.0
      %1005 = vmatpush1.msra.mxu0 0.0
      %1006 = vmatprep.subr.mxu0 0.0
      %1007 = vmatpush1.msra.mxu0 0.0
      %1008 = vmatprep.subr.mxu0 0.0
      %1009 = vmatpush1.msra.mxu0 0.0
      %1010 = vmatprep.subr.mxu0 0.0
      %1011 = vmatpush1.msra.mxu0 0.0
      %1012 = vmatprep.subr.mxu0 0.0
      %1013 = vmatpush1.msra.mxu0 0.0
      %1014 = vmatprep.subr.mxu0 0.0
      %1015 = vmatpush1.msra.mxu0 0.0
      %1016 = vmatprep.mubr.f32.mxu0 0.0
      %1017 = vmatmul.mubr.f32.gmra.mrb[0].mxu0 %v947
      %v1018 = vpop.f32.mrb[0].mxu0
      %v1019 = vadd.f32 %v938, %v1018
      %v1020 = vpop.f32.mrb[0].mxu0
      %1021 = vmatprep.mubr.f32.mxu0 0.0
      %1022 = vmatmul.mubr.f32.gmra.mrb[0].mxu0 %v950
      %v1023 = vpop.f32.mrb[0].mxu0
      %v1024 = vadd.f32 %v943, %v1023
      %v1025 = vpop.f32.mrb[0].mxu0
      %1026 = vdwg.mxu0
      %1027 = vrot.lane.b32.xlu0 %v427, 112
      %v1028 = vpop.permute.xlu0 %1027
      %1029 = vrot.lane.b32.xlu0 %v433, 112
      %v1030 = vpop.permute.xlu0 %1029
      %1031 = vrot.lane.b32.xlu0 %v427, 48
      %v1032 = vpop.permute.xlu0 %1031
      %1033 = vrot.lane.b32.xlu0 %v433, 48
      %v1034 = vpop.permute.xlu0 %1033
      %v1035 = vsel %vm471, %v1028, 0
      %v1037 = vsel %vm471, %v1030, 0
      %v1039 = vsel %vm471, %v1032, 0
      %v1041 = vsel %vm471, %v1034, 0
      %1043 = vmatprep.subr.mxu0 0.0
      %1044 = vmatpush1.xpose.msra.mxu0 %v1039
      %1045 = vmatprep.subr.mxu0 0.0
      %1046 = vmatpush1.xpose.msra.mxu0 %v1041
      %1047 = vmatprep.subr.mxu0 0.0
      %1048 = vmatpush1.xpose.msra.mxu0 0.0
      %1049 = vmatprep.subr.mxu0 0.0
      %1050 = vmatpush1.xpose.msra.mxu0 0.0
      %1051 = vmatprep.subr.mxu0 0.0
      %1052 = vmatpush1.xpose.msra.mxu0 0.0
      %1053 = vmatprep.subr.mxu0 0.0
      %1054 = vmatpush1.xpose.msra.mxu0 0.0
      %1055 = vmatprep.subr.mxu0 0.0
      %1056 = vmatpush1.xpose.msra.mxu0 0.0
      %1057 = vmatprep.subr.mxu0 0.0
      %1058 = vmatpush1.xpose.msra.mxu0 0.0
      %1059 = vmatprep.subr.mxu0 0.0
      %1060 = vmatpush1.xpose.msra.mxu0 0.0
      %1061 = vmatprep.subr.mxu0 0.0
      %1062 = vmatpush1.xpose.msra.mxu0 0.0
      %1063 = vmatprep.subr.mxu0 0.0
      %1064 = vmatpush1.xpose.msra.mxu0 0.0
      %1065 = vmatprep.subr.mxu0 0.0
      %1066 = vmatpush1.xpose.msra.mxu0 0.0
      %1067 = vmatprep.subr.mxu0 0.0
      %1068 = vmatpush1.xpose.msra.mxu0 0.0
      %1069 = vmatprep.subr.mxu0 0.0
      %1070 = vmatpush1.xpose.msra.mxu0 0.0
      %1071 = vmatprep.subr.mxu0 0.0
      %1072 = vmatpush1.xpose.msra.mxu0 0.0
      %1073 = vmatprep.subr.mxu0 0.0
      %1074 = vmatpush1.xpose.msra.mxu0 0.0
      %1075 = vmatprep.subr.mxu0 0.0
      %1076 = vmatpush1.xpose.msra.mxu0 0.0
      %1077 = vmatprep.subr.mxu0 0.0
      %1078 = vmatpush1.xpose.msra.mxu0 0.0
      %1079 = vmatprep.subr.mxu0 0.0
      %1080 = vmatpush1.xpose.msra.mxu0 0.0
      %1081 = vmatprep.subr.mxu0 0.0
      %1082 = vmatpush1.xpose.msra.mxu0 0.0
      %1083 = vmatprep.subr.mxu0 0.0
      %1084 = vmatpush1.xpose.msra.mxu0 0.0
      %1085 = vmatprep.subr.mxu0 0.0
      %1086 = vmatpush1.xpose.msra.mxu0 0.0
      %1087 = vmatprep.subr.mxu0 0.0
      %1088 = vmatpush1.xpose.msra.mxu0 0.0
      %1089 = vmatprep.subr.mxu0 0.0
      %1090 = vmatpush1.xpose.msra.mxu0 0.0
      %1091 = vmatprep.subr.mxu0 0.0
      %1092 = vmatpush1.xpose.msra.mxu0 0.0
      %1093 = vmatprep.subr.mxu0 0.0
      %1094 = vmatpush1.xpose.msra.mxu0 0.0
      %1095 = vmatprep.subr.mxu0 0.0
      %1096 = vmatpush1.xpose.msra.mxu0 0.0
      %1097 = vmatprep.subr.mxu0 0.0
      %1098 = vmatpush1.xpose.msra.mxu0 0.0
      %1099 = vmatprep.subr.mxu0 0.0
      %1100 = vmatpush1.xpose.msra.mxu0 0.0
      %1101 = vmatprep.subr.mxu0 0.0
      %1102 = vmatpush1.xpose.msra.mxu0 0.0
      %1103 = vmatprep.subr.mxu0 0.0
      %1104 = vmatpush1.xpose.msra.mxu0 0.0
      %1105 = vmatprep.subr.mxu0 0.0
      %1106 = vmatpush1.xpose.msra.mxu0 0.0
      %1107 = vmatprep.mubr.f32.mxu0 0.0
      %1108 = vmatmul.mubr.f32.gmra.mrb[0].mxu0 %v1035
      %v1109 = vpop.f32.mrb[0].mxu0
      %v1110 = vadd.f32 0.0, %v1109
      %v1111 = vpop.f32.mrb[0].mxu0
      %1112 = vmatprep.mubr.f32.mxu0 0.0
      %1113 = vmatmul.mubr.f32.gmra.mrb[0].mxu0 %v1037
      %v1114 = vpop.f32.mrb[0].mxu0
      %v1115 = vadd.f32 0.0, %v1114
      %v1116 = vpop.f32.mrb[0].mxu0
      %1117 = vdwg.mxu0
      %v1118 = vsel %vm455, %v1110, -1e+09
      %v1119 = vsel %vm456, %v1115, -1e+09
      %v1120 = vsel %vm557, %v1118, -inf
      %1121 = vmax.xlane.f32.xlu0 %v1120
      %v1122 = vpop.xlane.xlu0 %1121
      %v1123 = vsel %vm557, %v1119, -inf
      %1124 = vmax.xlane.f32.xlu0 %v1123
      %v1125 = vpop.xlane.xlu0 %1124
      %v1126 = vsub.f32 %v1118, %v1122
      %v1127 = vsub.f32 %v1119, %v1125
      %v1128 = vmul.f32 %v1126, 1.442695
      %v1129 = vpow.pop %v1128
      %v1130 = vmul.f32 %v1127, 1.442695
      %v1131 = vpow.pop %v1130
      %v1132 = vsel %vm557, %v1129, 0.0
      %1133 = vadd.xlane.f32.xlu0 %v1132
      %v1134 = vpop.xlane.xlu0 %1133
      %v1135 = vsel %vm557, %v1131, 0.0
      %1136 = vadd.xlane.f32.xlu0 %v1135
      %v1137 = vpop.xlane.xlu0 %1136
      %1138 = vrot.lane.b32.xlu0 %v429, 112
      %v1139 = vpop.permute.xlu0 %1138
      %1140 = vrot.lane.b32.xlu0 %v435, 112
      %v1141 = vpop.permute.xlu0 %1140
      %v1145 = vsel %vm557, %v1129, 0
      %v1148 = vsel %vm557, %v1131, 0
      %1150 = vmatprep.subr.mxu0 0.0
      %1151 = vmatpush1.msra.mxu0 %v1139
      %1152 = vmatprep.subr.mxu0 0.0
      %1153 = vmatpush1.msra.mxu0 %v1141
      %1154 = vmatprep.subr.mxu0 0.0
      %1155 = vmatpush1.msra.mxu0 0.0
      %1156 = vmatprep.subr.mxu0 0.0
      %1157 = vmatpush1.msra.mxu0 0.0
      %1158 = vmatprep.subr.mxu0 0.0
      %1159 = vmatpush1.msra.mxu0 0.0
      %1160 = vmatprep.subr.mxu0 0.0
      %1161 = vmatpush1.msra.mxu0 0.0
      %1162 = vmatprep.subr.mxu0 0.0
      %1163 = vmatpush1.msra.mxu0 0.0
      %1164 = vmatprep.subr.mxu0 0.0
      %1165 = vmatpush1.msra.mxu0 0.0
      %1166 = vmatprep.subr.mxu0 0.0
      %1167 = vmatpush1.msra.mxu0 0.0
      %1168 = vmatprep.subr.mxu0 0.0
      %1169 = vmatpush1.msra.mxu0 0.0
      %1170 = vmatprep.subr.mxu0 0.0
      %1171 = vmatpush1.msra.mxu0 0.0
      %1172 = vmatprep.subr.mxu0 0.0
      %1173 = vmatpush1.msra.mxu0 0.0
      %1174 = vmatprep.subr.mxu0 0.0
      %1175 = vmatpush1.msra.mxu0 0.0
      %1176 = vmatprep.subr.mxu0 0.0
      %1177 = vmatpush1.msra.mxu0 0.0
      %1178 = vmatprep.subr.mxu0 0.0
      %1179 = vmatpush1.msra.mxu0 0.0
      %1180 = vmatprep.subr.mxu0 0.0
      %1181 = vmatpush1.msra.mxu0 0.0
      %1182 = vmatprep.subr.mxu0 0.0
      %1183 = vmatpush1.msra.mxu0 0.0
      %1184 = vmatprep.subr.mxu0 0.0
      %1185 = vmatpush1.msra.mxu0 0.0
      %1186 = vmatprep.subr.mxu0 0.0
      %1187 = vmatpush1.msra.mxu0 0.0
      %1188 = vmatprep.subr.mxu0 0.0
      %1189 = vmatpush1.msra.mxu0 0.0
      %1190 = vmatprep.subr.mxu0 0.0
      %1191 = vmatpush1.msra.mxu0 0.0
      %1192 = vmatprep.subr.mxu0 0.0
      %1193 = vmatpush1.msra.mxu0 0.0
      %1194 = vmatprep.subr.mxu0 0.0
      %1195 = vmatpush1.msra.mxu0 0.0
      %1196 = vmatprep.subr.mxu0 0.0
      %1197 = vmatpush1.msra.mxu0 0.0
      %1198 = vmatprep.subr.mxu0 0.0
      %1199 = vmatpush1.msra.mxu0 0.0
      %1200 = vmatprep.subr.mxu0 0.0
      %1201 = vmatpush1.msra.mxu0 0.0
      %1202 = vmatprep.subr.mxu0 0.0
      %1203 = vmatpush1.msra.mxu0 0.0
      %1204 = vmatprep.subr.mxu0 0.0
      %1205 = vmatpush1.msra.mxu0 0.0
      %1206 = vmatprep.subr.mxu0 0.0
      %1207 = vmatpush1.msra.mxu0 0.0
      %1208 = vmatprep.subr.mxu0 0.0
      %1209 = vmatpush1.msra.mxu0 0.0
      %1210 = vmatprep.subr.mxu0 0.0
      %1211 = vmatpush1.msra.mxu0 0.0
      %1212 = vmatprep.subr.mxu0 0.0
      %1213 = vmatpush1.msra.mxu0 0.0
      %1214 = vmatprep.mubr.f32.mxu0 0.0
      %1215 = vmatmul.mubr.f32.gmra.mrb[0].mxu0 %v1145
      %v1216 = vpop.f32.mrb[0].mxu0
      %v1217 = vadd.f32 0.0, %v1216
      %v1218 = vpop.f32.mrb[0].mxu0
      %1219 = vmatprep.mubr.f32.mxu0 0.0
      %1220 = vmatmul.mubr.f32.gmra.mrb[0].mxu0 %v1148
      %v1221 = vpop.f32.mrb[0].mxu0
      %v1222 = vadd.f32 0.0, %v1221
      %v1223 = vpop.f32.mrb[0].mxu0
      %1224 = vdwg.mxu0
      %v1225 = vrcp.pop %v1134
      %v1226 = vmul.f32 %v1217, %v1225
      %v1227 = vrcp.pop %v1137
      %v1228 = vmul.f32 %v1222, %v1227
      %v1230 = vsel %vm471, %v1226, 0
      %v1233 = vsel %vm471, %v1228, 0
      %1235 = vmatprep.subr.mxu0 0.0
      %1236 = vmatpush1.msra.mxu0 %v459
      %1237 = vmatprep.subr.mxu0 0.0
      %1238 = vmatpush1.msra.mxu0 0.0
      %1239 = vmatprep.subr.mxu0 0.0
      %1240 = vmatpush1.msra.mxu0 0.0
      %1241 = vmatprep.subr.mxu0 0.0
      %1242 = vmatpush1.msra.mxu0 0.0
      %1243 = vmatprep.subr.mxu0 0.0
      %1244 = vmatpush1.msra.mxu0 0.0
      %1245 = vmatprep.subr.mxu0 0.0
      %1246 = vmatpush1.msra.mxu0 0.0
      %1247 = vmatprep.subr.mxu0 0.0
      %1248 = vmatpush1.msra.mxu0 0.0
      %1249 = vmatprep.subr.mxu0 0.0
      %1250 = vmatpush1.msra.mxu0 0.0
      %1251 = vmatprep.subr.mxu0 0.0
      %1252 = vmatpush1.msra.mxu0 0.0
      %1253 = vmatprep.subr.mxu0 0.0
      %1254 = vmatpush1.msra.mxu0 0.0
      %1255 = vmatprep.subr.mxu0 0.0
      %1256 = vmatpush1.msra.mxu0 0.0
      %1257 = vmatprep.subr.mxu0 0.0
      %1258 = vmatpush1.msra.mxu0 0.0
      %1259 = vmatprep.subr.mxu0 0.0
      %1260 = vmatpush1.msra.mxu0 0.0
      %1261 = vmatprep.subr.mxu0 0.0
      %1262 = vmatpush1.msra.mxu0 0.0
      %1263 = vmatprep.subr.mxu0 0.0
      %1264 = vmatpush1.msra.mxu0 0.0
      %1265 = vmatprep.subr.mxu0 0.0
      %1266 = vmatpush1.msra.mxu0 0.0
      %1267 = vmatprep.subr.mxu0 0.0
      %1268 = vmatpush1.msra.mxu0 0.0
      %1269 = vmatprep.subr.mxu0 0.0
      %1270 = vmatpush1.msra.mxu0 0.0
      %1271 = vmatprep.subr.mxu0 0.0
      %1272 = vmatpush1.msra.mxu0 0.0
      %1273 = vmatprep.subr.mxu0 0.0
      %1274 = vmatpush1.msra.mxu0 0.0
      %1275 = vmatprep.subr.mxu0 0.0
      %1276 = vmatpush1.msra.mxu0 0.0
      %1277 = vmatprep.subr.mxu0 0.0
      %1278 = vmatpush1.msra.mxu0 0.0
      %1279 = vmatprep.subr.mxu0 0.0
      %1280 = vmatpush1.msra.mxu0 0.0
      %1281 = vmatprep.subr.mxu0 0.0
      %1282 = vmatpush1.msra.mxu0 0.0
      %1283 = vmatprep.subr.mxu0 0.0
      %1284 = vmatpush1.msra.mxu0 0.0
      %1285 = vmatprep.subr.mxu0 0.0
      %1286 = vmatpush1.msra.mxu0 0.0
      %1287 = vmatprep.subr.mxu0 0.0
      %1288 = vmatpush1.msra.mxu0 0.0
      %1289 = vmatprep.subr.mxu0 0.0
      %1290 = vmatpush1.msra.mxu0 0.0
      %1291 = vmatprep.subr.mxu0 0.0
      %1292 = vmatpush1.msra.mxu0 0.0
      %1293 = vmatprep.subr.mxu0 0.0
      %1294 = vmatpush1.msra.mxu0 0.0
      %1295 = vmatprep.subr.mxu0 0.0
      %1296 = vmatpush1.msra.mxu0 0.0
      %1297 = vmatprep.subr.mxu0 0.0
      %1298 = vmatpush1.msra.mxu0 0.0
      %1299 = vmatprep.mubr.f32.mxu0 0.0
      %1300 = vmatmul.mubr.f32.gmra.mrb[0].mxu0 %v1230
      %v1301 = vpop.f32.mrb[0].mxu0
      %v1302 = vadd.f32 0.0, %v1301
      %v1303 = vpop.f32.mrb[0].mxu0
      %1304 = vmatprep.mubr.f32.mxu0 0.0
      %1305 = vmatmul.mubr.f32.gmra.mrb[0].mxu0 %v1233
      %v1306 = vpop.f32.mrb[0].mxu0
      %v1307 = vadd.f32 0.0, %v1306
      %v1308 = vpop.f32.mrb[0].mxu0
      %1309 = vdwg.mxu0
      %v1310 = vadd.f32 %v1019, %v1302
      %v1311 = vadd.f32 %v1024, %v1307
      %1312 = vrot.lane.b32.xlu0 %v427, 104
      %v1313 = vpop.permute.xlu0 %1312
      %1314 = vrot.lane.b32.xlu0 %v433, 104
      %v1315 = vpop.permute.xlu0 %1314
      %1316 = vrot.lane.b32.xlu0 %v427, 40
      %v1317 = vpop.permute.xlu0 %1316
      %1318 = vrot.lane.b32.xlu0 %v433, 40
      %v1319 = vpop.permute.xlu0 %1318
      %v1320 = vsel %vm471, %v1313, 0
      %v1322 = vsel %vm471, %v1315, 0
      %v1324 = vsel %vm471, %v1317, 0
      %v1326 = vsel %vm471, %v1319, 0
      %1328 = vmatprep.subr.mxu0 0.0
      %1329 = vmatpush1.xpose.msra.mxu0 %v1324
      %1330 = vmatprep.subr.mxu0 0.0
      %1331 = vmatpush1.xpose.msra.mxu0 %v1326
      %1332 = vmatprep.subr.mxu0 0.0
      %1333 = vmatpush1.xpose.msra.mxu0 0.0
      %1334 = vmatprep.subr.mxu0 0.0
      %1335 = vmatpush1.xpose.msra.mxu0 0.0
      %1336 = vmatprep.subr.mxu0 0.0
      %1337 = vmatpush1.xpose.msra.mxu0 0.0
      %1338 = vmatprep.subr.mxu0 0.0
      %1339 = vmatpush1.xpose.msra.mxu0 0.0
      %1340 = vmatprep.subr.mxu0 0.0
      %1341 = vmatpush1.xpose.msra.mxu0 0.0
      %1342 = vmatprep.subr.mxu0 0.0
      %1343 = vmatpush1.xpose.msra.mxu0 0.0
      %1344 = vmatprep.subr.mxu0 0.0
      %1345 = vmatpush1.xpose.msra.mxu0 0.0
      %1346 = vmatprep.subr.mxu0 0.0
      %1347 = vmatpush1.xpose.msra.mxu0 0.0
      %1348 = vmatprep.subr.mxu0 0.0
      %1349 = vmatpush1.xpose.msra.mxu0 0.0
      %1350 = vmatprep.subr.mxu0 0.0
      %1351 = vmatpush1.xpose.msra.mxu0 0.0
      %1352 = vmatprep.subr.mxu0 0.0
      %1353 = vmatpush1.xpose.msra.mxu0 0.0
      %1354 = vmatprep.subr.mxu0 0.0
      %1355 = vmatpush1.xpose.msra.mxu0 0.0
      %1356 = vmatprep.subr.mxu0 0.0
      %1357 = vmatpush1.xpose.msra.mxu0 0.0
      %1358 = vmatprep.subr.mxu0 0.0
      %1359 = vmatpush1.xpose.msra.mxu0 0.0
      %1360 = vmatprep.subr.mxu0 0.0
      %1361 = vmatpush1.xpose.msra.mxu0 0.0
      %1362 = vmatprep.subr.mxu0 0.0
      %1363 = vmatpush1.xpose.msra.mxu0 0.0
      %1364 = vmatprep.subr.mxu0 0.0
      %1365 = vmatpush1.xpose.msra.mxu0 0.0
      %1366 = vmatprep.subr.mxu0 0.0
      %1367 = vmatpush1.xpose.msra.mxu0 0.0
      %1368 = vmatprep.subr.mxu0 0.0
      %1369 = vmatpush1.xpose.msra.mxu0 0.0
      %1370 = vmatprep.subr.mxu0 0.0
      %1371 = vmatpush1.xpose.msra.mxu0 0.0
      %1372 = vmatprep.subr.mxu0 0.0
      %1373 = vmatpush1.xpose.msra.mxu0 0.0
      %1374 = vmatprep.subr.mxu0 0.0
      %1375 = vmatpush1.xpose.msra.mxu0 0.0
      %1376 = vmatprep.subr.mxu0 0.0
      %1377 = vmatpush1.xpose.msra.mxu0 0.0
      %1378 = vmatprep.subr.mxu0 0.0
      %1379 = vmatpush1.xpose.msra.mxu0 0.0
      %1380 = vmatprep.subr.mxu0 0.0
      %1381 = vmatpush1.xpose.msra.mxu0 0.0
      %1382 = vmatprep.subr.mxu0 0.0
      %1383 = vmatpush1.xpose.msra.mxu0 0.0
      %1384 = vmatprep.subr.mxu0 0.0
      %1385 = vmatpush1.xpose.msra.mxu0 0.0
      %1386 = vmatprep.subr.mxu0 0.0
      %1387 = vmatpush1.xpose.msra.mxu0 0.0
      %1388 = vmatprep.subr.mxu0 0.0
      %1389 = vmatpush1.xpose.msra.mxu0 0.0
      %1390 = vmatprep.subr.mxu0 0.0
      %1391 = vmatpush1.xpose.msra.mxu0 0.0
      %1392 = vmatprep.mubr.f32.mxu0 0.0
      %1393 = vmatmul.mubr.f32.gmra.mrb[0].mxu0 %v1320
      %v1394 = vpop.f32.mrb[0].mxu0
      %v1395 = vadd.f32 0.0, %v1394
      %v1396 = vpop.f32.mrb[0].mxu0
      %1397 = vmatprep.mubr.f32.mxu0 0.0
      %1398 = vmatmul.mubr.f32.gmra.mrb[0].mxu0 %v1322
      %v1399 = vpop.f32.mrb[0].mxu0
      %v1400 = vadd.f32 0.0, %v1399
      %v1401 = vpop.f32.mrb[0].mxu0
      %1402 = vdwg.mxu0
      %v1403 = vsel %vm455, %v1395, -1e+09
      %v1404 = vsel %vm456, %v1400, -1e+09
      %v1405 = vsel %vm557, %v1403, -inf
      %1406 = vmax.xlane.f32.xlu0 %v1405
      %v1407 = vpop.xlane.xlu0 %1406
      %v1408 = vsel %vm557, %v1404, -inf
      %1409 = vmax.xlane.f32.xlu0 %v1408
      %v1410 = vpop.xlane.xlu0 %1409
      %v1411 = vsub.f32 %v1403, %v1407
      %v1412 = vsub.f32 %v1404, %v1410
      %v1413 = vmul.f32 %v1411, 1.442695
      %v1414 = vpow.pop %v1413
      %v1415 = vmul.f32 %v1412, 1.442695
      %v1416 = vpow.pop %v1415
      %v1417 = vsel %vm557, %v1414, 0.0
      %1418 = vadd.xlane.f32.xlu0 %v1417
      %v1419 = vpop.xlane.xlu0 %1418
      %v1420 = vsel %vm557, %v1416, 0.0
      %1421 = vadd.xlane.f32.xlu0 %v1420
      %v1422 = vpop.xlane.xlu0 %1421
      %1423 = vrot.lane.b32.xlu0 %v429, 104
      %v1424 = vpop.permute.xlu0 %1423
      %1425 = vrot.lane.b32.xlu0 %v435, 104
      %v1426 = vpop.permute.xlu0 %1425
      %v1430 = vsel %vm557, %v1414, 0
      %v1433 = vsel %vm557, %v1416, 0
      %1435 = vmatprep.subr.mxu0 0.0
      %1436 = vmatpush1.msra.mxu0 %v1424
      %1437 = vmatprep.subr.mxu0 0.0
      %1438 = vmatpush1.msra.mxu0 %v1426
      %1439 = vmatprep.subr.mxu0 0.0
      %1440 = vmatpush1.msra.mxu0 0.0
      %1441 = vmatprep.subr.mxu0 0.0
      %1442 = vmatpush1.msra.mxu0 0.0
      %1443 = vmatprep.subr.mxu0 0.0
      %1444 = vmatpush1.msra.mxu0 0.0
      %1445 = vmatprep.subr.mxu0 0.0
      %1446 = vmatpush1.msra.mxu0 0.0
      %1447 = vmatprep.subr.mxu0 0.0
      %1448 = vmatpush1.msra.mxu0 0.0
      %1449 = vmatprep.subr.mxu0 0.0
      %1450 = vmatpush1.msra.mxu0 0.0
      %1451 = vmatprep.subr.mxu0 0.0
      %1452 = vmatpush1.msra.mxu0 0.0
      %1453 = vmatprep.subr.mxu0 0.0
      %1454 = vmatpush1.msra.mxu0 0.0
      %1455 = vmatprep.subr.mxu0 0.0
      %1456 = vmatpush1.msra.mxu0 0.0
      %1457 = vmatprep.subr.mxu0 0.0
      %1458 = vmatpush1.msra.mxu0 0.0
      %1459 = vmatprep.subr.mxu0 0.0
      %1460 = vmatpush1.msra.mxu0 0.0
      %1461 = vmatprep.subr.mxu0 0.0
      %1462 = vmatpush1.msra.mxu0 0.0
      %1463 = vmatprep.subr.mxu0 0.0
      %1464 = vmatpush1.msra.mxu0 0.0
      %1465 = vmatprep.subr.mxu0 0.0
      %1466 = vmatpush1.msra.mxu0 0.0
      %1467 = vmatprep.subr.mxu0 0.0
      %1468 = vmatpush1.msra.mxu0 0.0
      %1469 = vmatprep.subr.mxu0 0.0
      %1470 = vmatpush1.msra.mxu0 0.0
      %1471 = vmatprep.subr.mxu0 0.0
      %1472 = vmatpush1.msra.mxu0 0.0
      %1473 = vmatprep.subr.mxu0 0.0
      %1474 = vmatpush1.msra.mxu0 0.0
      %1475 = vmatprep.subr.mxu0 0.0
      %1476 = vmatpush1.msra.mxu0 0.0
      %1477 = vmatprep.subr.mxu0 0.0
      %1478 = vmatpush1.msra.mxu0 0.0
      %1479 = vmatprep.subr.mxu0 0.0
      %1480 = vmatpush1.msra.mxu0 0.0
      %1481 = vmatprep.subr.mxu0 0.0
      %1482 = vmatpush1.msra.mxu0 0.0
      %1483 = vmatprep.subr.mxu0 0.0
      %1484 = vmatpush1.msra.mxu0 0.0
      %1485 = vmatprep.subr.mxu0 0.0
      %1486 = vmatpush1.msra.mxu0 0.0
      %1487 = vmatprep.subr.mxu0 0.0
      %1488 = vmatpush1.msra.mxu0 0.0
      %1489 = vmatprep.subr.mxu0 0.0
      %1490 = vmatpush1.msra.mxu0 0.0
      %1491 = vmatprep.subr.mxu0 0.0
      %1492 = vmatpush1.msra.mxu0 0.0
      %1493 = vmatprep.subr.mxu0 0.0
      %1494 = vmatpush1.msra.mxu0 0.0
      %1495 = vmatprep.subr.mxu0 0.0
      %1496 = vmatpush1.msra.mxu0 0.0
      %1497 = vmatprep.subr.mxu0 0.0
      %1498 = vmatpush1.msra.mxu0 0.0
      %1499 = vmatprep.mubr.f32.mxu0 0.0
      %1500 = vmatmul.mubr.f32.gmra.mrb[0].mxu0 %v1430
      %v1501 = vpop.f32.mrb[0].mxu0
      %v1502 = vadd.f32 0.0, %v1501
      %v1503 = vpop.f32.mrb[0].mxu0
      %1504 = vmatprep.mubr.f32.mxu0 0.0
      %1505 = vmatmul.mubr.f32.gmra.mrb[0].mxu0 %v1433
      %v1506 = vpop.f32.mrb[0].mxu0
      %v1507 = vadd.f32 0.0, %v1506
      %v1508 = vpop.f32.mrb[0].mxu0
      %1509 = vdwg.mxu0
      %v1510 = vrcp.pop %v1419
      %v1511 = vmul.f32 %v1502, %v1510
      %v1512 = vrcp.pop %v1422
      %v1513 = vmul.f32 %v1507, %v1512
      %v1515 = vsel %vm471, %v1511, 0
      %v1518 = vsel %vm471, %v1513, 0
      %1520 = vmatprep.subr.mxu0 0.0
      %1521 = vmatpush1.msra.mxu0 %v460
      %1522 = vmatprep.subr.mxu0 0.0
      %1523 = vmatpush1.msra.mxu0 0.0
      %1524 = vmatprep.subr.mxu0 0.0
      %1525 = vmatpush1.msra.mxu0 0.0
      %1526 = vmatprep.subr.mxu0 0.0
      %1527 = vmatpush1.msra.mxu0 0.0
      %1528 = vmatprep.subr.mxu0 0.0
      %1529 = vmatpush1.msra.mxu0 0.0
      %1530 = vmatprep.subr.mxu0 0.0
      %1531 = vmatpush1.msra.mxu0 0.0
      %1532 = vmatprep.subr.mxu0 0.0
      %1533 = vmatpush1.msra.mxu0 0.0
      %1534 = vmatprep.subr.mxu0 0.0
      %1535 = vmatpush1.msra.mxu0 0.0
      %1536 = vmatprep.subr.mxu0 0.0
      %1537 = vmatpush1.msra.mxu0 0.0
      %1538 = vmatprep.subr.mxu0 0.0
      %1539 = vmatpush1.msra.mxu0 0.0
      %1540 = vmatprep.subr.mxu0 0.0
      %1541 = vmatpush1.msra.mxu0 0.0
      %1542 = vmatprep.subr.mxu0 0.0
      %1543 = vmatpush1.msra.mxu0 0.0
      %1544 = vmatprep.subr.mxu0 0.0
      %1545 = vmatpush1.msra.mxu0 0.0
      %1546 = vmatprep.subr.mxu0 0.0
      %1547 = vmatpush1.msra.mxu0 0.0
      %1548 = vmatprep.subr.mxu0 0.0
      %1549 = vmatpush1.msra.mxu0 0.0
      %1550 = vmatprep.subr.mxu0 0.0
      %1551 = vmatpush1.msra.mxu0 0.0
      %1552 = vmatprep.subr.mxu0 0.0
      %1553 = vmatpush1.msra.mxu0 0.0
      %1554 = vmatprep.subr.mxu0 0.0
      %1555 = vmatpush1.msra.mxu0 0.0
      %1556 = vmatprep.subr.mxu0 0.0
      %1557 = vmatpush1.msra.mxu0 0.0
      %1558 = vmatprep.subr.mxu0 0.0
      %1559 = vmatpush1.msra.mxu0 0.0
      %1560 = vmatprep.subr.mxu0 0.0
      %1561 = vmatpush1.msra.mxu0 0.0
      %1562 = vmatprep.subr.mxu0 0.0
      %1563 = vmatpush1.msra.mxu0 0.0
      %1564 = vmatprep.subr.mxu0 0.0
      %1565 = vmatpush1.msra.mxu0 0.0
      %1566 = vmatprep.subr.mxu0 0.0
      %1567 = vmatpush1.msra.mxu0 0.0
      %1568 = vmatprep.subr.mxu0 0.0
      %1569 = vmatpush1.msra.mxu0 0.0
      %1570 = vmatprep.subr.mxu0 0.0
      %1571 = vmatpush1.msra.mxu0 0.0
      %1572 = vmatprep.subr.mxu0 0.0
      %1573 = vmatpush1.msra.mxu0 0.0
      %1574 = vmatprep.subr.mxu0 0.0
      %1575 = vmatpush1.msra.mxu0 0.0
      %1576 = vmatprep.subr.mxu0 0.0
      %1577 = vmatpush1.msra.mxu0 0.0
      %1578 = vmatprep.subr.mxu0 0.0
      %1579 = vmatpush1.msra.mxu0 0.0
      %1580 = vmatprep.subr.mxu0 0.0
      %1581 = vmatpush1.msra.mxu0 0.0
      %1582 = vmatprep.subr.mxu0 0.0
      %1583 = vmatpush1.msra.mxu0 0.0
      %1584 = vmatprep.mubr.f32.mxu0 0.0
      %1585 = vmatmul.mubr.f32.gmra.mrb[0].mxu0 %v1515
      %v1586 = vpop.f32.mrb[0].mxu0
      %v1587 = vadd.f32 0.0, %v1586
      %v1588 = vpop.f32.mrb[0].mxu0
      %1589 = vmatprep.mubr.f32.mxu0 0.0
      %1590 = vmatmul.mubr.f32.gmra.mrb[0].mxu0 %v1518
      %v1591 = vpop.f32.mrb[0].mxu0
      %v1592 = vadd.f32 0.0, %v1591
      %v1593 = vpop.f32.mrb[0].mxu0
      %1594 = vdwg.mxu0
      %v1595 = vadd.f32 %v1310, %v1587
      %v1596 = vadd.f32 %v1311, %v1592
      %1597 = vrot.lane.b32.xlu0 %v427, 96
      %v1598 = vpop.permute.xlu0 %1597
      %1599 = vrot.lane.b32.xlu0 %v433, 96
      %v1600 = vpop.permute.xlu0 %1599
      %1601 = vrot.lane.b32.xlu0 %v427, 32
      %v1602 = vpop.permute.xlu0 %1601
      %1603 = vrot.lane.b32.xlu0 %v433, 32
      %v1604 = vpop.permute.xlu0 %1603
      %v1605 = vsel %vm471, %v1598, 0
      %v1607 = vsel %vm471, %v1600, 0
      %v1609 = vsel %vm471, %v1602, 0
      %v1611 = vsel %vm471, %v1604, 0
      %1613 = vmatprep.subr.mxu0 0.0
      %1614 = vmatpush1.xpose.msra.mxu0 %v1609
      %1615 = vmatprep.subr.mxu0 0.0
      %1616 = vmatpush1.xpose.msra.mxu0 %v1611
      %1617 = vmatprep.subr.mxu0 0.0
      %1618 = vmatpush1.xpose.msra.mxu0 0.0
      %1619 = vmatprep.subr.mxu0 0.0
      %1620 = vmatpush1.xpose.msra.mxu0 0.0
      %1621 = vmatprep.subr.mxu0 0.0
      %1622 = vmatpush1.xpose.msra.mxu0 0.0
      %1623 = vmatprep.subr.mxu0 0.0
      %1624 = vmatpush1.xpose.msra.mxu0 0.0
      %1625 = vmatprep.subr.mxu0 0.0
      %1626 = vmatpush1.xpose.msra.mxu0 0.0
      %1627 = vmatprep.subr.mxu0 0.0
      %1628 = vmatpush1.xpose.msra.mxu0 0.0
      %1629 = vmatprep.subr.mxu0 0.0
      %1630 = vmatpush1.xpose.msra.mxu0 0.0
      %1631 = vmatprep.subr.mxu0 0.0
      %1632 = vmatpush1.xpose.msra.mxu0 0.0
      %1633 = vmatprep.subr.mxu0 0.0
      %1634 = vmatpush1.xpose.msra.mxu0 0.0
      %1635 = vmatprep.subr.mxu0 0.0
      %1636 = vmatpush1.xpose.msra.mxu0 0.0
      %1637 = vmatprep.subr.mxu0 0.0
      %1638 = vmatpush1.xpose.msra.mxu0 0.0
      %1639 = vmatprep.subr.mxu0 0.0
      %1640 = vmatpush1.xpose.msra.mxu0 0.0
      %1641 = vmatprep.subr.mxu0 0.0
      %1642 = vmatpush1.xpose.msra.mxu0 0.0
      %1643 = vmatprep.subr.mxu0 0.0
      %1644 = vmatpush1.xpose.msra.mxu0 0.0
      %1645 = vmatprep.subr.mxu0 0.0
      %1646 = vmatpush1.xpose.msra.mxu0 0.0
      %1647 = vmatprep.subr.mxu0 0.0
      %1648 = vmatpush1.xpose.msra.mxu0 0.0
      %1649 = vmatprep.subr.mxu0 0.0
      %1650 = vmatpush1.xpose.msra.mxu0 0.0
      %1651 = vmatprep.subr.mxu0 0.0
      %1652 = vmatpush1.xpose.msra.mxu0 0.0
      %1653 = vmatprep.subr.mxu0 0.0
      %1654 = vmatpush1.xpose.msra.mxu0 0.0
      %1655 = vmatprep.subr.mxu0 0.0
      %1656 = vmatpush1.xpose.msra.mxu0 0.0
      %1657 = vmatprep.subr.mxu0 0.0
      %1658 = vmatpush1.xpose.msra.mxu0 0.0
      %1659 = vmatprep.subr.mxu0 0.0
      %1660 = vmatpush1.xpose.msra.mxu0 0.0
      %1661 = vmatprep.subr.mxu0 0.0
      %1662 = vmatpush1.xpose.msra.mxu0 0.0
      %1663 = vmatprep.subr.mxu0 0.0
      %1664 = vmatpush1.xpose.msra.mxu0 0.0
      %1665 = vmatprep.subr.mxu0 0.0
      %1666 = vmatpush1.xpose.msra.mxu0 0.0
      %1667 = vmatprep.subr.mxu0 0.0
      %1668 = vmatpush1.xpose.msra.mxu0 0.0
      %1669 = vmatprep.subr.mxu0 0.0
      %1670 = vmatpush1.xpose.msra.mxu0 0.0
      %1671 = vmatprep.subr.mxu0 0.0
      %1672 = vmatpush1.xpose.msra.mxu0 0.0
      %1673 = vmatprep.subr.mxu0 0.0
      %1674 = vmatpush1.xpose.msra.mxu0 0.0
      %1675 = vmatprep.subr.mxu0 0.0
      %1676 = vmatpush1.xpose.msra.mxu0 0.0
      %1677 = vmatprep.mubr.f32.mxu0 0.0
      %1678 = vmatmul.mubr.f32.gmra.mrb[0].mxu0 %v1605
      %v1679 = vpop.f32.mrb[0].mxu0
      %v1680 = vadd.f32 0.0, %v1679
      %v1681 = vpop.f32.mrb[0].mxu0
      %1682 = vmatprep.mubr.f32.mxu0 0.0
      %1683 = vmatmul.mubr.f32.gmra.mrb[0].mxu0 %v1607
      %v1684 = vpop.f32.mrb[0].mxu0
      %v1685 = vadd.f32 0.0, %v1684
      %v1686 = vpop.f32.mrb[0].mxu0
      %1687 = vdwg.mxu0
      %v1688 = vsel %vm455, %v1680, -1e+09
      %v1689 = vsel %vm456, %v1685, -1e+09
      %v1690 = vsel %vm557, %v1688, -inf
      %1691 = vmax.xlane.f32.xlu0 %v1690
      %v1692 = vpop.xlane.xlu0 %1691
      %v1693 = vsel %vm557, %v1689, -inf
      %1694 = vmax.xlane.f32.xlu0 %v1693
      %v1695 = vpop.xlane.xlu0 %1694
      %v1696 = vsub.f32 %v1688, %v1692
      %v1697 = vsub.f32 %v1689, %v1695
      %v1698 = vmul.f32 %v1696, 1.442695
      %v1699 = vpow.pop %v1698
      %v1700 = vmul.f32 %v1697, 1.442695
      %v1701 = vpow.pop %v1700
      %v1702 = vsel %vm557, %v1699, 0.0
      %1703 = vadd.xlane.f32.xlu0 %v1702
      %v1704 = vpop.xlane.xlu0 %1703
      %v1705 = vsel %vm557, %v1701, 0.0
      %1706 = vadd.xlane.f32.xlu0 %v1705
      %v1707 = vpop.xlane.xlu0 %1706
      %1708 = vrot.lane.b32.xlu0 %v429, 96
      %v1709 = vpop.permute.xlu0 %1708
      %1710 = vrot.lane.b32.xlu0 %v435, 96
      %v1711 = vpop.permute.xlu0 %1710
      %v1715 = vsel %vm557, %v1699, 0
      %v1718 = vsel %vm557, %v1701, 0
      %1720 = vmatprep.subr.mxu0 0.0
      %1721 = vmatpush1.msra.mxu0 %v1709
      %1722 = vmatprep.subr.mxu0 0.0
      %1723 = vmatpush1.msra.mxu0 %v1711
      %1724 = vmatprep.subr.mxu0 0.0
      %1725 = vmatpush1.msra.mxu0 0.0
      %1726 = vmatprep.subr.mxu0 0.0
      %1727 = vmatpush1.msra.mxu0 0.0
      %1728 = vmatprep.subr.mxu0 0.0
      %1729 = vmatpush1.msra.mxu0 0.0
      %1730 = vmatprep.subr.mxu0 0.0
      %1731 = vmatpush1.msra.mxu0 0.0
      %1732 = vmatprep.subr.mxu0 0.0
      %1733 = vmatpush1.msra.mxu0 0.0
      %1734 = vmatprep.subr.mxu0 0.0
      %1735 = vmatpush1.msra.mxu0 0.0
      %1736 = vmatprep.subr.mxu0 0.0
      %1737 = vmatpush1.msra.mxu0 0.0
      %1738 = vmatprep.subr.mxu0 0.0
      %1739 = vmatpush1.msra.mxu0 0.0
      %1740 = vmatprep.subr.mxu0 0.0
      %1741 = vmatpush1.msra.mxu0 0.0
      %1742 = vmatprep.subr.mxu0 0.0
      %1743 = vmatpush1.msra.mxu0 0.0
      %1744 = vmatprep.subr.mxu0 0.0
      %1745 = vmatpush1.msra.mxu0 0.0
      %1746 = vmatprep.subr.mxu0 0.0
      %1747 = vmatpush1.msra.mxu0 0.0
      %1748 = vmatprep.subr.mxu0 0.0
      %1749 = vmatpush1.msra.mxu0 0.0
      %1750 = vmatprep.subr.mxu0 0.0
      %1751 = vmatpush1.msra.mxu0 0.0
      %1752 = vmatprep.subr.mxu0 0.0
      %1753 = vmatpush1.msra.mxu0 0.0
      %1754 = vmatprep.subr.mxu0 0.0
      %1755 = vmatpush1.msra.mxu0 0.0
      %1756 = vmatprep.subr.mxu0 0.0
      %1757 = vmatpush1.msra.mxu0 0.0
      %1758 = vmatprep.subr.mxu0 0.0
      %1759 = vmatpush1.msra.mxu0 0.0
      %1760 = vmatprep.subr.mxu0 0.0
      %1761 = vmatpush1.msra.mxu0 0.0
      %1762 = vmatprep.subr.mxu0 0.0
      %1763 = vmatpush1.msra.mxu0 0.0
      %1764 = vmatprep.subr.mxu0 0.0
      %1765 = vmatpush1.msra.mxu0 0.0
      %1766 = vmatprep.subr.mxu0 0.0
      %1767 = vmatpush1.msra.mxu0 0.0
      %1768 = vmatprep.subr.mxu0 0.0
      %1769 = vmatpush1.msra.mxu0 0.0
      %1770 = vmatprep.subr.mxu0 0.0
      %1771 = vmatpush1.msra.mxu0 0.0
      %1772 = vmatprep.subr.mxu0 0.0
      %1773 = vmatpush1.msra.mxu0 0.0
      %1774 = vmatprep.subr.mxu0 0.0
      %1775 = vmatpush1.msra.mxu0 0.0
      %1776 = vmatprep.subr.mxu0 0.0
      %1777 = vmatpush1.msra.mxu0 0.0
      %1778 = vmatprep.subr.mxu0 0.0
      %1779 = vmatpush1.msra.mxu0 0.0
      %1780 = vmatprep.subr.mxu0 0.0
      %1781 = vmatpush1.msra.mxu0 0.0
      %1782 = vmatprep.subr.mxu0 0.0
      %1783 = vmatpush1.msra.mxu0 0.0
      %1784 = vmatprep.mubr.f32.mxu0 0.0
      %1785 = vmatmul.mubr.f32.gmra.mrb[0].mxu0 %v1715
      %v1786 = vpop.f32.mrb[0].mxu0
      %v1787 = vadd.f32 0.0, %v1786
      %v1788 = vpop.f32.mrb[0].mxu0
      %1789 = vmatprep.mubr.f32.mxu0 0.0
      %1790 = vmatmul.mubr.f32.gmra.mrb[0].mxu0 %v1718
      %v1791 = vpop.f32.mrb[0].mxu0
      %v1792 = vadd.f32 0.0, %v1791
      %v1793 = vpop.f32.mrb[0].mxu0
      %1794 = vdwg.mxu0
      %v1795 = vrcp.pop %v1704
      %v1796 = vmul.f32 %v1787, %v1795
      %v1797 = vrcp.pop %v1707
      %v1798 = vmul.f32 %v1792, %v1797
      %v1800 = vsel %vm471, %v1796, 0
      %v1803 = vsel %vm471, %v1798, 0
      %1805 = vmatprep.subr.mxu0 0.0
      %1806 = vmatpush1.msra.mxu0 %v461
      %1807 = vmatprep.subr.mxu0 0.0
      %1808 = vmatpush1.msra.mxu0 0.0
      %1809 = vmatprep.subr.mxu0 0.0
      %1810 = vmatpush1.msra.mxu0 0.0
      %1811 = vmatprep.subr.mxu0 0.0
      %1812 = vmatpush1.msra.mxu0 0.0
      %1813 = vmatprep.subr.mxu0 0.0
      %1814 = vmatpush1.msra.mxu0 0.0
      %1815 = vmatprep.subr.mxu0 0.0
      %1816 = vmatpush1.msra.mxu0 0.0
      %1817 = vmatprep.subr.mxu0 0.0
      %1818 = vmatpush1.msra.mxu0 0.0
      %1819 = vmatprep.subr.mxu0 0.0
      %1820 = vmatpush1.msra.mxu0 0.0
      %1821 = vmatprep.subr.mxu0 0.0
      %1822 = vmatpush1.msra.mxu0 0.0
      %1823 = vmatprep.subr.mxu0 0.0
      %1824 = vmatpush1.msra.mxu0 0.0
      %1825 = vmatprep.subr.mxu0 0.0
      %1826 = vmatpush1.msra.mxu0 0.0
      %1827 = vmatprep.subr.mxu0 0.0
      %1828 = vmatpush1.msra.mxu0 0.0
      %1829 = vmatprep.subr.mxu0 0.0
      %1830 = vmatpush1.msra.mxu0 0.0
      %1831 = vmatprep.subr.mxu0 0.0
      %1832 = vmatpush1.msra.mxu0 0.0
      %1833 = vmatprep.subr.mxu0 0.0
      %1834 = vmatpush1.msra.mxu0 0.0
      %1835 = vmatprep.subr.mxu0 0.0
      %1836 = vmatpush1.msra.mxu0 0.0
      %1837 = vmatprep.subr.mxu0 0.0
      %1838 = vmatpush1.msra.mxu0 0.0
      %1839 = vmatprep.subr.mxu0 0.0
      %1840 = vmatpush1.msra.mxu0 0.0
      %1841 = vmatprep.subr.mxu0 0.0
      %1842 = vmatpush1.msra.mxu0 0.0
      %1843 = vmatprep.subr.mxu0 0.0
      %1844 = vmatpush1.msra.mxu0 0.0
      %1845 = vmatprep.subr.mxu0 0.0
      %1846 = vmatpush1.msra.mxu0 0.0
      %1847 = vmatprep.subr.mxu0 0.0
      %1848 = vmatpush1.msra.mxu0 0.0
      %1849 = vmatprep.subr.mxu0 0.0
      %1850 = vmatpush1.msra.mxu0 0.0
      %1851 = vmatprep.subr.mxu0 0.0
      %1852 = vmatpush1.msra.mxu0 0.0
      %1853 = vmatprep.subr.mxu0 0.0
      %1854 = vmatpush1.msra.mxu0 0.0
      %1855 = vmatprep.subr.mxu0 0.0
      %1856 = vmatpush1.msra.mxu0 0.0
      %1857 = vmatprep.subr.mxu0 0.0
      %1858 = vmatpush1.msra.mxu0 0.0
      %1859 = vmatprep.subr.mxu0 0.0
      %1860 = vmatpush1.msra.mxu0 0.0
      %1861 = vmatprep.subr.mxu0 0.0
      %1862 = vmatpush1.msra.mxu0 0.0
      %1863 = vmatprep.subr.mxu0 0.0
      %1864 = vmatpush1.msra.mxu0 0.0
      %1865 = vmatprep.subr.mxu0 0.0
      %1866 = vmatpush1.msra.mxu0 0.0
      %1867 = vmatprep.subr.mxu0 0.0
      %1868 = vmatpush1.msra.mxu0 0.0
      %1869 = vmatprep.mubr.f32.mxu0 0.0
      %1870 = vmatmul.mubr.f32.gmra.mrb[0].mxu0 %v1800
      %v1871 = vpop.f32.mrb[0].mxu0
      %v1872 = vadd.f32 0.0, %v1871
      %v1873 = vpop.f32.mrb[0].mxu0
      %1874 = vmatprep.mubr.f32.mxu0 0.0
      %1875 = vmatmul.mubr.f32.gmra.mrb[0].mxu0 %v1803
      %v1876 = vpop.f32.mrb[0].mxu0
      %v1877 = vadd.f32 0.0, %v1876
      %v1878 = vpop.f32.mrb[0].mxu0
      %1879 = vdwg.mxu0
      %v1880 = vadd.f32 %v1595, %v1872
      %v1881 = vadd.f32 %v1596, %v1877
      %1882 = vrot.lane.b32.xlu0 %v427, 88
      %v1883 = vpop.permute.xlu0 %1882
      %1884 = vrot.lane.b32.xlu0 %v433, 88
      %v1885 = vpop.permute.xlu0 %1884
      %1886 = vrot.lane.b32.xlu0 %v427, 24
      %v1887 = vpop.permute.xlu0 %1886
      %1888 = vrot.lane.b32.xlu0 %v433, 24
      %v1889 = vpop.permute.xlu0 %1888
      %v1890 = vsel %vm471, %v1883, 0
      %v1892 = vsel %vm471, %v1885, 0
      %v1894 = vsel %vm471, %v1887, 0
      %v1896 = vsel %vm471, %v1889, 0
      %1898 = vmatprep.subr.mxu0 0.0
      %1899 = vmatpush1.xpose.msra.mxu0 %v1894
      %1900 = vmatprep.subr.mxu0 0.0
      %1901 = vmatpush1.xpose.msra.mxu0 %v1896
      %1902 = vmatprep.subr.mxu0 0.0
      %1903 = vmatpush1.xpose.msra.mxu0 0.0
      %1904 = vmatprep.subr.mxu0 0.0
      %1905 = vmatpush1.xpose.msra.mxu0 0.0
      %1906 = vmatprep.subr.mxu0 0.0
      %1907 = vmatpush1.xpose.msra.mxu0 0.0
      %1908 = vmatprep.subr.mxu0 0.0
      %1909 = vmatpush1.xpose.msra.mxu0 0.0
      %1910 = vmatprep.subr.mxu0 0.0
      %1911 = vmatpush1.xpose.msra.mxu0 0.0
      %1912 = vmatprep.subr.mxu0 0.0
      %1913 = vmatpush1.xpose.msra.mxu0 0.0
      %1914 = vmatprep.subr.mxu0 0.0
      %1915 = vmatpush1.xpose.msra.mxu0 0.0
      %1916 = vmatprep.subr.mxu0 0.0
      %1917 = vmatpush1.xpose.msra.mxu0 0.0
      %1918 = vmatprep.subr.mxu0 0.0
      %1919 = vmatpush1.xpose.msra.mxu0 0.0
      %1920 = vmatprep.subr.mxu0 0.0
      %1921 = vmatpush1.xpose.msra.mxu0 0.0
      %1922 = vmatprep.subr.mxu0 0.0
      %1923 = vmatpush1.xpose.msra.mxu0 0.0
      %1924 = vmatprep.subr.mxu0 0.0
      %1925 = vmatpush1.xpose.msra.mxu0 0.0
      %1926 = vmatprep.subr.mxu0 0.0
      %1927 = vmatpush1.xpose.msra.mxu0 0.0
      %1928 = vmatprep.subr.mxu0 0.0
      %1929 = vmatpush1.xpose.msra.mxu0 0.0
      %1930 = vmatprep.subr.mxu0 0.0
      %1931 = vmatpush1.xpose.msra.mxu0 0.0
      %1932 = vmatprep.subr.mxu0 0.0
      %1933 = vmatpush1.xpose.msra.mxu0 0.0
      %1934 = vmatprep.subr.mxu0 0.0
      %1935 = vmatpush1.xpose.msra.mxu0 0.0
      %1936 = vmatprep.subr.mxu0 0.0
      %1937 = vmatpush1.xpose.msra.mxu0 0.0
      %1938 = vmatprep.subr.mxu0 0.0
      %1939 = vmatpush1.xpose.msra.mxu0 0.0
      %1940 = vmatprep.subr.mxu0 0.0
      %1941 = vmatpush1.xpose.msra.mxu0 0.0
      %1942 = vmatprep.subr.mxu0 0.0
      %1943 = vmatpush1.xpose.msra.mxu0 0.0
      %1944 = vmatprep.subr.mxu0 0.0
      %1945 = vmatpush1.xpose.msra.mxu0 0.0
      %1946 = vmatprep.subr.mxu0 0.0
      %1947 = vmatpush1.xpose.msra.mxu0 0.0
      %1948 = vmatprep.subr.mxu0 0.0
      %1949 = vmatpush1.xpose.msra.mxu0 0.0
      %1950 = vmatprep.subr.mxu0 0.0
      %1951 = vmatpush1.xpose.msra.mxu0 0.0
      %1952 = vmatprep.subr.mxu0 0.0
      %1953 = vmatpush1.xpose.msra.mxu0 0.0
      %1954 = vmatprep.subr.mxu0 0.0
      %1955 = vmatpush1.xpose.msra.mxu0 0.0
      %1956 = vmatprep.subr.mxu0 0.0
      %1957 = vmatpush1.xpose.msra.mxu0 0.0
      %1958 = vmatprep.subr.mxu0 0.0
      %1959 = vmatpush1.xpose.msra.mxu0 0.0
      %1960 = vmatprep.subr.mxu0 0.0
      %1961 = vmatpush1.xpose.msra.mxu0 0.0
      %1962 = vmatprep.mubr.f32.mxu0 0.0
      %1963 = vmatmul.mubr.f32.gmra.mrb[0].mxu0 %v1890
      %v1964 = vpop.f32.mrb[0].mxu0
      %v1965 = vadd.f32 0.0, %v1964
      %v1966 = vpop.f32.mrb[0].mxu0
      %1967 = vmatprep.mubr.f32.mxu0 0.0
      %1968 = vmatmul.mubr.f32.gmra.mrb[0].mxu0 %v1892
      %v1969 = vpop.f32.mrb[0].mxu0
      %v1970 = vadd.f32 0.0, %v1969
      %v1971 = vpop.f32.mrb[0].mxu0
      %1972 = vdwg.mxu0
      %v1973 = vsel %vm455, %v1965, -1e+09
      %v1974 = vsel %vm456, %v1970, -1e+09
      %v1975 = vsel %vm557, %v1973, -inf
      %1976 = vmax.xlane.f32.xlu0 %v1975
      %v1977 = vpop.xlane.xlu0 %1976
      %v1978 = vsel %vm557, %v1974, -inf
      %1979 = vmax.xlane.f32.xlu0 %v1978
      %v1980 = vpop.xlane.xlu0 %1979
      %v1981 = vsub.f32 %v1973, %v1977
      %v1982 = vsub.f32 %v1974, %v1980
      %v1983 = vmul.f32 %v1981, 1.442695
      %v1984 = vpow.pop %v1983
      %v1985 = vmul.f32 %v1982, 1.442695
      %v1986 = vpow.pop %v1985
      %v1987 = vsel %vm557, %v1984, 0.0
      %1988 = vadd.xlane.f32.xlu0 %v1987
      %v1989 = vpop.xlane.xlu0 %1988
      %v1990 = vsel %vm557, %v1986, 0.0
      %1991 = vadd.xlane.f32.xlu0 %v1990
      %v1992 = vpop.xlane.xlu0 %1991
      %1993 = vrot.lane.b32.xlu0 %v429, 88
      %v1994 = vpop.permute.xlu0 %1993
      %1995 = vrot.lane.b32.xlu0 %v435, 88
      %v1996 = vpop.permute.xlu0 %1995
      %v2000 = vsel %vm557, %v1984, 0
      %v2003 = vsel %vm557, %v1986, 0
      %2005 = vmatprep.subr.mxu0 0.0
      %2006 = vmatpush1.msra.mxu0 %v1994
      %2007 = vmatprep.subr.mxu0 0.0
      %2008 = vmatpush1.msra.mxu0 %v1996
      %2009 = vmatprep.subr.mxu0 0.0
      %2010 = vmatpush1.msra.mxu0 0.0
      %2011 = vmatprep.subr.mxu0 0.0
      %2012 = vmatpush1.msra.mxu0 0.0
      %2013 = vmatprep.subr.mxu0 0.0
      %2014 = vmatpush1.msra.mxu0 0.0
      %2015 = vmatprep.subr.mxu0 0.0
      %2016 = vmatpush1.msra.mxu0 0.0
      %2017 = vmatprep.subr.mxu0 0.0
      %2018 = vmatpush1.msra.mxu0 0.0
      %2019 = vmatprep.subr.mxu0 0.0
      %2020 = vmatpush1.msra.mxu0 0.0
      %2021 = vmatprep.subr.mxu0 0.0
      %2022 = vmatpush1.msra.mxu0 0.0
      %2023 = vmatprep.subr.mxu0 0.0
      %2024 = vmatpush1.msra.mxu0 0.0
      %2025 = vmatprep.subr.mxu0 0.0
      %2026 = vmatpush1.msra.mxu0 0.0
      %2027 = vmatprep.subr.mxu0 0.0
      %2028 = vmatpush1.msra.mxu0 0.0
      %2029 = vmatprep.subr.mxu0 0.0
      %2030 = vmatpush1.msra.mxu0 0.0
      %2031 = vmatprep.subr.mxu0 0.0
      %2032 = vmatpush1.msra.mxu0 0.0
      %2033 = vmatprep.subr.mxu0 0.0
      %2034 = vmatpush1.msra.mxu0 0.0
      %2035 = vmatprep.subr.mxu0 0.0
      %2036 = vmatpush1.msra.mxu0 0.0
      %2037 = vmatprep.subr.mxu0 0.0
      %2038 = vmatpush1.msra.mxu0 0.0
      %2039 = vmatprep.subr.mxu0 0.0
      %2040 = vmatpush1.msra.mxu0 0.0
      %2041 = vmatprep.subr.mxu0 0.0
      %2042 = vmatpush1.msra.mxu0 0.0
      %2043 = vmatprep.subr.mxu0 0.0
      %2044 = vmatpush1.msra.mxu0 0.0
      %2045 = vmatprep.subr.mxu0 0.0
      %2046 = vmatpush1.msra.mxu0 0.0
      %2047 = vmatprep.subr.mxu0 0.0
      %2048 = vmatpush1.msra.mxu0 0.0
      %2049 = vmatprep.subr.mxu0 0.0
      %2050 = vmatpush1.msra.mxu0 0.0
      %2051 = vmatprep.subr.mxu0 0.0
      %2052 = vmatpush1.msra.mxu0 0.0
      %2053 = vmatprep.subr.mxu0 0.0
      %2054 = vmatpush1.msra.mxu0 0.0
      %2055 = vmatprep.subr.mxu0 0.0
      %2056 = vmatpush1.msra.mxu0 0.0
      %2057 = vmatprep.subr.mxu0 0.0
      %2058 = vmatpush1.msra.mxu0 0.0
      %2059 = vmatprep.subr.mxu0 0.0
      %2060 = vmatpush1.msra.mxu0 0.0
      %2061 = vmatprep.subr.mxu0 0.0
      %2062 = vmatpush1.msra.mxu0 0.0
      %2063 = vmatprep.subr.mxu0 0.0
      %2064 = vmatpush1.msra.mxu0 0.0
      %2065 = vmatprep.subr.mxu0 0.0
      %2066 = vmatpush1.msra.mxu0 0.0
      %2067 = vmatprep.subr.mxu0 0.0
      %2068 = vmatpush1.msra.mxu0 0.0
      %2069 = vmatprep.mubr.f32.mxu0 0.0
      %2070 = vmatmul.mubr.f32.gmra.mrb[0].mxu0 %v2000
      %v2071 = vpop.f32.mrb[0].mxu0
      %v2072 = vadd.f32 0.0, %v2071
      %v2073 = vpop.f32.mrb[0].mxu0
      %2074 = vmatprep.mubr.f32.mxu0 0.0
      %2075 = vmatmul.mubr.f32.gmra.mrb[0].mxu0 %v2003
      %v2076 = vpop.f32.mrb[0].mxu0
      %v2077 = vadd.f32 0.0, %v2076
      %v2078 = vpop.f32.mrb[0].mxu0
      %2079 = vdwg.mxu0
      %v2080 = vrcp.pop %v1989
      %v2081 = vmul.f32 %v2072, %v2080
      %v2082 = vrcp.pop %v1992
      %v2083 = vmul.f32 %v2077, %v2082
      %v2085 = vsel %vm471, %v2081, 0
      %v2088 = vsel %vm471, %v2083, 0
      %2090 = vmatprep.subr.mxu0 0.0
      %2091 = vmatpush1.msra.mxu0 %v462
      %2092 = vmatprep.subr.mxu0 0.0
      %2093 = vmatpush1.msra.mxu0 0.0
      %2094 = vmatprep.subr.mxu0 0.0
      %2095 = vmatpush1.msra.mxu0 0.0
      %2096 = vmatprep.subr.mxu0 0.0
      %2097 = vmatpush1.msra.mxu0 0.0
      %2098 = vmatprep.subr.mxu0 0.0
      %2099 = vmatpush1.msra.mxu0 0.0
      %2100 = vmatprep.subr.mxu0 0.0
      %2101 = vmatpush1.msra.mxu0 0.0
      %2102 = vmatprep.subr.mxu0 0.0
      %2103 = vmatpush1.msra.mxu0 0.0
      %2104 = vmatprep.subr.mxu0 0.0
      %2105 = vmatpush1.msra.mxu0 0.0
      %2106 = vmatprep.subr.mxu0 0.0
      %2107 = vmatpush1.msra.mxu0 0.0
      %2108 = vmatprep.subr.mxu0 0.0
      %2109 = vmatpush1.msra.mxu0 0.0
      %2110 = vmatprep.subr.mxu0 0.0
      %2111 = vmatpush1.msra.mxu0 0.0
      %2112 = vmatprep.subr.mxu0 0.0
      %2113 = vmatpush1.msra.mxu0 0.0
      %2114 = vmatprep.subr.mxu0 0.0
      %2115 = vmatpush1.msra.mxu0 0.0
      %2116 = vmatprep.subr.mxu0 0.0
      %2117 = vmatpush1.msra.mxu0 0.0
      %2118 = vmatprep.subr.mxu0 0.0
      %2119 = vmatpush1.msra.mxu0 0.0
      %2120 = vmatprep.subr.mxu0 0.0
      %2121 = vmatpush1.msra.mxu0 0.0
      %2122 = vmatprep.subr.mxu0 0.0
      %2123 = vmatpush1.msra.mxu0 0.0
      %2124 = vmatprep.subr.mxu0 0.0
      %2125 = vmatpush1.msra.mxu0 0.0
      %2126 = vmatprep.subr.mxu0 0.0
      %2127 = vmatpush1.msra.mxu0 0.0
      %2128 = vmatprep.subr.mxu0 0.0
      %2129 = vmatpush1.msra.mxu0 0.0
      %2130 = vmatprep.subr.mxu0 0.0
      %2131 = vmatpush1.msra.mxu0 0.0
      %2132 = vmatprep.subr.mxu0 0.0
      %2133 = vmatpush1.msra.mxu0 0.0
      %2134 = vmatprep.subr.mxu0 0.0
      %2135 = vmatpush1.msra.mxu0 0.0
      %2136 = vmatprep.subr.mxu0 0.0
      %2137 = vmatpush1.msra.mxu0 0.0
      %2138 = vmatprep.subr.mxu0 0.0
      %2139 = vmatpush1.msra.mxu0 0.0
      %2140 = vmatprep.subr.mxu0 0.0
      %2141 = vmatpush1.msra.mxu0 0.0
      %2142 = vmatprep.subr.mxu0 0.0
      %2143 = vmatpush1.msra.mxu0 0.0
      %2144 = vmatprep.subr.mxu0 0.0
      %2145 = vmatpush1.msra.mxu0 0.0
      %2146 = vmatprep.subr.mxu0 0.0
      %2147 = vmatpush1.msra.mxu0 0.0
      %2148 = vmatprep.subr.mxu0 0.0
      %2149 = vmatpush1.msra.mxu0 0.0
      %2150 = vmatprep.subr.mxu0 0.0
      %2151 = vmatpush1.msra.mxu0 0.0
      %2152 = vmatprep.subr.mxu0 0.0
      %2153 = vmatpush1.msra.mxu0 0.0
      %2154 = vmatprep.mubr.f32.mxu0 0.0
      %2155 = vmatmul.mubr.f32.gmra.mrb[0].mxu0 %v2085
      %v2156 = vpop.f32.mrb[0].mxu0
      %v2157 = vadd.f32 0.0, %v2156
      %v2158 = vpop.f32.mrb[0].mxu0
      %2159 = vmatprep.mubr.f32.mxu0 0.0
      %2160 = vmatmul.mubr.f32.gmra.mrb[0].mxu0 %v2088
      %v2161 = vpop.f32.mrb[0].mxu0
      %v2162 = vadd.f32 0.0, %v2161
      %v2163 = vpop.f32.mrb[0].mxu0
      %2164 = vdwg.mxu0
      %v2165 = vadd.f32 %v1880, %v2157
      %v2166 = vadd.f32 %v1881, %v2162
      %2167 = vrot.lane.b32.xlu0 %v427, 80
      %v2168 = vpop.permute.xlu0 %2167
      %2169 = vrot.lane.b32.xlu0 %v433, 80
      %v2170 = vpop.permute.xlu0 %2169
      %2171 = vrot.lane.b32.xlu0 %v427, 16
      %v2172 = vpop.permute.xlu0 %2171
      %2173 = vrot.lane.b32.xlu0 %v433, 16
      %v2174 = vpop.permute.xlu0 %2173
      %v2175 = vsel %vm471, %v2168, 0
      %v2177 = vsel %vm471, %v2170, 0
      %v2179 = vsel %vm471, %v2172, 0
      %v2181 = vsel %vm471, %v2174, 0
      %2183 = vmatprep.subr.mxu0 0.0
      %2184 = vmatpush1.xpose.msra.mxu0 %v2179
      %2185 = vmatprep.subr.mxu0 0.0
      %2186 = vmatpush1.xpose.msra.mxu0 %v2181
      %2187 = vmatprep.subr.mxu0 0.0
      %2188 = vmatpush1.xpose.msra.mxu0 0.0
      %2189 = vmatprep.subr.mxu0 0.0
      %2190 = vmatpush1.xpose.msra.mxu0 0.0
      %2191 = vmatprep.subr.mxu0 0.0
      %2192 = vmatpush1.xpose.msra.mxu0 0.0
      %2193 = vmatprep.subr.mxu0 0.0
      %2194 = vmatpush1.xpose.msra.mxu0 0.0
      %2195 = vmatprep.subr.mxu0 0.0
      %2196 = vmatpush1.xpose.msra.mxu0 0.0
      %2197 = vmatprep.subr.mxu0 0.0
      %2198 = vmatpush1.xpose.msra.mxu0 0.0
      %2199 = vmatprep.subr.mxu0 0.0
      %2200 = vmatpush1.xpose.msra.mxu0 0.0
      %2201 = vmatprep.subr.mxu0 0.0
      %2202 = vmatpush1.xpose.msra.mxu0 0.0
      %2203 = vmatprep.subr.mxu0 0.0
      %2204 = vmatpush1.xpose.msra.mxu0 0.0
      %2205 = vmatprep.subr.mxu0 0.0
      %2206 = vmatpush1.xpose.msra.mxu0 0.0
      %2207 = vmatprep.subr.mxu0 0.0
      %2208 = vmatpush1.xpose.msra.mxu0 0.0
      %2209 = vmatprep.subr.mxu0 0.0
      %2210 = vmatpush1.xpose.msra.mxu0 0.0
      %2211 = vmatprep.subr.mxu0 0.0
      %2212 = vmatpush1.xpose.msra.mxu0 0.0
      %2213 = vmatprep.subr.mxu0 0.0
      %2214 = vmatpush1.xpose.msra.mxu0 0.0
      %2215 = vmatprep.subr.mxu0 0.0
      %2216 = vmatpush1.xpose.msra.mxu0 0.0
      %2217 = vmatprep.subr.mxu0 0.0
      %2218 = vmatpush1.xpose.msra.mxu0 0.0
      %2219 = vmatprep.subr.mxu0 0.0
      %2220 = vmatpush1.xpose.msra.mxu0 0.0
      %2221 = vmatprep.subr.mxu0 0.0
      %2222 = vmatpush1.xpose.msra.mxu0 0.0
      %2223 = vmatprep.subr.mxu0 0.0
      %2224 = vmatpush1.xpose.msra.mxu0 0.0
      %2225 = vmatprep.subr.mxu0 0.0
      %2226 = vmatpush1.xpose.msra.mxu0 0.0
      %2227 = vmatprep.subr.mxu0 0.0
      %2228 = vmatpush1.xpose.msra.mxu0 0.0
      %2229 = vmatprep.subr.mxu0 0.0
      %2230 = vmatpush1.xpose.msra.mxu0 0.0
      %2231 = vmatprep.subr.mxu0 0.0
      %2232 = vmatpush1.xpose.msra.mxu0 0.0
      %2233 = vmatprep.subr.mxu0 0.0
      %2234 = vmatpush1.xpose.msra.mxu0 0.0
      %2235 = vmatprep.subr.mxu0 0.0
      %2236 = vmatpush1.xpose.msra.mxu0 0.0
      %2237 = vmatprep.subr.mxu0 0.0
      %2238 = vmatpush1.xpose.msra.mxu0 0.0
      %2239 = vmatprep.subr.mxu0 0.0
      %2240 = vmatpush1.xpose.msra.mxu0 0.0
      %2241 = vmatprep.subr.mxu0 0.0
      %2242 = vmatpush1.xpose.msra.mxu0 0.0
      %2243 = vmatprep.subr.mxu0 0.0
      %2244 = vmatpush1.xpose.msra.mxu0 0.0
      %2245 = vmatprep.subr.mxu0 0.0
      %2246 = vmatpush1.xpose.msra.mxu0 0.0
      %2247 = vmatprep.mubr.f32.mxu0 0.0
      %2248 = vmatmul.mubr.f32.gmra.mrb[0].mxu0 %v2175
      %v2249 = vpop.f32.mrb[0].mxu0
      %v2250 = vadd.f32 0.0, %v2249
      %v2251 = vpop.f32.mrb[0].mxu0
      %2252 = vmatprep.mubr.f32.mxu0 0.0
      %2253 = vmatmul.mubr.f32.gmra.mrb[0].mxu0 %v2177
      %v2254 = vpop.f32.mrb[0].mxu0
      %v2255 = vadd.f32 0.0, %v2254
      %v2256 = vpop.f32.mrb[0].mxu0
      %2257 = vdwg.mxu0
      %v2258 = vsel %vm455, %v2250, -1e+09
      %v2259 = vsel %vm456, %v2255, -1e+09
      %v2260 = vsel %vm557, %v2258, -inf
      %2261 = vmax.xlane.f32.xlu0 %v2260
      %v2262 = vpop.xlane.xlu0 %2261
      %v2263 = vsel %vm557, %v2259, -inf
      %2264 = vmax.xlane.f32.xlu0 %v2263
      %v2265 = vpop.xlane.xlu0 %2264
      %v2266 = vsub.f32 %v2258, %v2262
      %v2267 = vsub.f32 %v2259, %v2265
      %v2268 = vmul.f32 %v2266, 1.442695
      %v2269 = vpow.pop %v2268
      %v2270 = vmul.f32 %v2267, 1.442695
      %v2271 = vpow.pop %v2270
      %v2272 = vsel %vm557, %v2269, 0.0
      %2273 = vadd.xlane.f32.xlu0 %v2272
      %v2274 = vpop.xlane.xlu0 %2273
      %v2275 = vsel %vm557, %v2271, 0.0
      %2276 = vadd.xlane.f32.xlu0 %v2275
      %v2277 = vpop.xlane.xlu0 %2276
      %2278 = vrot.lane.b32.xlu0 %v429, 80
      %v2279 = vpop.permute.xlu0 %2278
      %2280 = vrot.lane.b32.xlu0 %v435, 80
      %v2281 = vpop.permute.xlu0 %2280
      %v2285 = vsel %vm557, %v2269, 0
      %v2288 = vsel %vm557, %v2271, 0
      %2290 = vmatprep.subr.mxu0 0.0
      %2291 = vmatpush1.msra.mxu0 %v2279
      %2292 = vmatprep.subr.mxu0 0.0
      %2293 = vmatpush1.msra.mxu0 %v2281
      %2294 = vmatprep.subr.mxu0 0.0
      %2295 = vmatpush1.msra.mxu0 0.0
      %2296 = vmatprep.subr.mxu0 0.0
      %2297 = vmatpush1.msra.mxu0 0.0
      %2298 = vmatprep.subr.mxu0 0.0
      %2299 = vmatpush1.msra.mxu0 0.0
      %2300 = vmatprep.subr.mxu0 0.0
      %2301 = vmatpush1.msra.mxu0 0.0
      %2302 = vmatprep.subr.mxu0 0.0
      %2303 = vmatpush1.msra.mxu0 0.0
      %2304 = vmatprep.subr.mxu0 0.0
      %2305 = vmatpush1.msra.mxu0 0.0
      %2306 = vmatprep.subr.mxu0 0.0
      %2307 = vmatpush1.msra.mxu0 0.0
      %2308 = vmatprep.subr.mxu0 0.0
      %2309 = vmatpush1.msra.mxu0 0.0
      %2310 = vmatprep.subr.mxu0 0.0
      %2311 = vmatpush1.msra.mxu0 0.0
      %2312 = vmatprep.subr.mxu0 0.0
      %2313 = vmatpush1.msra.mxu0 0.0
      %2314 = vmatprep.subr.mxu0 0.0
      %2315 = vmatpush1.msra.mxu0 0.0
      %2316 = vmatprep.subr.mxu0 0.0
      %2317 = vmatpush1.msra.mxu0 0.0
      %2318 = vmatprep.subr.mxu0 0.0
      %2319 = vmatpush1.msra.mxu0 0.0
      %2320 = vmatprep.subr.mxu0 0.0
      %2321 = vmatpush1.msra.mxu0 0.0
      %2322 = vmatprep.subr.mxu0 0.0
      %2323 = vmatpush1.msra.mxu0 0.0
      %2324 = vmatprep.subr.mxu0 0.0
      %2325 = vmatpush1.msra.mxu0 0.0
      %2326 = vmatprep.subr.mxu0 0.0
      %2327 = vmatpush1.msra.mxu0 0.0
      %2328 = vmatprep.subr.mxu0 0.0
      %2329 = vmatpush1.msra.mxu0 0.0
      %2330 = vmatprep.subr.mxu0 0.0
      %2331 = vmatpush1.msra.mxu0 0.0
      %2332 = vmatprep.subr.mxu0 0.0
      %2333 = vmatpush1.msra.mxu0 0.0
      %2334 = vmatprep.subr.mxu0 0.0
      %2335 = vmatpush1.msra.mxu0 0.0
      %2336 = vmatprep.subr.mxu0 0.0
      %2337 = vmatpush1.msra.mxu0 0.0
      %2338 = vmatprep.subr.mxu0 0.0
      %2339 = vmatpush1.msra.mxu0 0.0
      %2340 = vmatprep.subr.mxu0 0.0
      %2341 = vmatpush1.msra.mxu0 0.0
      %2342 = vmatprep.subr.mxu0 0.0
      %2343 = vmatpush1.msra.mxu0 0.0
      %2344 = vmatprep.subr.mxu0 0.0
      %2345 = vmatpush1.msra.mxu0 0.0
      %2346 = vmatprep.subr.mxu0 0.0
      %2347 = vmatpush1.msra.mxu0 0.0
      %2348 = vmatprep.subr.mxu0 0.0
      %2349 = vmatpush1.msra.mxu0 0.0
      %2350 = vmatprep.subr.mxu0 0.0
      %2351 = vmatpush1.msra.mxu0 0.0
      %2352 = vmatprep.subr.mxu0 0.0
      %2353 = vmatpush1.msra.mxu0 0.0
      %2354 = vmatprep.mubr.f32.mxu0 0.0
      %2355 = vmatmul.mubr.f32.gmra.mrb[0].mxu0 %v2285
      %v2356 = vpop.f32.mrb[0].mxu0
      %v2357 = vadd.f32 0.0, %v2356
      %v2358 = vpop.f32.mrb[0].mxu0
      %2359 = vmatprep.mubr.f32.mxu0 0.0
      %2360 = vmatmul.mubr.f32.gmra.mrb[0].mxu0 %v2288
      %v2361 = vpop.f32.mrb[0].mxu0
      %v2362 = vadd.f32 0.0, %v2361
      %v2363 = vpop.f32.mrb[0].mxu0
      %2364 = vdwg.mxu0
      %v2365 = vrcp.pop %v2274
      %v2366 = vmul.f32 %v2357, %v2365
      %v2367 = vrcp.pop %v2277
      %v2368 = vmul.f32 %v2362, %v2367
      %v2370 = vsel %vm471, %v2366, 0
      %v2373 = vsel %vm471, %v2368, 0
      %2375 = vmatprep.subr.mxu0 0.0
      %2376 = vmatpush1.msra.mxu0 %v463
      %2377 = vmatprep.subr.mxu0 0.0
      %2378 = vmatpush1.msra.mxu0 0.0
      %2379 = vmatprep.subr.mxu0 0.0
      %2380 = vmatpush1.msra.mxu0 0.0
      %2381 = vmatprep.subr.mxu0 0.0
      %2382 = vmatpush1.msra.mxu0 0.0
      %2383 = vmatprep.subr.mxu0 0.0
      %2384 = vmatpush1.msra.mxu0 0.0
      %2385 = vmatprep.subr.mxu0 0.0
      %2386 = vmatpush1.msra.mxu0 0.0
      %2387 = vmatprep.subr.mxu0 0.0
      %2388 = vmatpush1.msra.mxu0 0.0
      %2389 = vmatprep.subr.mxu0 0.0
      %2390 = vmatpush1.msra.mxu0 0.0
      %2391 = vmatprep.subr.mxu0 0.0
      %2392 = vmatpush1.msra.mxu0 0.0
      %2393 = vmatprep.subr.mxu0 0.0
      %2394 = vmatpush1.msra.mxu0 0.0
      %2395 = vmatprep.subr.mxu0 0.0
      %2396 = vmatpush1.msra.mxu0 0.0
      %2397 = vmatprep.subr.mxu0 0.0
      %2398 = vmatpush1.msra.mxu0 0.0
      %2399 = vmatprep.subr.mxu0 0.0
      %2400 = vmatpush1.msra.mxu0 0.0
      %2401 = vmatprep.subr.mxu0 0.0
      %2402 = vmatpush1.msra.mxu0 0.0
      %2403 = vmatprep.subr.mxu0 0.0
      %2404 = vmatpush1.msra.mxu0 0.0
      %2405 = vmatprep.subr.mxu0 0.0
      %2406 = vmatpush1.msra.mxu0 0.0
      %2407 = vmatprep.subr.mxu0 0.0
      %2408 = vmatpush1.msra.mxu0 0.0
      %2409 = vmatprep.subr.mxu0 0.0
      %2410 = vmatpush1.msra.mxu0 0.0
      %2411 = vmatprep.subr.mxu0 0.0
      %2412 = vmatpush1.msra.mxu0 0.0
      %2413 = vmatprep.subr.mxu0 0.0
      %2414 = vmatpush1.msra.mxu0 0.0
      %2415 = vmatprep.subr.mxu0 0.0
      %2416 = vmatpush1.msra.mxu0 0.0
      %2417 = vmatprep.subr.mxu0 0.0
      %2418 = vmatpush1.msra.mxu0 0.0
      %2419 = vmatprep.subr.mxu0 0.0
      %2420 = vmatpush1.msra.mxu0 0.0
      %2421 = vmatprep.subr.mxu0 0.0
      %2422 = vmatpush1.msra.mxu0 0.0
      %2423 = vmatprep.subr.mxu0 0.0
      %2424 = vmatpush1.msra.mxu0 0.0
      %2425 = vmatprep.subr.mxu0 0.0
      %2426 = vmatpush1.msra.mxu0 0.0
      %2427 = vmatprep.subr.mxu0 0.0
      %2428 = vmatpush1.msra.mxu0 0.0
      %2429 = vmatprep.subr.mxu0 0.0
      %2430 = vmatpush1.msra.mxu0 0.0
      %2431 = vmatprep.subr.mxu0 0.0
      %2432 = vmatpush1.msra.mxu0 0.0
      %2433 = vmatprep.subr.mxu0 0.0
      %2434 = vmatpush1.msra.mxu0 0.0
      %2435 = vmatprep.subr.mxu0 0.0
      %2436 = vmatpush1.msra.mxu0 0.0
      %2437 = vmatprep.subr.mxu0 0.0
      %2438 = vmatpush1.msra.mxu0 0.0
      %2439 = vmatprep.mubr.f32.mxu0 0.0
      %2440 = vmatmul.mubr.f32.gmra.mrb[0].mxu0 %v2370
      %v2441 = vpop.f32.mrb[0].mxu0
      %v2442 = vadd.f32 0.0, %v2441
      %v2443 = vpop.f32.mrb[0].mxu0
      %2444 = vmatprep.mubr.f32.mxu0 0.0
      %2445 = vmatmul.mubr.f32.gmra.mrb[0].mxu0 %v2373
      %v2446 = vpop.f32.mrb[0].mxu0
      %v2447 = vadd.f32 0.0, %v2446
      %v2448 = vpop.f32.mrb[0].mxu0
      %2449 = vdwg.mxu0
      %v2450 = vadd.f32 %v2165, %v2442
      %v2451 = vadd.f32 %v2166, %v2447
      %2452 = vrot.lane.b32.xlu0 %v427, 72
      %v2453 = vpop.permute.xlu0 %2452
      %2454 = vrot.lane.b32.xlu0 %v433, 72
      %v2455 = vpop.permute.xlu0 %2454
      %2456 = vrot.lane.b32.xlu0 %v427, 8
      %v2457 = vpop.permute.xlu0 %2456
      %2458 = vrot.lane.b32.xlu0 %v433, 8
      %v2459 = vpop.permute.xlu0 %2458
      %v2460 = vsel %vm471, %v2453, 0
      %v2462 = vsel %vm471, %v2455, 0
      %v2464 = vsel %vm471, %v2457, 0
      %v2466 = vsel %vm471, %v2459, 0
      %2468 = vmatprep.subr.mxu0 0.0
      %2469 = vmatpush1.xpose.msra.mxu0 %v2464
      %2470 = vmatprep.subr.mxu0 0.0
      %2471 = vmatpush1.xpose.msra.mxu0 %v2466
      %2472 = vmatprep.subr.mxu0 0.0
      %2473 = vmatpush1.xpose.msra.mxu0 0.0
      %2474 = vmatprep.subr.mxu0 0.0
      %2475 = vmatpush1.xpose.msra.mxu0 0.0
      %2476 = vmatprep.subr.mxu0 0.0
      %2477 = vmatpush1.xpose.msra.mxu0 0.0
      %2478 = vmatprep.subr.mxu0 0.0
      %2479 = vmatpush1.xpose.msra.mxu0 0.0
      %2480 = vmatprep.subr.mxu0 0.0
      %2481 = vmatpush1.xpose.msra.mxu0 0.0
      %2482 = vmatprep.subr.mxu0 0.0
      %2483 = vmatpush1.xpose.msra.mxu0 0.0
      %2484 = vmatprep.subr.mxu0 0.0
      %2485 = vmatpush1.xpose.msra.mxu0 0.0
      %2486 = vmatprep.subr.mxu0 0.0
      %2487 = vmatpush1.xpose.msra.mxu0 0.0
      %2488 = vmatprep.subr.mxu0 0.0
      %2489 = vmatpush1.xpose.msra.mxu0 0.0
      %2490 = vmatprep.subr.mxu0 0.0
      %2491 = vmatpush1.xpose.msra.mxu0 0.0
      %2492 = vmatprep.subr.mxu0 0.0
      %2493 = vmatpush1.xpose.msra.mxu0 0.0
      %2494 = vmatprep.subr.mxu0 0.0
      %2495 = vmatpush1.xpose.msra.mxu0 0.0
      %2496 = vmatprep.subr.mxu0 0.0
      %2497 = vmatpush1.xpose.msra.mxu0 0.0
      %2498 = vmatprep.subr.mxu0 0.0
      %2499 = vmatpush1.xpose.msra.mxu0 0.0
      %2500 = vmatprep.subr.mxu0 0.0
      %2501 = vmatpush1.xpose.msra.mxu0 0.0
      %2502 = vmatprep.subr.mxu0 0.0
      %2503 = vmatpush1.xpose.msra.mxu0 0.0
      %2504 = vmatprep.subr.mxu0 0.0
      %2505 = vmatpush1.xpose.msra.mxu0 0.0
      %2506 = vmatprep.subr.mxu0 0.0
      %2507 = vmatpush1.xpose.msra.mxu0 0.0
      %2508 = vmatprep.subr.mxu0 0.0
      %2509 = vmatpush1.xpose.msra.mxu0 0.0
      %2510 = vmatprep.subr.mxu0 0.0
      %2511 = vmatpush1.xpose.msra.mxu0 0.0
      %2512 = vmatprep.subr.mxu0 0.0
      %2513 = vmatpush1.xpose.msra.mxu0 0.0
      %2514 = vmatprep.subr.mxu0 0.0
      %2515 = vmatpush1.xpose.msra.mxu0 0.0
      %2516 = vmatprep.subr.mxu0 0.0
      %2517 = vmatpush1.xpose.msra.mxu0 0.0
      %2518 = vmatprep.subr.mxu0 0.0
      %2519 = vmatpush1.xpose.msra.mxu0 0.0
      %2520 = vmatprep.subr.mxu0 0.0
      %2521 = vmatpush1.xpose.msra.mxu0 0.0
      %2522 = vmatprep.subr.mxu0 0.0
      %2523 = vmatpush1.xpose.msra.mxu0 0.0
      %2524 = vmatprep.subr.mxu0 0.0
      %2525 = vmatpush1.xpose.msra.mxu0 0.0
      %2526 = vmatprep.subr.mxu0 0.0
      %2527 = vmatpush1.xpose.msra.mxu0 0.0
      %2528 = vmatprep.subr.mxu0 0.0
      %2529 = vmatpush1.xpose.msra.mxu0 0.0
      %2530 = vmatprep.subr.mxu0 0.0
      %2531 = vmatpush1.xpose.msra.mxu0 0.0
      %2532 = vmatprep.mubr.f32.mxu0 0.0
      %2533 = vmatmul.mubr.f32.gmra.mrb[0].mxu0 %v2460
      %v2534 = vpop.f32.mrb[0].mxu0
      %v2535 = vadd.f32 0.0, %v2534
      %v2536 = vpop.f32.mrb[0].mxu0
      %2537 = vmatprep.mubr.f32.mxu0 0.0
      %2538 = vmatmul.mubr.f32.gmra.mrb[0].mxu0 %v2462
      %v2539 = vpop.f32.mrb[0].mxu0
      %v2540 = vadd.f32 0.0, %v2539
      %v2541 = vpop.f32.mrb[0].mxu0
      %2542 = vdwg.mxu0
      %v2543 = vsel %vm455, %v2535, -1e+09
      %v2544 = vsel %vm456, %v2540, -1e+09
      %v2545 = vsel %vm557, %v2543, -inf
      %2546 = vmax.xlane.f32.xlu0 %v2545
      %v2547 = vpop.xlane.xlu0 %2546
      %v2548 = vsel %vm557, %v2544, -inf
      %2549 = vmax.xlane.f32.xlu0 %v2548
      %v2550 = vpop.xlane.xlu0 %2549
      %v2551 = vsub.f32 %v2543, %v2547
      %v2552 = vsub.f32 %v2544, %v2550
      %v2553 = vmul.f32 %v2551, 1.442695
      %v2554 = vpow.pop %v2553
      %v2555 = vmul.f32 %v2552, 1.442695
      %v2556 = vpow.pop %v2555
      %v2557 = vsel %vm557, %v2554, 0.0
      %2558 = vadd.xlane.f32.xlu0 %v2557
      %v2559 = vpop.xlane.xlu0 %2558
      %v2560 = vsel %vm557, %v2556, 0.0
      %2561 = vadd.xlane.f32.xlu0 %v2560
      %v2562 = vpop.xlane.xlu0 %2561
      %2563 = vrot.lane.b32.xlu0 %v429, 72
      %v2564 = vpop.permute.xlu0 %2563
      %2565 = vrot.lane.b32.xlu0 %v435, 72
      %v2566 = vpop.permute.xlu0 %2565
      %v2570 = vsel %vm557, %v2554, 0
      %v2573 = vsel %vm557, %v2556, 0
      %2575 = vmatprep.subr.mxu0 0.0
      %2576 = vmatpush1.msra.mxu0 %v2564
      %2577 = vmatprep.subr.mxu0 0.0
      %2578 = vmatpush1.msra.mxu0 %v2566
      %2579 = vmatprep.subr.mxu0 0.0
      %2580 = vmatpush1.msra.mxu0 0.0
      %2581 = vmatprep.subr.mxu0 0.0
      %2582 = vmatpush1.msra.mxu0 0.0
      %2583 = vmatprep.subr.mxu0 0.0
      %2584 = vmatpush1.msra.mxu0 0.0
      %2585 = vmatprep.subr.mxu0 0.0
      %2586 = vmatpush1.msra.mxu0 0.0
      %2587 = vmatprep.subr.mxu0 0.0
      %2588 = vmatpush1.msra.mxu0 0.0
      %2589 = vmatprep.subr.mxu0 0.0
      %2590 = vmatpush1.msra.mxu0 0.0
      %2591 = vmatprep.subr.mxu0 0.0
      %2592 = vmatpush1.msra.mxu0 0.0
      %2593 = vmatprep.subr.mxu0 0.0
      %2594 = vmatpush1.msra.mxu0 0.0
      %2595 = vmatprep.subr.mxu0 0.0
      %2596 = vmatpush1.msra.mxu0 0.0
      %2597 = vmatprep.subr.mxu0 0.0
      %2598 = vmatpush1.msra.mxu0 0.0
      %2599 = vmatprep.subr.mxu0 0.0
      %2600 = vmatpush1.msra.mxu0 0.0
      %2601 = vmatprep.subr.mxu0 0.0
      %2602 = vmatpush1.msra.mxu0 0.0
      %2603 = vmatprep.subr.mxu0 0.0
      %2604 = vmatpush1.msra.mxu0 0.0
      %2605 = vmatprep.subr.mxu0 0.0
      %2606 = vmatpush1.msra.mxu0 0.0
      %2607 = vmatprep.subr.mxu0 0.0
      %2608 = vmatpush1.msra.mxu0 0.0
      %2609 = vmatprep.subr.mxu0 0.0
      %2610 = vmatpush1.msra.mxu0 0.0
      %2611 = vmatprep.subr.mxu0 0.0
      %2612 = vmatpush1.msra.mxu0 0.0
      %2613 = vmatprep.subr.mxu0 0.0
      %2614 = vmatpush1.msra.mxu0 0.0
      %2615 = vmatprep.subr.mxu0 0.0
      %2616 = vmatpush1.msra.mxu0 0.0
      %2617 = vmatprep.subr.mxu0 0.0
      %2618 = vmatpush1.msra.mxu0 0.0
      %2619 = vmatprep.subr.mxu0 0.0
      %2620 = vmatpush1.msra.mxu0 0.0
      %2621 = vmatprep.subr.mxu0 0.0
      %2622 = vmatpush1.msra.mxu0 0.0
      %2623 = vmatprep.subr.mxu0 0.0
      %2624 = vmatpush1.msra.mxu0 0.0
      %2625 = vmatprep.subr.mxu0 0.0
      %2626 = vmatpush1.msra.mxu0 0.0
      %2627 = vmatprep.subr.mxu0 0.0
      %2628 = vmatpush1.msra.mxu0 0.0
      %2629 = vmatprep.subr.mxu0 0.0
      %2630 = vmatpush1.msra.mxu0 0.0
      %2631 = vmatprep.subr.mxu0 0.0
      %2632 = vmatpush1.msra.mxu0 0.0
      %2633 = vmatprep.subr.mxu0 0.0
      %2634 = vmatpush1.msra.mxu0 0.0
      %2635 = vmatprep.subr.mxu0 0.0
      %2636 = vmatpush1.msra.mxu0 0.0
      %2637 = vmatprep.subr.mxu0 0.0
      %2638 = vmatpush1.msra.mxu0 0.0
      %2639 = vmatprep.mubr.f32.mxu0 0.0
      %2640 = vmatmul.mubr.f32.gmra.mrb[0].mxu0 %v2570
      %v2641 = vpop.f32.mrb[0].mxu0
      %v2642 = vadd.f32 0.0, %v2641
      %v2643 = vpop.f32.mrb[0].mxu0
      %2644 = vmatprep.mubr.f32.mxu0 0.0
      %2645 = vmatmul.mubr.f32.gmra.mrb[0].mxu0 %v2573
      %v2646 = vpop.f32.mrb[0].mxu0
      %v2647 = vadd.f32 0.0, %v2646
      %v2648 = vpop.f32.mrb[0].mxu0
      %2649 = vdwg.mxu0
      %v2650 = vrcp.pop %v2559
      %v2651 = vmul.f32 %v2642, %v2650
      %v2652 = vrcp.pop %v2562
      %v2653 = vmul.f32 %v2647, %v2652
      %v2655 = vsel %vm471, %v2651, 0
      %v2658 = vsel %vm471, %v2653, 0
      %2660 = vmatprep.subr.mxu0 0.0
      %2661 = vmatpush1.msra.mxu0 %v464
      %2662 = vmatprep.subr.mxu0 0.0
      %2663 = vmatpush1.msra.mxu0 0.0
      %2664 = vmatprep.subr.mxu0 0.0
      %2665 = vmatpush1.msra.mxu0 0.0
      %2666 = vmatprep.subr.mxu0 0.0
      %2667 = vmatpush1.msra.mxu0 0.0
      %2668 = vmatprep.subr.mxu0 0.0
      %2669 = vmatpush1.msra.mxu0 0.0
      %2670 = vmatprep.subr.mxu0 0.0
      %2671 = vmatpush1.msra.mxu0 0.0
      %2672 = vmatprep.subr.mxu0 0.0
      %2673 = vmatpush1.msra.mxu0 0.0
      %2674 = vmatprep.subr.mxu0 0.0
      %2675 = vmatpush1.msra.mxu0 0.0
      %2676 = vmatprep.subr.mxu0 0.0
      %2677 = vmatpush1.msra.mxu0 0.0
      %2678 = vmatprep.subr.mxu0 0.0
      %2679 = vmatpush1.msra.mxu0 0.0
      %2680 = vmatprep.subr.mxu0 0.0
      %2681 = vmatpush1.msra.mxu0 0.0
      %2682 = vmatprep.subr.mxu0 0.0
      %2683 = vmatpush1.msra.mxu0 0.0
      %2684 = vmatprep.subr.mxu0 0.0
      %2685 = vmatpush1.msra.mxu0 0.0
      %2686 = vmatprep.subr.mxu0 0.0
      %2687 = vmatpush1.msra.mxu0 0.0
      %2688 = vmatprep.subr.mxu0 0.0
      %2689 = vmatpush1.msra.mxu0 0.0
      %2690 = vmatprep.subr.mxu0 0.0
      %2691 = vmatpush1.msra.mxu0 0.0
      %2692 = vmatprep.subr.mxu0 0.0
      %2693 = vmatpush1.msra.mxu0 0.0
      %2694 = vmatprep.subr.mxu0 0.0
      %2695 = vmatpush1.msra.mxu0 0.0
      %2696 = vmatprep.subr.mxu0 0.0
      %2697 = vmatpush1.msra.mxu0 0.0
      %2698 = vmatprep.subr.mxu0 0.0
      %2699 = vmatpush1.msra.mxu0 0.0
      %2700 = vmatprep.subr.mxu0 0.0
      %2701 = vmatpush1.msra.mxu0 0.0
      %2702 = vmatprep.subr.mxu0 0.0
      %2703 = vmatpush1.msra.mxu0 0.0
      %2704 = vmatprep.subr.mxu0 0.0
      %2705 = vmatpush1.msra.mxu0 0.0
      %2706 = vmatprep.subr.mxu0 0.0
      %2707 = vmatpush1.msra.mxu0 0.0
      %2708 = vmatprep.subr.mxu0 0.0
      %2709 = vmatpush1.msra.mxu0 0.0
      %2710 = vmatprep.subr.mxu0 0.0
      %2711 = vmatpush1.msra.mxu0 0.0
      %2712 = vmatprep.subr.mxu0 0.0
      %2713 = vmatpush1.msra.mxu0 0.0
      %2714 = vmatprep.subr.mxu0 0.0
      %2715 = vmatpush1.msra.mxu0 0.0
      %2716 = vmatprep.subr.mxu0 0.0
      %2717 = vmatpush1.msra.mxu0 0.0
      %2718 = vmatprep.subr.mxu0 0.0
      %2719 = vmatpush1.msra.mxu0 0.0
      %2720 = vmatprep.subr.mxu0 0.0
      %2721 = vmatpush1.msra.mxu0 0.0
      %2722 = vmatprep.subr.mxu0 0.0
      %2723 = vmatpush1.msra.mxu0 0.0
      %2724 = vmatprep.mubr.f32.mxu0 0.0
      %2725 = vmatmul.mubr.f32.gmra.mrb[0].mxu0 %v2655
      %v2726 = vpop.f32.mrb[0].mxu0
      %v2727 = vadd.f32 0.0, %v2726
      %v2728 = vpop.f32.mrb[0].mxu0
      %2729 = vmatprep.mubr.f32.mxu0 0.0
      %2730 = vmatmul.mubr.f32.gmra.mrb[0].mxu0 %v2658
      %v2731 = vpop.f32.mrb[0].mxu0
      %v2732 = vadd.f32 0.0, %v2731
      %v2733 = vpop.f32.mrb[0].mxu0
      %2734 = vdwg.mxu0
      %v2735 = vadd.f32 %v2450, %v2727
      %v2736 = vadd.f32 %v2451, %v2732
      %v2737 = vld [vmem:[%s5] sm:$0x1]
      %v2739 = vlaneseq
      %v2740 = vshrl.u32 %v2739, 7
      %v2741 = vsub.s32 0, %v2740
      %v2742 = vrot.slane %v2737, %v2741
      %v2744 = vadd.f32 %v2735, %v2742
      %v2745 = vadd.f32 %v2736, %v2742
      %v2746 = vadd.f32 %v323, %v2744
      %v2747 = vadd.f32 %v324, %v2745
      %v2748 = vsel %vm353, %v2746, 0.0
      %2749 = vadd.xlane.f32.xlu0 %v2748
      %v2750 = vpop.xlane.xlu0 %2749
      %v2751 = vsel %vm353, %v2747, 0.0
      %2752 = vadd.xlane.f32.xlu0 %v2751
      %v2753 = vpop.xlane.xlu0 %2752
      %v2754 = vrcp.pop 64.0
      %v2755 = vmul.f32 %v2750, %v2754
      %v2756 = vmul.f32 %v2753, %v2754
      %v2757 = vsub.f32 %v2746, %v2755
      %v2758 = vsub.f32 %v2747, %v2756
      %v2759 = vmul.f32 %v2757, %v2757
      %v2760 = vmul.f32 %v2758, %v2758
      %v2761 = vsel %vm353, %v2759, 0.0
      %2762 = vadd.xlane.f32.xlu0 %v2761
      %v2763 = vpop.xlane.xlu0 %2762
      %v2764 = vsel %vm353, %v2760, 0.0
      %2765 = vadd.xlane.f32.xlu0 %v2764
      %v2766 = vpop.xlane.xlu0 %2765
      %v2767 = vmul.f32 %v2763, %v2754
      %v2768 = vmul.f32 %v2766, %v2754
      %v2769 = vadd.f32 %v2767, 1e-05
      %v2770 = vadd.f32 %v2768, 1e-05
      %v2771 = vrsqrt.pop %v2769
      %v2772 = vrsqrt.pop %v2770
      %v2773 = vmul.f32 %v2757, %v2771
      %v2774 = vmul.f32 %v2758, %v2772
      %v2775 = vld [vmem:[%s6] sm:$0x1]
      %v2777 = vlaneseq
      %v2778 = vshrl.u32 %v2777, 7
      %v2779 = vsub.s32 0, %v2778
      %v2780 = vrot.slane %v2775, %v2779
      %v2782 = vmul.f32 %v2773, %v2780
      %v2783 = vmul.f32 %v2774, %v2780
      %v2784 = vld [vmem:[%s7] sm:$0x1]
      %v2786 = vlaneseq
      %v2787 = vshrl.u32 %v2786, 7
      %v2788 = vsub.s32 0, %v2787
      %v2789 = vrot.slane %v2784, %v2788
      %v2791 = vadd.f32 %v2782, %v2789
      %v2792 = vadd.f32 %v2783, %v2789
      %2793 = vst.msk [vmem:[%s321] sm:$0xff] %vm353, %v2791
      %2794 = vst.msk [vmem:[%s321 + $0x8] sm:$0xff] %vm353, %v2792
      %s2795 = smul.u32 2, %s19
      %p2796 = scmp.lt.s32.totalorder %s2795, 3
      %s2797 = scalar_select %p2796, %s2795, 3
      %s2798 = smul.addr %s2797, 8
      %s2799 = scalar_lea.vmem %s8, %s2798
      // Predicated region
      $region53: #{device_fn.2} parent=51 // pred_check
        %p2800 = pneg %p215
      $region54: #{device_fn.2} parent=51 // pred_check_branch
        %2802 = sbr.rel (%p2800) target = $region56
      $region55: #{device_fn.2} parent=51 // pred_region
        %s2803 = smul.u32 2, %s19
      $region56: #{device_fn.2} parent=51 // pred_fallthru
        _
    $region52: #{device_fn.2} parent=5 // pred_fallthru
      _
    %p2804 = scmp.le.s32.totalorder 2, %s14
    // Predicated region
    $region57: #{device_fn.2} parent=5 // pred_check
      %p2805 = pneg %p2804
    $region58: #{device_fn.2} parent=5 // pred_check_branch
      %2807 = sbr.rel (%p2805) target = $region60
    $region59: #{device_fn.2} parent=5 // pred_region
      %s2808 = ssub.s32 %s14, 2
      // Predicated region
      $region61: #{device_fn.2} parent=59 // pred_check
        %p2809 = pneg %p221
      $region62: #{device_fn.2} parent=59 // pred_check_branch
        %2811 = sbr.rel (%p2809) target = $region64
      $region63: #{device_fn.2} parent=59 // pred_region
        %s2812 = smul.u32 2, %s20
        %p2813 = scmp.lt.s32.totalorder %s2812, 3
        %s2814 = scalar_select %p2813, %s2812, 3
        %s2815 = smul.addr %s2814, 8
        %s2816 = scalar_lea.vmem %s8, %s2815
      $region64: #{device_fn.2} parent=59 // pred_fallthru
        _
    $region60: #{device_fn.2} parent=5 // pred_fallthru
      _
  $region6: #{device_fn.2} parent=0 // loop_footer
    %s18 = sadd.s32 1, %s14
  $region7: #{device_fn.2} parent=0 // loop_footer_branch
    %13 = sbr.rel target = $region3
  $region8: #{device_fn.2} parent=0 // loop_exit
    _

</llo_original>
